<compile_context>
chip_gen: v7x
topology: tpu7x:2x2x1
jax: 0.10.0
libtpu: 0.0.40
codegen_flags: <defaults>
</compile_context>

<pallas_src>
import functools

import jax
import jax.numpy as jnp
from jax.experimental import pallas as pl
from jax.experimental.pallas import tpu as pltpu


# ----------------------------------------------------------------------------
# Fused kernel: one batch tile per grid step, all four conv stages + MLP head.
# Activation layout: (H, Bt, fused_lanes) with fused lane = w*C + c (dense for
# the network input, stride-2*C "holey" after every W-pool).
# ----------------------------------------------------------------------------
def _cnn_retino_kernel(x_ref,
                       m1_ref, b1_ref, m2_ref, b2_ref,
                       m3_ref, b3_ref, m4_ref, b4_ref,
                       fc1w_ref, fc1b_ref, fc2w_ref, fc2b_ref,
                       drop_ref, o_ref, *, layer_dims):
    a = x_ref[...]                                    # (H1, Bt, W1*C0) f32
    bt = a.shape[1]

    conv_refs = ((m1_ref, b1_ref), (m2_ref, b2_ref),
                 (m3_ref, b3_ref), (m4_ref, b4_ref))
    for (m_ref, b_ref), (ho, hp, cout, nout) in zip(conv_refs, layer_dims):
        k = a.shape[-1]
        # 3x3 conv == 3 banded matmuls (one per ky tap).  kx taps + the channel
        # contraction are folded into the (k, nout) block-Toeplitz weight, so
        # no im2col / lane concat is needed.  The ky shift is a free slice of
        # the untiled leading axis; the (ho, bt)->(ho*bt) merge is free because
        # bt is a multiple of the 8-row sublane tile.
        acc = jnp.dot(a[0:ho].reshape(ho * bt, k), m_ref[0],
                      preferred_element_type=jnp.float32)
        acc = acc + jnp.dot(a[1:ho + 1].reshape(ho * bt, k), m_ref[1],
                            preferred_element_type=jnp.float32)
        acc = acc + jnp.dot(a[2:ho + 2].reshape(ho * bt, k), m_ref[2],
                            preferred_element_type=jnp.float32)
        y = jnp.maximum(acc + b_ref[...], 0.0).reshape(ho, bt, nout)

        # max_pool2d(2, 2), floor mode.
        # H: pair-max over the leading axis (leading-dim split is free).
        y = y[:2 * hp].reshape(hp, 2, bt, nout)
        y = jnp.maximum(y[:, 0], y[:, 1])             # (hp, bt, nout)
        # W: pair-max via one lane shift + max.  Output stays UNCOMPACTED: the
        # value for logical (w, c) sits at lane 2*w*cout + c; odd-w lanes hold
        # junk that the next layer's banded weights multiply by zero.
        a = jnp.maximum(y[..., :nout - cout], y[..., cout:])

    # ---------------- MLP head ----------------
    hf = a.shape[0]
    nfc1 = fc1w_ref.shape[-1]
    h1 = jnp.zeros((bt, nfc1), jnp.float32)
    for hh in range(hf):                              # Hf == 1 for the default cfg
        h1 = h1 + jnp.dot(a[hh], fc1w_ref[hh], preferred_element_type=jnp.float32)
    h1 = jnp.maximum(h1 + fc1b_ref[...], 0.0)
    h1 = h1 * drop_ref[...]                           # pre-scaled keep mask

    # fc2 padded to 128 lanes (padded bias = -1e30 so it vanishes in softmax).
    logits = jnp.dot(h1, fc2w_ref[...], preferred_element_type=jnp.float32) + fc2b_ref[...]
    m = jnp.max(logits, axis=-1, keepdims=True)
    z = logits - m
    o_ref[...] = z - jnp.log(jnp.sum(jnp.exp(z), axis=-1, keepdims=True))


# ----------------------------------------------------------------------------
# Wrapper: geometry, banded-weight construction, batch tiling, pallas_call.
# ----------------------------------------------------------------------------
def cnn_retino_forward(params, x_nchw, *, dropout_rate, rng_key=None,
                       batch_tile=None):
    """Forward pass matching CNN_Retino.forward (F.dropout training mode)."""
    p = float(dropout_rate)
    if p > 0.0 and rng_key is None:
        raise ValueError("rng_key is required when dropout_rate > 0")

    x = x_nchw.astype(jnp.float32)
    N, Cin, H, W = x.shape

    # ---- static per-layer geometry (conv3x3 valid, pool2x2 floor) ----
    couts = [params[f"conv{i}_w"].shape[-1] for i in range(1, 5)]
    geo = []
    h, w, c = H, W, Cin
    for cout in couts:
        ho, wo = h - 2, w - 2
        hp_, wp_ = ho // 2, wo // 2
        geo.append((h, w, c, cout, ho, wo, hp_, wp_))
        h, w, c = hp_, wp_, cout
    Hf, Wf, Cf = h, w, c

    # ---- banded ("block-Toeplitz") conv weights + lane-tiled biases ----
    # For layer l and ky tap dy:  M_dy[in_lane(wo+dx, ci), wo*Cout+co] = W[dy,dx,ci,co]
    # where in_lane(w, ci) = w*Cin + ci for the dense input (layer 1) and
    # 2*w*Cin + ci for the uncompacted pooled inputs (layers 2..4).
    conv_mats, conv_biases, layer_dims = [], [], []
    prev_wo = None
    for li, (hin, win, cin, cout, ho, wo, hp_, wp_) in enumerate(geo):
        if li == 0:
            k_in, stride = win * cin, cin
        else:
            k_in, stride = (prev_wo - 1) * cin, 2 * cin
        w_hwio = params[f"conv{li + 1}_w"].astype(jnp.float32)   # (3, 3, cin, cout)
        n_out = wo * cout
        wo_idx = jnp.arange(wo)
        c_idx = jnp.arange(cin)
        co_idx = jnp.arange(cout)
        col = wo_idx[:, None] * cout + co_idx[None, :]           # (wo, cout)
        mats = []
        for dy in range(3):
            m = jnp.zeros((k_in, n_out), jnp.float32)
            for dx in range(3):
                row = (wo_idx[:, None] + dx) * stride + c_idx[None, :]   # (wo, cin)
                m = m.at[row[:, :, None], col[:, None, :]].add(
                    jnp.broadcast_to(w_hwio[dy, dx][None], (wo, cin, cout)))
            mats.append(m)
        conv_mats.append(jnp.stack(mats))                        # (3, k_in, n_out)
        conv_biases.append(
            jnp.tile(params[f"conv{li + 1}_b"].astype(jnp.float32), wo)[None, :])
        layer_dims.append((ho, hp_, cout, n_out))
        prev_wo = wo

    # ---- MLP head weights in the kernel's layout ----
    num_flatten, num_fc1 = params["fc1_w"].shape
    num_classes = params["fc2_w"].shape[1]
    assert num_flatten == Hf * Wf * Cf, "fc1 shape inconsistent with conv geometry"

    Lf = (geo[-1][5] - 1) * Cf          # uncompacted pooled lane width of layer 4
    fc1_w = params["fc1_w"].astype(jnp.float32)
    h_idx = jnp.arange(Hf)
    w_idx = jnp.arange(Wf)
    c_idx = jnp.arange(Cf)
    lane = 2 * w_idx[:, None] * Cf + c_idx[None, :]              # (Wf, Cf)
    flat = (c_idx[None, None, :] * (Hf * Wf)
            + h_idx[:, None, None] * Wf + w_idx[None, :, None])  # PyTorch NCHW flatten
    fc1_eff = jnp.zeros((Hf, Lf, num_fc1), jnp.float32)
    fc1_eff = fc1_eff.at[h_idx[:, None, None], lane[None, :, :], :].set(fc1_w[flat])
    fc1_b = params["fc1_b"].astype(jnp.float32)[None, :]

    ncls_pad = max(128, ((num_classes + 127) // 128) * 128)      # lane-dense output
    fc2_w = jnp.zeros((num_fc1, ncls_pad), jnp.float32).at[:, :num_classes].set(
        params["fc2_w"].astype(jnp.float32))
    fc2_b = jnp.full((1, ncls_pad), -1e30, jnp.float32).at[0, :num_classes].set(
        params["fc2_b"].astype(jnp.float32))

    # ---- batch tiling (Bt must be a multiple of 8 for the free sublane merges) ----
    if batch_tile is None:
        batch_tile = 8 if N <= 64 else 32   # grid stays "parallel" for megacore
    batch_tile = max(8, (batch_tile // 8) * 8)
    pad = (-N) % batch_tile
    n_total = N + pad

    # Input: NCHW -> (H, N, W*Cin), lane = w*Cin + c (tiny one-off reshuffle).
    x_t = jnp.transpose(x, (2, 0, 3, 1)).reshape(H, N, W * Cin)
    if pad:
        x_t = jnp.pad(x_t, ((0, 0), (0, pad), (0, 0)))

    # Dropout keep-mask (F.dropout training semantics), pre-scaled by 1/(1-p).
    if p > 0.0:
        keep = jax.random.bernoulli(rng_key, 1.0 - p, (n_total, num_fc1))
        drop = keep.astype(jnp.float32) * (1.0 / (1.0 - p))
    else:
        drop = jnp.ones((n_total, num_fc1), jnp.float32)

    c2 = lambda n: (0, 0)                  # VMEM-resident weights (constant maps)
    c3 = lambda n: (0, 0, 0)
    in_specs = [pl.BlockSpec((H, batch_tile, W * Cin), lambda n: (0, n, 0))]
    for mat, bias in zip(conv_mats, conv_biases):
        in_specs.append(pl.BlockSpec(mat.shape, c3))
        in_specs.append(pl.BlockSpec(bias.shape, c2))
    in_specs += [
        pl.BlockSpec(fc1_eff.shape, c3),
        pl.BlockSpec(fc1_b.shape, c2),
        pl.BlockSpec(fc2_w.shape, c2),
        pl.BlockSpec(fc2_b.shape, c2),
        pl.BlockSpec((batch_tile, num_fc1), lambda n: (n, 0)),
    ]

    kernel = functools.partial(_cnn_retino_kernel, layer_dims=tuple(layer_dims))
    out = pl.pallas_call(
        kernel,
        out_shape=jax.ShapeDtypeStruct((n_total, ncls_pad), jnp.float32),
        grid=(n_total // batch_tile,),
        in_specs=in_specs,
        out_specs=pl.BlockSpec((batch_tile, ncls_pad), lambda n: (n, 0)),
        compiler_params=pltpu.CompilerParams(
            dimension_semantics=("parallel",),
            # Actual per-step footprint ~6 MiB (input block ~0.4 MiB x2 +
            # banded weights ~1.5 MiB + temps); 32 MiB is safe on v5e/v6e/v7x.
            vmem_limit_bytes=32 * 1024 * 1024),
    )(x_t, conv_mats[0], conv_biases[0], conv_mats[1], conv_biases[1],
      conv_mats[2], conv_biases[2], conv_mats[3], conv_biases[3],
      fc1_eff, fc1_b, fc2_w, fc2_b, drop)
    return out[:N, :num_classes]


# ----------------------------------------------------------------------------
# Pure-JAX reference (high-precision) for the no-dropout correctness check.
# ----------------------------------------------------------------------------
def cnn_retino_reference(params, x_nchw):
    prec = jax.lax.Precision.HIGHEST
    x = x_nchw.astype(jnp.float32)
    for i in range(1, 5):
        w_oihw = jnp.transpose(params[f"conv{i}_w"], (3, 2, 0, 1))
        x = jax.lax.conv_general_dilated(
            x, w_oihw, (1, 1), "VALID",
            dimension_numbers=("NCHW", "OIHW", "NCHW"), precision=prec)
        x = jax.nn.relu(x + params[f"conv{i}_b"][None, :, None, None])
        x = jax.lax.reduce_window(x, -jnp.inf, jax.lax.max,
                                  (1, 1, 2, 2), (1, 1, 2, 2), "VALID")
    feat = x.reshape(x.shape[0], -1)                  # NCHW flatten, like PyTorch
    h = jax.nn.relu(jnp.dot(feat, params["fc1_w"], precision=prec) + params["fc1_b"])
    logits = jnp.dot(h, params["fc2_w"], precision=prec) + params["fc2_b"]
    return jax.nn.log_softmax(logits, axis=1)


# ----------------------------------------------------------------------------
# Parameter init (same structure as the PyTorch module with
# shape_in=(3,48,48), initial_filters=4, num_fc1=32, num_classes=5).
# ----------------------------------------------------------------------------
def init_params(key, shape_in=(3, 48, 48), init_f=4, num_fc1=32, num_classes=5):
    Cin, Hin, Win = shape_in
    chans = [Cin, init_f, 2 * init_f, 4 * init_f, 8 * init_f]
    keys = iter(jax.random.split(key, 12))
    params = {}
    h, w = Hin, Win
    for i in range(1, 5):
        cin, cout = chans[i - 1], chans[i]
        scale = 1.0 / (cin * 9.0) ** 0.5
        params[f"conv{i}_w"] = scale * jax.random.normal(
            next(keys), (3, 3, cin, cout), jnp.float32)          # HWIO
        params[f"conv{i}_b"] = 0.01 * jax.random.normal(
            next(keys), (cout,), jnp.float32)
        h, w = (h - 2) // 2, (w - 2) // 2
    num_flatten = h * w * chans[4]
    params["fc1_w"] = (1.0 / num_flatten ** 0.5) * jax.random.normal(
        next(keys), (num_flatten, num_fc1), jnp.float32)
    params["fc1_b"] = 0.01 * jax.random.normal(next(keys), (num_fc1,), jnp.float32)
    params["fc2_w"] = (1.0 / num_fc1 ** 0.5) * jax.random.normal(
        next(keys), (num_fc1, num_classes), jnp.float32)
    params["fc2_b"] = 0.01 * jax.random.normal(
        next(keys), (num_classes,), jnp.float32)
    return params, num_flatten


if __name__ == "__main__":
    # shape_in=(3,48,48), initial_filters=4, num_fc1=32, num_classes=5,
    # dropout_rate=0.25.  Spatial path: 48 -> 46/23 -> 21/10 -> 8/4 -> 2/1.
    key = jax.random.PRNGKey(0)
    kp, kx, kd = jax.random.split(key, 3)
    params, num_flatten = init_params(kp)
    x = jax.random.normal(kx, (2, 3, 48, 48), jnp.float32)       # NCHW like PyTorch

    # Correctness self-check (deterministic, dropout off).  5e-3 is far below
    # the O(1) signal of any layout / tap-ordering bug while leaving headroom
    # for MXU f32 pass-rounding differences vs. the XLA conv reference.
    out_nodrop = jax.block_until_ready(
        cnn_retino_forward(params, x, dropout_rate=0.0))
    ref = jax.block_until_ready(cnn_retino_reference(params, x))
    assert out_nodrop.shape == (2, 5)
    assert jnp.allclose(out_nodrop, ref, atol=5e-3, rtol=5e-3), \
        float(jnp.max(jnp.abs(out_nodrop - ref)))

    # Full forward with dropout (training-mode F.dropout semantics).
    out = jax.block_until_ready(
        cnn_retino_forward(params, x, dropout_rate=0.25, rng_key=kd))
    assert out.shape == (2, 5) and out.dtype == jnp.float32
    assert bool(jnp.all(jnp.isfinite(out)))
    assert jnp.allclose(jnp.sum(jnp.exp(out), axis=-1), 1.0, atol=1e-3)
    print("KERNEL_OK")
</pallas_src>

<mosaic_0001>
module attributes {stable_mosaic.version = 11 : i64} {
  func.func @_cnn_retino_kernel(%arg0: i32, %arg1: memref<48x8x144xf32, #tpu.memory_space<vmem>>, %arg2: memref<3x144x184xf32, #tpu.memory_space<vmem>>, %arg3: memref<1x184xf32, #tpu.memory_space<vmem>>, %arg4: memref<3x180x168xf32, #tpu.memory_space<vmem>>, %arg5: memref<1x168xf32, #tpu.memory_space<vmem>>, %arg6: memref<3x160x128xf32, #tpu.memory_space<vmem>>, %arg7: memref<1x128xf32, #tpu.memory_space<vmem>>, %arg8: memref<3x112x64xf32, #tpu.memory_space<vmem>>, %arg9: memref<1x64xf32, #tpu.memory_space<vmem>>, %arg10: memref<1x32x32xf32, #tpu.memory_space<vmem>>, %arg11: memref<1x32xf32, #tpu.memory_space<vmem>>, %arg12: memref<32x128xf32, #tpu.memory_space<vmem>>, %arg13: memref<1x128xf32, #tpu.memory_space<vmem>>, %arg14: memref<8x32xf32, #tpu.memory_space<vmem>>, %arg15: memref<8x128xf32, #tpu.memory_space<vmem>>) attributes {dimension_semantics = [#tpu.dimension_semantics<parallel>], iteration_bounds = array<i64: 1>, scalar_prefetch = 0 : i64, scratch_operands = 0 : i64, tpu.core_type = #tpu.core_type<tc>, window_params = [{transform_indices = @transform_0, window_bounds = array<i64: 48, 8, 144>}, {pipeline_mode = #tpu.pipeline_mode<synchronous>, transform_indices = @transform_1, window_bounds = array<i64: 3, 144, 184>}, {pipeline_mode = #tpu.pipeline_mode<synchronous>, transform_indices = @transform_2, window_bounds = array<i64: 1, 184>}, {pipeline_mode = #tpu.pipeline_mode<synchronous>, transform_indices = @transform_3, window_bounds = array<i64: 3, 180, 168>}, {pipeline_mode = #tpu.pipeline_mode<synchronous>, transform_indices = @transform_4, window_bounds = array<i64: 1, 168>}, {pipeline_mode = #tpu.pipeline_mode<synchronous>, transform_indices = @transform_5, window_bounds = array<i64: 3, 160, 128>}, {pipeline_mode = #tpu.pipeline_mode<synchronous>, transform_indices = @transform_6, window_bounds = array<i64: 1, 128>}, {pipeline_mode = #tpu.pipeline_mode<synchronous>, transform_indices = @transform_7, window_bounds = array<i64: 3, 112, 64>}, {pipeline_mode = #tpu.pipeline_mode<synchronous>, transform_indices = @transform_8, window_bounds = array<i64: 1, 64>}, {pipeline_mode = #tpu.pipeline_mode<synchronous>, transform_indices = @transform_9, window_bounds = array<i64: 1, 32, 32>}, {pipeline_mode = #tpu.pipeline_mode<synchronous>, transform_indices = @transform_10, window_bounds = array<i64: 1, 32>}, {pipeline_mode = #tpu.pipeline_mode<synchronous>, transform_indices = @transform_11, window_bounds = array<i64: 32, 128>}, {pipeline_mode = #tpu.pipeline_mode<synchronous>, transform_indices = @transform_12, window_bounds = array<i64: 1, 128>}, {transform_indices = @transform_13, window_bounds = array<i64: 8, 32>}, {transform_indices = @transform_14, window_bounds = array<i64: 8, 128>}]} {
    %c0 = arith.constant 0 : index
    %c0_0 = arith.constant 0 : index
    %c0_1 = arith.constant 0 : index
    %0 = vector.load %arg1[%c0, %c0_0, %c0_1] : memref<48x8x144xf32, #tpu.memory_space<vmem>>, vector<48x8x144xf32>
    %1 = vector.extract_strided_slice %0 {offsets = [0, 0, 0], sizes = [46, 8, 144], strides = [1, 1, 1]} : vector<48x8x144xf32> to vector<46x8x144xf32>
    %2 = vector.shape_cast %1 : vector<46x8x144xf32> to vector<368x144xf32>
    %c0_2 = arith.constant 0 : index
    %c0_3 = arith.constant 0 : index
    %c0_4 = arith.constant 0 : index
    %3 = vector.load %arg2[%c0_2, %c0_3, %c0_4] : memref<3x144x184xf32, #tpu.memory_space<vmem>>, vector<1x144x184xf32>
    %4 = vector.shape_cast %3 : vector<1x144x184xf32> to vector<144x184xf32>
    %cst = arith.constant dense<0.000000e+00> : vector<368x184xf32>
    %5 = tpu.matmul %2, %4, %cst {dimension_numbers = #tpu.dot_dimension_numbers<[1], [0], [0], [1], [0, 0, 1, 1], [], []>} : vector<368x144xf32>, vector<144x184xf32>, vector<368x184xf32> -> vector<368x184xf32>
    %6 = vector.extract_strided_slice %0 {offsets = [1, 0, 0], sizes = [46, 8, 144], strides = [1, 1, 1]} : vector<48x8x144xf32> to vector<46x8x144xf32>
    %7 = vector.shape_cast %6 : vector<46x8x144xf32> to vector<368x144xf32>
    %c1 = arith.constant 1 : index
    %c0_5 = arith.constant 0 : index
    %c0_6 = arith.constant 0 : index
    %8 = vector.load %arg2[%c1, %c0_5, %c0_6] : memref<3x144x184xf32, #tpu.memory_space<vmem>>, vector<1x144x184xf32>
    %9 = vector.shape_cast %8 : vector<1x144x184xf32> to vector<144x184xf32>
    %cst_7 = arith.constant dense<0.000000e+00> : vector<368x184xf32>
    %10 = tpu.matmul %7, %9, %cst_7 {dimension_numbers = #tpu.dot_dimension_numbers<[1], [0], [0], [1], [0, 0, 1, 1], [], []>} : vector<368x144xf32>, vector<144x184xf32>, vector<368x184xf32> -> vector<368x184xf32>
    %11 = arith.addf %5, %10 : vector<368x184xf32>
    %12 = vector.extract_strided_slice %0 {offsets = [2, 0, 0], sizes = [46, 8, 144], strides = [1, 1, 1]} : vector<48x8x144xf32> to vector<46x8x144xf32>
    %13 = vector.shape_cast %12 : vector<46x8x144xf32> to vector<368x144xf32>
    %c2 = arith.constant 2 : index
    %c0_8 = arith.constant 0 : index
    %c0_9 = arith.constant 0 : index
    %14 = vector.load %arg2[%c2, %c0_8, %c0_9] : memref<3x144x184xf32, #tpu.memory_space<vmem>>, vector<1x144x184xf32>
    %15 = vector.shape_cast %14 : vector<1x144x184xf32> to vector<144x184xf32>
    %cst_10 = arith.constant dense<0.000000e+00> : vector<368x184xf32>
    %16 = tpu.matmul %13, %15, %cst_10 {dimension_numbers = #tpu.dot_dimension_numbers<[1], [0], [0], [1], [0, 0, 1, 1], [], []>} : vector<368x144xf32>, vector<144x184xf32>, vector<368x184xf32> -> vector<368x184xf32>
    %17 = arith.addf %11, %16 : vector<368x184xf32>
    %c0_11 = arith.constant 0 : index
    %c0_12 = arith.constant 0 : index
    %18 = vector.load %arg3[%c0_11, %c0_12] : memref<1x184xf32, #tpu.memory_space<vmem>>, vector<1x184xf32>
    %19 = vector.broadcast %18 : vector<1x184xf32> to vector<368x184xf32>
    %20 = arith.addf %17, %19 : vector<368x184xf32>
    %cst_13 = arith.constant 0.000000e+00 : f32
    %21 = vector.broadcast %cst_13 : f32 to vector<368x184xf32>
    %22 = arith.maximumf %20, %21 : vector<368x184xf32>
    %23 = vector.shape_cast %22 : vector<368x184xf32> to vector<46x8x184xf32>
    %24 = vector.shape_cast %23 : vector<46x8x184xf32> to vector<23x2x8x184xf32>
    %25 = vector.extract_strided_slice %24 {offsets = [0, 0, 0, 0], sizes = [23, 1, 8, 184], strides = [1, 1, 1, 1]} : vector<23x2x8x184xf32> to vector<23x1x8x184xf32>
    %26 = vector.shape_cast %25 : vector<23x1x8x184xf32> to vector<23x8x184xf32>
    %27 = vector.extract_strided_slice %24 {offsets = [0, 1, 0, 0], sizes = [23, 1, 8, 184], strides = [1, 1, 1, 1]} : vector<23x2x8x184xf32> to vector<23x1x8x184xf32>
    %28 = vector.shape_cast %27 : vector<23x1x8x184xf32> to vector<23x8x184xf32>
    %29 = arith.maximumf %26, %28 : vector<23x8x184xf32>
    %30 = vector.extract_strided_slice %29 {offsets = [0, 0, 0], sizes = [23, 8, 180], strides = [1, 1, 1]} : vector<23x8x184xf32> to vector<23x8x180xf32>
    %31 = vector.extract_strided_slice %29 {offsets = [0, 0, 4], sizes = [23, 8, 180], strides = [1, 1, 1]} : vector<23x8x184xf32> to vector<23x8x180xf32>
    %32 = arith.maximumf %30, %31 : vector<23x8x180xf32>
    %33 = vector.extract_strided_slice %32 {offsets = [0, 0, 0], sizes = [21, 8, 180], strides = [1, 1, 1]} : vector<23x8x180xf32> to vector<21x8x180xf32>
    %34 = vector.shape_cast %33 : vector<21x8x180xf32> to vector<168x180xf32>
    %c0_14 = arith.constant 0 : index
    %c0_15 = arith.constant 0 : index
    %c0_16 = arith.constant 0 : index
    %35 = vector.load %arg4[%c0_14, %c0_15, %c0_16] : memref<3x180x168xf32, #tpu.memory_space<vmem>>, vector<1x180x168xf32>
    %36 = vector.shape_cast %35 : vector<1x180x168xf32> to vector<180x168xf32>
    %cst_17 = arith.constant dense<0.000000e+00> : vector<168x168xf32>
    %37 = tpu.matmul %34, %36, %cst_17 {dimension_numbers = #tpu.dot_dimension_numbers<[1], [0], [0], [1], [0, 0, 1, 1], [], []>} : vector<168x180xf32>, vector<180x168xf32>, vector<168x168xf32> -> vector<168x168xf32>
    %38 = vector.extract_strided_slice %32 {offsets = [1, 0, 0], sizes = [21, 8, 180], strides = [1, 1, 1]} : vector<23x8x180xf32> to vector<21x8x180xf32>
    %39 = vector.shape_cast %38 : vector<21x8x180xf32> to vector<168x180xf32>
    %c1_18 = arith.constant 1 : index
    %c0_19 = arith.constant 0 : index
    %c0_20 = arith.constant 0 : index
    %40 = vector.load %arg4[%c1_18, %c0_19, %c0_20] : memref<3x180x168xf32, #tpu.memory_space<vmem>>, vector<1x180x168xf32>
    %41 = vector.shape_cast %40 : vector<1x180x168xf32> to vector<180x168xf32>
    %cst_21 = arith.constant dense<0.000000e+00> : vector<168x168xf32>
    %42 = tpu.matmul %39, %41, %cst_21 {dimension_numbers = #tpu.dot_dimension_numbers<[1], [0], [0], [1], [0, 0, 1, 1], [], []>} : vector<168x180xf32>, vector<180x168xf32>, vector<168x168xf32> -> vector<168x168xf32>
    %43 = arith.addf %37, %42 : vector<168x168xf32>
    %44 = vector.extract_strided_slice %32 {offsets = [2, 0, 0], sizes = [21, 8, 180], strides = [1, 1, 1]} : vector<23x8x180xf32> to vector<21x8x180xf32>
    %45 = vector.shape_cast %44 : vector<21x8x180xf32> to vector<168x180xf32>
    %c2_22 = arith.constant 2 : index
    %c0_23 = arith.constant 0 : index
    %c0_24 = arith.constant 0 : index
    %46 = vector.load %arg4[%c2_22, %c0_23, %c0_24] : memref<3x180x168xf32, #tpu.memory_space<vmem>>, vector<1x180x168xf32>
    %47 = vector.shape_cast %46 : vector<1x180x168xf32> to vector<180x168xf32>
    %cst_25 = arith.constant dense<0.000000e+00> : vector<168x168xf32>
    %48 = tpu.matmul %45, %47, %cst_25 {dimension_numbers = #tpu.dot_dimension_numbers<[1], [0], [0], [1], [0, 0, 1, 1], [], []>} : vector<168x180xf32>, vector<180x168xf32>, vector<168x168xf32> -> vector<168x168xf32>
    %49 = arith.addf %43, %48 : vector<168x168xf32>
    %c0_26 = arith.constant 0 : index
    %c0_27 = arith.constant 0 : index
    %50 = vector.load %arg5[%c0_26, %c0_27] : memref<1x168xf32, #tpu.memory_space<vmem>>, vector<1x168xf32>
    %51 = vector.broadcast %50 : vector<1x168xf32> to vector<168x168xf32>
    %52 = arith.addf %49, %51 : vector<168x168xf32>
    %cst_28 = arith.constant 0.000000e+00 : f32
    %53 = vector.broadcast %cst_28 : f32 to vector<168x168xf32>
    %54 = arith.maximumf %52, %53 : vector<168x168xf32>
    %55 = vector.shape_cast %54 : vector<168x168xf32> to vector<21x8x168xf32>
    %56 = vector.extract_strided_slice %55 {offsets = [0, 0, 0], sizes = [20, 8, 168], strides = [1, 1, 1]} : vector<21x8x168xf32> to vector<20x8x168xf32>
    %57 = vector.shape_cast %56 : vector<20x8x168xf32> to vector<10x2x8x168xf32>
    %58 = vector.extract_strided_slice %57 {offsets = [0, 0, 0, 0], sizes = [10, 1, 8, 168], strides = [1, 1, 1, 1]} : vector<10x2x8x168xf32> to vector<10x1x8x168xf32>
    %59 = vector.shape_cast %58 : vector<10x1x8x168xf32> to vector<10x8x168xf32>
    %60 = vector.extract_strided_slice %57 {offsets = [0, 1, 0, 0], sizes = [10, 1, 8, 168], strides = [1, 1, 1, 1]} : vector<10x2x8x168xf32> to vector<10x1x8x168xf32>
    %61 = vector.shape_cast %60 : vector<10x1x8x168xf32> to vector<10x8x168xf32>
    %62 = arith.maximumf %59, %61 : vector<10x8x168xf32>
    %63 = vector.extract_strided_slice %62 {offsets = [0, 0, 0], sizes = [10, 8, 160], strides = [1, 1, 1]} : vector<10x8x168xf32> to vector<10x8x160xf32>
    %64 = vector.extract_strided_slice %62 {offsets = [0, 0, 8], sizes = [10, 8, 160], strides = [1, 1, 1]} : vector<10x8x168xf32> to vector<10x8x160xf32>
    %65 = arith.maximumf %63, %64 : vector<10x8x160xf32>
    %66 = vector.extract_strided_slice %65 {offsets = [0, 0, 0], sizes = [8, 8, 160], strides = [1, 1, 1]} : vector<10x8x160xf32> to vector<8x8x160xf32>
    %67 = vector.shape_cast %66 : vector<8x8x160xf32> to vector<64x160xf32>
    %c0_29 = arith.constant 0 : index
    %c0_30 = arith.constant 0 : index
    %c0_31 = arith.constant 0 : index
    %68 = vector.load %arg6[%c0_29, %c0_30, %c0_31] : memref<3x160x128xf32, #tpu.memory_space<vmem>>, vector<1x160x128xf32>
    %69 = vector.shape_cast %68 : vector<1x160x128xf32> to vector<160x128xf32>
    %cst_32 = arith.constant dense<0.000000e+00> : vector<64x128xf32>
    %70 = tpu.matmul %67, %69, %cst_32 {dimension_numbers = #tpu.dot_dimension_numbers<[1], [0], [0], [1], [0, 0, 1, 1], [], []>} : vector<64x160xf32>, vector<160x128xf32>, vector<64x128xf32> -> vector<64x128xf32>
    %71 = vector.extract_strided_slice %65 {offsets = [1, 0, 0], sizes = [8, 8, 160], strides = [1, 1, 1]} : vector<10x8x160xf32> to vector<8x8x160xf32>
    %72 = vector.shape_cast %71 : vector<8x8x160xf32> to vector<64x160xf32>
    %c1_33 = arith.constant 1 : index
    %c0_34 = arith.constant 0 : index
    %c0_35 = arith.constant 0 : index
    %73 = vector.load %arg6[%c1_33, %c0_34, %c0_35] : memref<3x160x128xf32, #tpu.memory_space<vmem>>, vector<1x160x128xf32>
    %74 = vector.shape_cast %73 : vector<1x160x128xf32> to vector<160x128xf32>
    %cst_36 = arith.constant dense<0.000000e+00> : vector<64x128xf32>
    %75 = tpu.matmul %72, %74, %cst_36 {dimension_numbers = #tpu.dot_dimension_numbers<[1], [0], [0], [1], [0, 0, 1, 1], [], []>} : vector<64x160xf32>, vector<160x128xf32>, vector<64x128xf32> -> vector<64x128xf32>
    %76 = arith.addf %70, %75 : vector<64x128xf32>
    %77 = vector.extract_strided_slice %65 {offsets = [2, 0, 0], sizes = [8, 8, 160], strides = [1, 1, 1]} : vector<10x8x160xf32> to vector<8x8x160xf32>
    %78 = vector.shape_cast %77 : vector<8x8x160xf32> to vector<64x160xf32>
    %c2_37 = arith.constant 2 : index
    %c0_38 = arith.constant 0 : index
    %c0_39 = arith.constant 0 : index
    %79 = vector.load %arg6[%c2_37, %c0_38, %c0_39] : memref<3x160x128xf32, #tpu.memory_space<vmem>>, vector<1x160x128xf32>
    %80 = vector.shape_cast %79 : vector<1x160x128xf32> to vector<160x128xf32>
    %cst_40 = arith.constant dense<0.000000e+00> : vector<64x128xf32>
    %81 = tpu.matmul %78, %80, %cst_40 {dimension_numbers = #tpu.dot_dimension_numbers<[1], [0], [0], [1], [0, 0, 1, 1], [], []>} : vector<64x160xf32>, vector<160x128xf32>, vector<64x128xf32> -> vector<64x128xf32>
    %82 = arith.addf %76, %81 : vector<64x128xf32>
    %c0_41 = arith.constant 0 : index
    %c0_42 = arith.constant 0 : index
    %83 = vector.load %arg7[%c0_41, %c0_42] : memref<1x128xf32, #tpu.memory_space<vmem>>, vector<1x128xf32>
    %84 = vector.broadcast %83 : vector<1x128xf32> to vector<64x128xf32>
    %85 = arith.addf %82, %84 : vector<64x128xf32>
    %cst_43 = arith.constant 0.000000e+00 : f32
    %86 = vector.broadcast %cst_43 : f32 to vector<64x128xf32>
    %87 = arith.maximumf %85, %86 : vector<64x128xf32>
    %88 = vector.shape_cast %87 : vector<64x128xf32> to vector<8x8x128xf32>
    %89 = vector.shape_cast %88 : vector<8x8x128xf32> to vector<4x2x8x128xf32>
    %90 = vector.extract_strided_slice %89 {offsets = [0, 0, 0, 0], sizes = [4, 1, 8, 128], strides = [1, 1, 1, 1]} : vector<4x2x8x128xf32> to vector<4x1x8x128xf32>
    %91 = vector.shape_cast %90 : vector<4x1x8x128xf32> to vector<4x8x128xf32>
    %92 = vector.extract_strided_slice %89 {offsets = [0, 1, 0, 0], sizes = [4, 1, 8, 128], strides = [1, 1, 1, 1]} : vector<4x2x8x128xf32> to vector<4x1x8x128xf32>
    %93 = vector.shape_cast %92 : vector<4x1x8x128xf32> to vector<4x8x128xf32>
    %94 = arith.maximumf %91, %93 : vector<4x8x128xf32>
    %95 = vector.extract_strided_slice %94 {offsets = [0, 0, 0], sizes = [4, 8, 112], strides = [1, 1, 1]} : vector<4x8x128xf32> to vector<4x8x112xf32>
    %96 = vector.extract_strided_slice %94 {offsets = [0, 0, 16], sizes = [4, 8, 112], strides = [1, 1, 1]} : vector<4x8x128xf32> to vector<4x8x112xf32>
    %97 = arith.maximumf %95, %96 : vector<4x8x112xf32>
    %98 = vector.extract_strided_slice %97 {offsets = [0, 0, 0], sizes = [2, 8, 112], strides = [1, 1, 1]} : vector<4x8x112xf32> to vector<2x8x112xf32>
    %99 = vector.shape_cast %98 : vector<2x8x112xf32> to vector<16x112xf32>
    %c0_44 = arith.constant 0 : index
    %c0_45 = arith.constant 0 : index
    %c0_46 = arith.constant 0 : index
    %100 = vector.load %arg8[%c0_44, %c0_45, %c0_46] : memref<3x112x64xf32, #tpu.memory_space<vmem>>, vector<1x112x64xf32>
    %101 = vector.shape_cast %100 : vector<1x112x64xf32> to vector<112x64xf32>
    %cst_47 = arith.constant dense<0.000000e+00> : vector<16x64xf32>
    %102 = tpu.matmul %99, %101, %cst_47 {dimension_numbers = #tpu.dot_dimension_numbers<[1], [0], [0], [1], [0, 0, 1, 1], [], []>} : vector<16x112xf32>, vector<112x64xf32>, vector<16x64xf32> -> vector<16x64xf32>
    %103 = vector.extract_strided_slice %97 {offsets = [1, 0, 0], sizes = [2, 8, 112], strides = [1, 1, 1]} : vector<4x8x112xf32> to vector<2x8x112xf32>
    %104 = vector.shape_cast %103 : vector<2x8x112xf32> to vector<16x112xf32>
    %c1_48 = arith.constant 1 : index
    %c0_49 = arith.constant 0 : index
    %c0_50 = arith.constant 0 : index
    %105 = vector.load %arg8[%c1_48, %c0_49, %c0_50] : memref<3x112x64xf32, #tpu.memory_space<vmem>>, vector<1x112x64xf32>
    %106 = vector.shape_cast %105 : vector<1x112x64xf32> to vector<112x64xf32>
    %cst_51 = arith.constant dense<0.000000e+00> : vector<16x64xf32>
    %107 = tpu.matmul %104, %106, %cst_51 {dimension_numbers = #tpu.dot_dimension_numbers<[1], [0], [0], [1], [0, 0, 1, 1], [], []>} : vector<16x112xf32>, vector<112x64xf32>, vector<16x64xf32> -> vector<16x64xf32>
    %108 = arith.addf %102, %107 : vector<16x64xf32>
    %109 = vector.extract_strided_slice %97 {offsets = [2, 0, 0], sizes = [2, 8, 112], strides = [1, 1, 1]} : vector<4x8x112xf32> to vector<2x8x112xf32>
    %110 = vector.shape_cast %109 : vector<2x8x112xf32> to vector<16x112xf32>
    %c2_52 = arith.constant 2 : index
    %c0_53 = arith.constant 0 : index
    %c0_54 = arith.constant 0 : index
    %111 = vector.load %arg8[%c2_52, %c0_53, %c0_54] : memref<3x112x64xf32, #tpu.memory_space<vmem>>, vector<1x112x64xf32>
    %112 = vector.shape_cast %111 : vector<1x112x64xf32> to vector<112x64xf32>
    %cst_55 = arith.constant dense<0.000000e+00> : vector<16x64xf32>
    %113 = tpu.matmul %110, %112, %cst_55 {dimension_numbers = #tpu.dot_dimension_numbers<[1], [0], [0], [1], [0, 0, 1, 1], [], []>} : vector<16x112xf32>, vector<112x64xf32>, vector<16x64xf32> -> vector<16x64xf32>
    %114 = arith.addf %108, %113 : vector<16x64xf32>
    %c0_56 = arith.constant 0 : index
    %c0_57 = arith.constant 0 : index
    %115 = vector.load %arg9[%c0_56, %c0_57] : memref<1x64xf32, #tpu.memory_space<vmem>>, vector<1x64xf32>
    %116 = vector.broadcast %115 : vector<1x64xf32> to vector<16x64xf32>
    %117 = arith.addf %114, %116 : vector<16x64xf32>
    %cst_58 = arith.constant 0.000000e+00 : f32
    %118 = vector.broadcast %cst_58 : f32 to vector<16x64xf32>
    %119 = arith.maximumf %117, %118 : vector<16x64xf32>
    %120 = vector.shape_cast %119 : vector<16x64xf32> to vector<2x8x64xf32>
    %121 = vector.shape_cast %120 : vector<2x8x64xf32> to vector<1x2x8x64xf32>
    %122 = vector.extract_strided_slice %121 {offsets = [0, 0, 0, 0], sizes = [1, 1, 8, 64], strides = [1, 1, 1, 1]} : vector<1x2x8x64xf32> to vector<1x1x8x64xf32>
    %123 = vector.shape_cast %122 : vector<1x1x8x64xf32> to vector<1x8x64xf32>
    %124 = vector.extract_strided_slice %121 {offsets = [0, 1, 0, 0], sizes = [1, 1, 8, 64], strides = [1, 1, 1, 1]} : vector<1x2x8x64xf32> to vector<1x1x8x64xf32>
    %125 = vector.shape_cast %124 : vector<1x1x8x64xf32> to vector<1x8x64xf32>
    %126 = arith.maximumf %123, %125 : vector<1x8x64xf32>
    %127 = vector.extract_strided_slice %126 {offsets = [0, 0, 0], sizes = [1, 8, 32], strides = [1, 1, 1]} : vector<1x8x64xf32> to vector<1x8x32xf32>
    %128 = vector.extract_strided_slice %126 {offsets = [0, 0, 32], sizes = [1, 8, 32], strides = [1, 1, 1]} : vector<1x8x64xf32> to vector<1x8x32xf32>
    %129 = arith.maximumf %127, %128 : vector<1x8x32xf32>
    %cst_59 = arith.constant 0.000000e+00 : f32
    %130 = vector.broadcast %cst_59 : f32 to vector<8x32xf32>
    %131 = vector.shape_cast %129 : vector<1x8x32xf32> to vector<8x32xf32>
    %c0_60 = arith.constant 0 : index
    %c0_61 = arith.constant 0 : index
    %c0_62 = arith.constant 0 : index
    %132 = vector.load %arg10[%c0_60, %c0_61, %c0_62] : memref<1x32x32xf32, #tpu.memory_space<vmem>>, vector<1x32x32xf32>
    %133 = vector.shape_cast %132 : vector<1x32x32xf32> to vector<32x32xf32>
    %cst_63 = arith.constant dense<0.000000e+00> : vector<8x32xf32>
    %134 = tpu.matmul %131, %133, %cst_63 {dimension_numbers = #tpu.dot_dimension_numbers<[1], [0], [0], [1], [0, 0, 1, 1], [], []>} : vector<8x32xf32>, vector<32x32xf32>, vector<8x32xf32> -> vector<8x32xf32>
    %135 = arith.addf %130, %134 : vector<8x32xf32>
    %c0_64 = arith.constant 0 : index
    %c0_65 = arith.constant 0 : index
    %136 = vector.load %arg11[%c0_64, %c0_65] : memref<1x32xf32, #tpu.memory_space<vmem>>, vector<1x32xf32>
    %137 = vector.broadcast %136 : vector<1x32xf32> to vector<8x32xf32>
    %138 = arith.addf %135, %137 : vector<8x32xf32>
    %cst_66 = arith.constant 0.000000e+00 : f32
    %139 = vector.broadcast %cst_66 : f32 to vector<8x32xf32>
    %140 = arith.maximumf %138, %139 : vector<8x32xf32>
    %c0_67 = arith.constant 0 : index
    %c0_68 = arith.constant 0 : index
    %141 = vector.load %arg14[%c0_67, %c0_68] : memref<8x32xf32, #tpu.memory_space<vmem>>, vector<8x32xf32>
    %142 = arith.mulf %140, %141 : vector<8x32xf32>
    %c0_69 = arith.constant 0 : index
    %c0_70 = arith.constant 0 : index
    %143 = vector.load %arg12[%c0_69, %c0_70] : memref<32x128xf32, #tpu.memory_space<vmem>>, vector<32x128xf32>
    %cst_71 = arith.constant dense<0.000000e+00> : vector<8x128xf32>
    %144 = tpu.matmul %142, %143, %cst_71 {dimension_numbers = #tpu.dot_dimension_numbers<[1], [0], [0], [1], [0, 0, 1, 1], [], []>} : vector<8x32xf32>, vector<32x128xf32>, vector<8x128xf32> -> vector<8x128xf32>
    %c0_72 = arith.constant 0 : index
    %c0_73 = arith.constant 0 : index
    %145 = vector.load %arg13[%c0_72, %c0_73] : memref<1x128xf32, #tpu.memory_space<vmem>>, vector<1x128xf32>
    %146 = vector.broadcast %145 : vector<1x128xf32> to vector<8x128xf32>
    %147 = arith.addf %144, %146 : vector<8x128xf32>
    %cst_74 = arith.constant dense<0xFF800000> : vector<8xf32>
    %148 = vector.multi_reduction <maximumf>, %147, %cst_74 [1] : vector<8x128xf32> to vector<8xf32>
    %149 = vector.shape_cast %148 : vector<8xf32> to vector<8x1xf32>
    %150 = vector.broadcast %149 : vector<8x1xf32> to vector<8x128xf32>
    %151 = arith.subf %147, %150 : vector<8x128xf32>
    %152 = math.exp %151 : vector<8x128xf32>
    %cst_75 = arith.constant dense<0.000000e+00> : vector<8xf32>
    %153 = vector.multi_reduction <add>, %152, %cst_75 [1] : vector<8x128xf32> to vector<8xf32>
    %154 = vector.shape_cast %153 : vector<8xf32> to vector<8x1xf32>
    %155 = math.log %154 : vector<8x1xf32>
    %156 = vector.broadcast %155 : vector<8x1xf32> to vector<8x128xf32>
    %157 = arith.subf %151, %156 : vector<8x128xf32>
    %c0_76 = arith.constant 0 : index
    %c0_77 = arith.constant 0 : index
    %158 = vector.load %arg15[%c0_76, %c0_77] : memref<8x128xf32, #tpu.memory_space<vmem>>, vector<8x128xf32>
    tpu.vector_store %arg15[%c0_76, %c0_77], %157 {strides = array<i32>} : memref<8x128xf32, #tpu.memory_space<vmem>>, vector<8x128xf32>,
    return
  }
  func.func @transform_0(%arg0: i32) -> (i32, i32, i32) {
    %c0_i32 = arith.constant 0 : i32
    %c0_i32_0 = arith.constant 0 : i32
    %c0_i32_1 = arith.constant 0 : i32
    return %c0_i32, %arg0, %c0_i32_0 : i32, i32, i32
  }
  func.func @transform_1(%arg0: i32) -> (i32, i32, i32) {
    %c0_i32 = arith.constant 0 : i32
    %c0_i32_0 = arith.constant 0 : i32
    %c0_i32_1 = arith.constant 0 : i32
    %c0_i32_2 = arith.constant 0 : i32
    return %c0_i32, %c0_i32_0, %c0_i32_1 : i32, i32, i32
  }
  func.func @transform_2(%arg0: i32) -> (i32, i32) {
    %c0_i32 = arith.constant 0 : i32
    %c0_i32_0 = arith.constant 0 : i32
    %c0_i32_1 = arith.constant 0 : i32
    return %c0_i32, %c0_i32_0 : i32, i32
  }
  func.func @transform_3(%arg0: i32) -> (i32, i32, i32) {
    %c0_i32 = arith.constant 0 : i32
    %c0_i32_0 = arith.constant 0 : i32
    %c0_i32_1 = arith.constant 0 : i32
    %c0_i32_2 = arith.constant 0 : i32
    return %c0_i32, %c0_i32_0, %c0_i32_1 : i32, i32, i32
  }
  func.func @transform_4(%arg0: i32) -> (i32, i32) {
    %c0_i32 = arith.constant 0 : i32
    %c0_i32_0 = arith.constant 0 : i32
    %c0_i32_1 = arith.constant 0 : i32
    return %c0_i32, %c0_i32_0 : i32, i32
  }
  func.func @transform_5(%arg0: i32) -> (i32, i32, i32) {
    %c0_i32 = arith.constant 0 : i32
    %c0_i32_0 = arith.constant 0 : i32
    %c0_i32_1 = arith.constant 0 : i32
    %c0_i32_2 = arith.constant 0 : i32
    return %c0_i32, %c0_i32_0, %c0_i32_1 : i32, i32, i32
  }
  func.func @transform_6(%arg0: i32) -> (i32, i32) {
    %c0_i32 = arith.constant 0 : i32
    %c0_i32_0 = arith.constant 0 : i32
    %c0_i32_1 = arith.constant 0 : i32
    return %c0_i32, %c0_i32_0 : i32, i32
  }
  func.func @transform_7(%arg0: i32) -> (i32, i32, i32) {
    %c0_i32 = arith.constant 0 : i32
    %c0_i32_0 = arith.constant 0 : i32
    %c0_i32_1 = arith.constant 0 : i32
    %c0_i32_2 = arith.constant 0 : i32
    return %c0_i32, %c0_i32_0, %c0_i32_1 : i32, i32, i32
  }
  func.func @transform_8(%arg0: i32) -> (i32, i32) {
    %c0_i32 = arith.constant 0 : i32
    %c0_i32_0 = arith.constant 0 : i32
    %c0_i32_1 = arith.constant 0 : i32
    return %c0_i32, %c0_i32_0 : i32, i32
  }
  func.func @transform_9(%arg0: i32) -> (i32, i32, i32) {
    %c0_i32 = arith.constant 0 : i32
    %c0_i32_0 = arith.constant 0 : i32
    %c0_i32_1 = arith.constant 0 : i32
    %c0_i32_2 = arith.constant 0 : i32
    return %c0_i32, %c0_i32_0, %c0_i32_1 : i32, i32, i32
  }
  func.func @transform_10(%arg0: i32) -> (i32, i32) {
    %c0_i32 = arith.constant 0 : i32
    %c0_i32_0 = arith.constant 0 : i32
    %c0_i32_1 = arith.constant 0 : i32
    return %c0_i32, %c0_i32_0 : i32, i32
  }
  func.func @transform_11(%arg0: i32) -> (i32, i32) {
    %c0_i32 = arith.constant 0 : i32
    %c0_i32_0 = arith.constant 0 : i32
    %c0_i32_1 = arith.constant 0 : i32
    return %c0_i32, %c0_i32_0 : i32, i32
  }
  func.func @transform_12(%arg0: i32) -> (i32, i32) {
    %c0_i32 = arith.constant 0 : i32
    %c0_i32_0 = arith.constant 0 : i32
    %c0_i32_1 = arith.constant 0 : i32
    return %c0_i32, %c0_i32_0 : i32, i32
  }
  func.func @transform_13(%arg0: i32) -> (i32, i32) {
    %c0_i32 = arith.constant 0 : i32
    %c0_i32_0 = arith.constant 0 : i32
    return %arg0, %c0_i32 : i32, i32
  }
  func.func @transform_14(%arg0: i32) -> (i32, i32) {
    %c0_i32 = arith.constant 0 : i32
    %c0_i32_0 = arith.constant 0 : i32
    return %arg0, %c0_i32 : i32, i32
  }
}

</mosaic_0001>

<llo_original>
// kernel: tpu_custom_call.1
$region0: #{tpu_custom_call.1}
  #allocation0 [shape = 'u32[]', space=smem, size = 0x4, offset = 0x4, fixed_abs, tag = 'smem constant byte address 0x4 - core index']
  #allocation1 [shape = 'u32[144,128]{1,0:T(1,128)}', space=vmem, size = 0x12000, scoped, tag = 'internal scratch']
  %s0 = inlined_call_operand.vmem [shape: f32[48,8,144], index: 0, kind: input, shape index: {}]
  %s1 = inlined_call_operand.vmem [shape: f32[3,144,184], index: 1, kind: input, shape index: {}]
  %s2 = inlined_call_operand.vmem [shape: f32[1,184], index: 2, kind: input, shape index: {}]
  %s3 = inlined_call_operand.vmem [shape: f32[3,180,168], index: 3, kind: input, shape index: {}]
  %s4 = inlined_call_operand.vmem [shape: f32[1,168], index: 4, kind: input, shape index: {}]
  %s5 = inlined_call_operand.vmem [shape: f32[3,160,128], index: 5, kind: input, shape index: {}]
  %s6 = inlined_call_operand.vmem [shape: f32[1,128], index: 6, kind: input, shape index: {}]
  %s7 = inlined_call_operand.vmem [shape: f32[3,112,64], index: 7, kind: input, shape index: {}]
  %s8 = inlined_call_operand.vmem [shape: f32[1,64], index: 8, kind: input, shape index: {}]
  %s9 = inlined_call_operand.vmem [shape: f32[1,32,32], index: 9, kind: input, shape index: {}]
  %s10 = inlined_call_operand.vmem [shape: f32[1,32], index: 10, kind: input, shape index: {}]
  %s11 = inlined_call_operand.vmem [shape: f32[32,128], index: 11, kind: input, shape index: {}]
  %s12 = inlined_call_operand.vmem [shape: f32[1,128], index: 12, kind: input, shape index: {}]
  %s13 = inlined_call_operand.vmem [shape: f32[8,32], index: 13, kind: input, shape index: {}]
  %s14 = inlined_call_operand.hbm [shape: f32[8,128], index: 14, kind: output, shape index: {}]
  %s15 = sld [smem:[#allocation0]]
  $region66: #{tpu_custom_call.1} parent=0
    _
  %s17 = ssub.s32 1, %s15
  %s18 = scalar_select 0, %s17, %s15
  $region1: #{tpu_custom_call.1} parent=0
    #allocation2 [shape = 'u8[4096]{0}', space=vmem, size = 0x1000, scoped, tag = 'output window, operand 0, single buffered']
    #allocation3 [shape = 's32[1]{0}', space=sflag, size = 0x4, scoped, tag = 'scoped memory for tpu_custom_call.1']
    %19 = vsyncpa [#allocation3], 0
    // Predicated region
    $region2: #{tpu_custom_call.1} parent=1 // pred_check
      _
    $region3: #{tpu_custom_call.1} parent=1 // pred_check_branch
      %21 = sbr.rel (0) target = $region5
    $region4: #{tpu_custom_call.1} parent=1 // pred_region
      _
    $region5: #{tpu_custom_call.1} parent=1 // pred_fallthru
      _
    // Predicated region
    $region6: #{tpu_custom_call.1} parent=1 // pred_check
      _
    $region7: #{tpu_custom_call.1} parent=1 // pred_check_branch
      %23 = sbr.rel (0) target = $region9
    $region8: #{tpu_custom_call.1} parent=1 // pred_region
      _
    $region9: #{tpu_custom_call.1} parent=1 // pred_fallthru
      _
    // Predicated region
    $region10: #{tpu_custom_call.1} parent=1 // pred_check
      _
    $region11: #{tpu_custom_call.1} parent=1 // pred_check_branch
      %25 = sbr.rel (0) target = $region13
    $region12: #{tpu_custom_call.1} parent=1 // pred_region
      _
    $region13: #{tpu_custom_call.1} parent=1 // pred_fallthru
      _
    // Predicated region
    $region14: #{tpu_custom_call.1} parent=1 // pred_check
      _
    $region15: #{tpu_custom_call.1} parent=1 // pred_check_branch
      %27 = sbr.rel (0) target = $region17
    $region16: #{tpu_custom_call.1} parent=1 // pred_region
      _
    $region17: #{tpu_custom_call.1} parent=1 // pred_fallthru
      _
    // Predicated region
    $region18: #{tpu_custom_call.1} parent=1 // pred_check
      _
    $region19: #{tpu_custom_call.1} parent=1 // pred_check_branch
      %29 = sbr.rel (0) target = $region21
    $region20: #{tpu_custom_call.1} parent=1 // pred_region
      _
    $region21: #{tpu_custom_call.1} parent=1 // pred_fallthru
      _
    // Predicated region
    $region22: #{tpu_custom_call.1} parent=1 // pred_check
      _
    $region23: #{tpu_custom_call.1} parent=1 // pred_check_branch
      %31 = sbr.rel (0) target = $region25
    $region24: #{tpu_custom_call.1} parent=1 // pred_region
      _
    $region25: #{tpu_custom_call.1} parent=1 // pred_fallthru
      _
    // Predicated region
    $region26: #{tpu_custom_call.1} parent=1 // pred_check
      _
    $region27: #{tpu_custom_call.1} parent=1 // pred_check_branch
      %33 = sbr.rel (0) target = $region29
    $region28: #{tpu_custom_call.1} parent=1 // pred_region
      _
    $region29: #{tpu_custom_call.1} parent=1 // pred_fallthru
      _
    // Predicated region
    $region30: #{tpu_custom_call.1} parent=1 // pred_check
      _
    $region31: #{tpu_custom_call.1} parent=1 // pred_check_branch
      %35 = sbr.rel (0) target = $region33
    $region32: #{tpu_custom_call.1} parent=1 // pred_region
      _
    $region33: #{tpu_custom_call.1} parent=1 // pred_fallthru
      _
    // Predicated region
    $region34: #{tpu_custom_call.1} parent=1 // pred_check
      _
    $region35: #{tpu_custom_call.1} parent=1 // pred_check_branch
      %37 = sbr.rel (0) target = $region37
    $region36: #{tpu_custom_call.1} parent=1 // pred_region
      _
    $region37: #{tpu_custom_call.1} parent=1 // pred_fallthru
      _
    // Predicated region
    $region38: #{tpu_custom_call.1} parent=1 // pred_check
      _
    $region39: #{tpu_custom_call.1} parent=1 // pred_check_branch
      %39 = sbr.rel (0) target = $region41
    $region40: #{tpu_custom_call.1} parent=1 // pred_region
      _
    $region41: #{tpu_custom_call.1} parent=1 // pred_fallthru
      _
    // Predicated region
    $region42: #{tpu_custom_call.1} parent=1 // pred_check
      _
    $region43: #{tpu_custom_call.1} parent=1 // pred_check_branch
      %41 = sbr.rel (0) target = $region45
    $region44: #{tpu_custom_call.1} parent=1 // pred_region
      _
    $region45: #{tpu_custom_call.1} parent=1 // pred_fallthru
      _
    // Predicated region
    $region46: #{tpu_custom_call.1} parent=1 // pred_check
      _
    $region47: #{tpu_custom_call.1} parent=1 // pred_check_branch
      %43 = sbr.rel (0) target = $region49
    $region48: #{tpu_custom_call.1} parent=1 // pred_region
      _
    $region49: #{tpu_custom_call.1} parent=1 // pred_fallthru
      _
    // Predicated region
    $region50: #{tpu_custom_call.1} parent=1 // pred_check
      _
    $region51: #{tpu_custom_call.1} parent=1 // pred_check_branch
      %45 = sbr.rel (0) target = $region53
    $region52: #{tpu_custom_call.1} parent=1 // pred_region
      _
    $region53: #{tpu_custom_call.1} parent=1 // pred_fallthru
      _
    // Predicated region
    $region54: #{tpu_custom_call.1} parent=1 // pred_check
      _
    $region55: #{tpu_custom_call.1} parent=1 // pred_check_branch
      %47 = sbr.rel (0) target = $region57
    $region56: #{tpu_custom_call.1} parent=1 // pred_region
      _
    $region57: #{tpu_custom_call.1} parent=1 // pred_fallthru
      _
    %v48 = vld [vmem:[%s0] sm:$0xff]
    %v49 = vld [vmem:[%s0 + $0x8] sm:$0xff]
    %v50 = vld [vmem:[%s0 + $0x10] sm:$0xff]
    %v51 = vld [vmem:[%s0 + $0x18] sm:$0xff]
    %v52 = vld [vmem:[%s0 + $0x20] sm:$0xff]
    %v53 = vld [vmem:[%s0 + $0x28] sm:$0xff]
    %v54 = vld [vmem:[%s0 + $0x30] sm:$0xff]
    %v55 = vld [vmem:[%s0 + $0x38] sm:$0xff]
    %v56 = vld [vmem:[%s0 + $0x40] sm:$0xff]
    %v57 = vld [vmem:[%s0 + $0x48] sm:$0xff]
    %v58 = vld [vmem:[%s0 + $0x50] sm:$0xff]
    %v59 = vld [vmem:[%s0 + $0x58] sm:$0xff]
    %v60 = vld [vmem:[%s0 + $0x60] sm:$0xff]
    %v61 = vld [vmem:[%s0 + $0x68] sm:$0xff]
    %v62 = vld [vmem:[%s0 + $0x70] sm:$0xff]
    %v63 = vld [vmem:[%s0 + $0x78] sm:$0xff]
    %v64 = vld [vmem:[%s0 + $0x80] sm:$0xff]
    %v65 = vld [vmem:[%s0 + $0x88] sm:$0xff]
    %v66 = vld [vmem:[%s0 + $0x90] sm:$0xff]
    %v67 = vld [vmem:[%s0 + $0x98] sm:$0xff]
    %v68 = vld [vmem:[%s0 + $0xa0] sm:$0xff]
    %v69 = vld [vmem:[%s0 + $0xa8] sm:$0xff]
    %v70 = vld [vmem:[%s0 + $0xb0] sm:$0xff]
    %v71 = vld [vmem:[%s0 + $0xb8] sm:$0xff]
    %v72 = vld [vmem:[%s0 + $0xc0] sm:$0xff]
    %v73 = vld [vmem:[%s0 + $0xc8] sm:$0xff]
    %v74 = vld [vmem:[%s0 + $0xd0] sm:$0xff]
    %v75 = vld [vmem:[%s0 + $0xd8] sm:$0xff]
    %v76 = vld [vmem:[%s0 + $0xe0] sm:$0xff]
    %v77 = vld [vmem:[%s0 + $0xe8] sm:$0xff]
    %v78 = vld [vmem:[%s0 + $0xf0] sm:$0xff]
    %v79 = vld [vmem:[%s0 + $0xf8] sm:$0xff]
    %v80 = vld [vmem:[%s0 + $0x100] sm:$0xff]
    %v81 = vld [vmem:[%s0 + $0x108] sm:$0xff]
    %v82 = vld [vmem:[%s0 + $0x110] sm:$0xff]
    %v83 = vld [vmem:[%s0 + $0x118] sm:$0xff]
    %v84 = vld [vmem:[%s0 + $0x120] sm:$0xff]
    %v85 = vld [vmem:[%s0 + $0x128] sm:$0xff]
    %v86 = vld [vmem:[%s0 + $0x130] sm:$0xff]
    %v87 = vld [vmem:[%s0 + $0x138] sm:$0xff]
    %v88 = vld [vmem:[%s0 + $0x140] sm:$0xff]
    %v89 = vld [vmem:[%s0 + $0x148] sm:$0xff]
    %v90 = vld [vmem:[%s0 + $0x150] sm:$0xff]
    %v91 = vld [vmem:[%s0 + $0x158] sm:$0xff]
    %v92 = vld [vmem:[%s0 + $0x160] sm:$0xff]
    %v93 = vld [vmem:[%s0 + $0x168] sm:$0xff]
    %v94 = vld [vmem:[%s0 + $0x170] sm:$0xff]
    %v95 = vld [vmem:[%s0 + $0x178] sm:$0xff]
    %v96 = vld [vmem:[%s0 + $0x180] sm:$0xff]
    %v97 = vld [vmem:[%s0 + $0x188] sm:$0xff]
    %v98 = vld [vmem:[%s0 + $0x190] sm:$0xff]
    %v99 = vld [vmem:[%s0 + $0x198] sm:$0xff]
    %v100 = vld [vmem:[%s0 + $0x1a0] sm:$0xff]
    %v101 = vld [vmem:[%s0 + $0x1a8] sm:$0xff]
    %v102 = vld [vmem:[%s0 + $0x1b0] sm:$0xff]
    %v103 = vld [vmem:[%s0 + $0x1b8] sm:$0xff]
    %v104 = vld [vmem:[%s0 + $0x1c0] sm:$0xff]
    %v105 = vld [vmem:[%s0 + $0x1c8] sm:$0xff]
    %v106 = vld [vmem:[%s0 + $0x1d0] sm:$0xff]
    %v107 = vld [vmem:[%s0 + $0x1d8] sm:$0xff]
    %v108 = vld [vmem:[%s0 + $0x1e0] sm:$0xff]
    %v109 = vld [vmem:[%s0 + $0x1e8] sm:$0xff]
    %v110 = vld [vmem:[%s0 + $0x1f0] sm:$0xff]
    %v111 = vld [vmem:[%s0 + $0x1f8] sm:$0xff]
    %v112 = vld [vmem:[%s0 + $0x200] sm:$0xff]
    %v113 = vld [vmem:[%s0 + $0x208] sm:$0xff]
    %v114 = vld [vmem:[%s0 + $0x210] sm:$0xff]
    %v115 = vld [vmem:[%s0 + $0x218] sm:$0xff]
    %v116 = vld [vmem:[%s0 + $0x220] sm:$0xff]
    %v117 = vld [vmem:[%s0 + $0x228] sm:$0xff]
    %v118 = vld [vmem:[%s0 + $0x230] sm:$0xff]
    %v119 = vld [vmem:[%s0 + $0x238] sm:$0xff]
    %v120 = vld [vmem:[%s0 + $0x240] sm:$0xff]
    %v121 = vld [vmem:[%s0 + $0x248] sm:$0xff]
    %v122 = vld [vmem:[%s0 + $0x250] sm:$0xff]
    %v123 = vld [vmem:[%s0 + $0x258] sm:$0xff]
    %v124 = vld [vmem:[%s0 + $0x260] sm:$0xff]
    %v125 = vld [vmem:[%s0 + $0x268] sm:$0xff]
    %v126 = vld [vmem:[%s0 + $0x270] sm:$0xff]
    %v127 = vld [vmem:[%s0 + $0x278] sm:$0xff]
    %v128 = vld [vmem:[%s0 + $0x280] sm:$0xff]
    %v129 = vld [vmem:[%s0 + $0x288] sm:$0xff]
    %v130 = vld [vmem:[%s0 + $0x290] sm:$0xff]
    %v131 = vld [vmem:[%s0 + $0x298] sm:$0xff]
    %v132 = vld [vmem:[%s0 + $0x2a0] sm:$0xff]
    %v133 = vld [vmem:[%s0 + $0x2a8] sm:$0xff]
    %v134 = vld [vmem:[%s0 + $0x2b0] sm:$0xff]
    %v135 = vld [vmem:[%s0 + $0x2b8] sm:$0xff]
    %v136 = vld [vmem:[%s0 + $0x2c0] sm:$0xff]
    %v137 = vld [vmem:[%s0 + $0x2c8] sm:$0xff]
    %v138 = vld [vmem:[%s0 + $0x2d0] sm:$0xff]
    %v139 = vld [vmem:[%s0 + $0x2d8] sm:$0xff]
    %v140 = vld [vmem:[%s0 + $0x2e0] sm:$0xff]
    %v141 = vld [vmem:[%s0 + $0x2e8] sm:$0xff]
    %v142 = vld [vmem:[%s0 + $0x2f0] sm:$0xff]
    %v143 = vld [vmem:[%s0 + $0x2f8] sm:$0xff]
    %v144 = vld [vmem:[%s1] sm:$0xff]
    %v145 = vld [vmem:[%s1 + $0x8] sm:$0xff]
    %v146 = vld [vmem:[%s1 + $0x10] sm:$0xff]
    %v147 = vld [vmem:[%s1 + $0x18] sm:$0xff]
    %v148 = vld [vmem:[%s1 + $0x20] sm:$0xff]
    %v149 = vld [vmem:[%s1 + $0x28] sm:$0xff]
    %v150 = vld [vmem:[%s1 + $0x30] sm:$0xff]
    %v151 = vld [vmem:[%s1 + $0x38] sm:$0xff]
    %v152 = vld [vmem:[%s1 + $0x40] sm:$0xff]
    %v153 = vld [vmem:[%s1 + $0x48] sm:$0xff]
    %v154 = vld [vmem:[%s1 + $0x50] sm:$0xff]
    %v155 = vld [vmem:[%s1 + $0x58] sm:$0xff]
    %v156 = vld [vmem:[%s1 + $0x60] sm:$0xff]
    %v157 = vld [vmem:[%s1 + $0x68] sm:$0xff]
    %v158 = vld [vmem:[%s1 + $0x70] sm:$0xff]
    %v159 = vld [vmem:[%s1 + $0x78] sm:$0xff]
    %v160 = vld [vmem:[%s1 + $0x80] sm:$0xff]
    %v161 = vld [vmem:[%s1 + $0x88] sm:$0xff]
    %v162 = vld [vmem:[%s1 + $0x90] sm:$0xff]
    %v163 = vld [vmem:[%s1 + $0x98] sm:$0xff]
    %v164 = vld [vmem:[%s1 + $0xa0] sm:$0xff]
    %v165 = vld [vmem:[%s1 + $0xa8] sm:$0xff]
    %v166 = vld [vmem:[%s1 + $0xb0] sm:$0xff]
    %v167 = vld [vmem:[%s1 + $0xb8] sm:$0xff]
    %v168 = vld [vmem:[%s1 + $0xc0] sm:$0xff]
    %v169 = vld [vmem:[%s1 + $0xc8] sm:$0xff]
    %v170 = vld [vmem:[%s1 + $0xd0] sm:$0xff]
    %v171 = vld [vmem:[%s1 + $0xd8] sm:$0xff]
    %v172 = vld [vmem:[%s1 + $0xe0] sm:$0xff]
    %v173 = vld [vmem:[%s1 + $0xe8] sm:$0xff]
    %v174 = vld [vmem:[%s1 + $0xf0] sm:$0xff]
    %v175 = vld [vmem:[%s1 + $0xf8] sm:$0xff]
    %v176 = vld [vmem:[%s1 + $0x100] sm:$0xff]
    %v177 = vld [vmem:[%s1 + $0x108] sm:$0xff]
    %v178 = vld [vmem:[%s1 + $0x110] sm:$0xff]
    %v179 = vld [vmem:[%s1 + $0x118] sm:$0xff]
    %s180 = scalar_lea.vmem %s1, 288
    %v181 = vld [vmem:[%s180] sm:$0xff]
    %v182 = vld [vmem:[%s180 + $0x8] sm:$0xff]
    %v183 = vld [vmem:[%s180 + $0x10] sm:$0xff]
    %v184 = vld [vmem:[%s180 + $0x18] sm:$0xff]
    %v185 = vld [vmem:[%s180 + $0x20] sm:$0xff]
    %v186 = vld [vmem:[%s180 + $0x28] sm:$0xff]
    %v187 = vld [vmem:[%s180 + $0x30] sm:$0xff]
    %v188 = vld [vmem:[%s180 + $0x38] sm:$0xff]
    %v189 = vld [vmem:[%s180 + $0x40] sm:$0xff]
    %v190 = vld [vmem:[%s180 + $0x48] sm:$0xff]
    %v191 = vld [vmem:[%s180 + $0x50] sm:$0xff]
    %v192 = vld [vmem:[%s180 + $0x58] sm:$0xff]
    %v193 = vld [vmem:[%s180 + $0x60] sm:$0xff]
    %v194 = vld [vmem:[%s180 + $0x68] sm:$0xff]
    %v195 = vld [vmem:[%s180 + $0x70] sm:$0xff]
    %v196 = vld [vmem:[%s180 + $0x78] sm:$0xff]
    %v197 = vld [vmem:[%s180 + $0x80] sm:$0xff]
    %v198 = vld [vmem:[%s180 + $0x88] sm:$0xff]
    %v199 = vld [vmem:[%s180 + $0x90] sm:$0xff]
    %v200 = vld [vmem:[%s180 + $0x98] sm:$0xff]
    %v201 = vld [vmem:[%s180 + $0xa0] sm:$0xff]
    %v202 = vld [vmem:[%s180 + $0xa8] sm:$0xff]
    %v203 = vld [vmem:[%s180 + $0xb0] sm:$0xff]
    %v204 = vld [vmem:[%s180 + $0xb8] sm:$0xff]
    %v205 = vld [vmem:[%s180 + $0xc0] sm:$0xff]
    %v206 = vld [vmem:[%s180 + $0xc8] sm:$0xff]
    %v207 = vld [vmem:[%s180 + $0xd0] sm:$0xff]
    %v208 = vld [vmem:[%s180 + $0xd8] sm:$0xff]
    %v209 = vld [vmem:[%s180 + $0xe0] sm:$0xff]
    %v210 = vld [vmem:[%s180 + $0xe8] sm:$0xff]
    %v211 = vld [vmem:[%s180 + $0xf0] sm:$0xff]
    %v212 = vld [vmem:[%s180 + $0xf8] sm:$0xff]
    %v213 = vld [vmem:[%s180 + $0x100] sm:$0xff]
    %v214 = vld [vmem:[%s180 + $0x108] sm:$0xff]
    %v215 = vld [vmem:[%s180 + $0x110] sm:$0xff]
    %v216 = vld [vmem:[%s180 + $0x118] sm:$0xff]
    %vm217 = vcmask 130048
    %v219 = vsel %vm217, %v51, 0
    %v222 = vsel %vm217, %v53, 0
    %v225 = vsel %vm217, %v55, 0
    %v228 = vsel %vm217, %v57, 0
    %v231 = vsel %vm217, %v59, 0
    %v234 = vsel %vm217, %v61, 0
    %v237 = vsel %vm217, %v63, 0
    %v240 = vsel %vm217, %v65, 0
    %v243 = vsel %vm217, %v67, 0
    %v246 = vsel %vm217, %v69, 0
    %v249 = vsel %vm217, %v71, 0
    %v252 = vsel %vm217, %v73, 0
    %v255 = vsel %vm217, %v75, 0
    %v258 = vsel %vm217, %v77, 0
    %v261 = vsel %vm217, %v79, 0
    %v264 = vsel %vm217, %v81, 0
    %v267 = vsel %vm217, %v83, 0
    %v270 = vsel %vm217, %v85, 0
    %v273 = vsel %vm217, %v87, 0
    %v276 = vsel %vm217, %v89, 0
    %v279 = vsel %vm217, %v91, 0
    %v282 = vsel %vm217, %v93, 0
    %v285 = vsel %vm217, %v95, 0
    %v288 = vsel %vm217, %v97, 0
    %v291 = vsel %vm217, %v99, 0
    %v294 = vsel %vm217, %v101, 0
    %v297 = vsel %vm217, %v103, 0
    %v300 = vsel %vm217, %v105, 0
    %v303 = vsel %vm217, %v107, 0
    %v306 = vsel %vm217, %v109, 0
    %v309 = vsel %vm217, %v111, 0
    %v312 = vsel %vm217, %v113, 0
    %v315 = vsel %vm217, %v115, 0
    %v318 = vsel %vm217, %v117, 0
    %v321 = vsel %vm217, %v119, 0
    %v324 = vsel %vm217, %v121, 0
    %v327 = vsel %vm217, %v123, 0
    %v330 = vsel %vm217, %v125, 0
    %v333 = vsel %vm217, %v127, 0
    %v336 = vsel %vm217, %v129, 0
    %v339 = vsel %vm217, %v131, 0
    %v342 = vsel %vm217, %v133, 0
    %v345 = vsel %vm217, %v135, 0
    %v348 = vsel %vm217, %v137, 0
    %v351 = vsel %vm217, %v139, 0
    %v354 = vsel %vm217, %v141, 0
    %356 = vmatprep.subr.mxu0 %v182
    %357 = vmatpush1.msra.mxu0 %v181
    %358 = vmatprep.subr.mxu0 %v184
    %359 = vmatpush1.msra.mxu0 %v183
    %360 = vmatprep.subr.mxu0 %v186
    %361 = vmatpush1.msra.mxu0 %v185
    %362 = vmatprep.subr.mxu0 %v188
    %363 = vmatpush1.msra.mxu0 %v187
    %364 = vmatprep.subr.mxu0 %v190
    %365 = vmatpush1.msra.mxu0 %v189
    %366 = vmatprep.subr.mxu0 %v192
    %367 = vmatpush1.msra.mxu0 %v191
    %368 = vmatprep.subr.mxu0 %v194
    %369 = vmatpush1.msra.mxu0 %v193
    %370 = vmatprep.subr.mxu0 %v196
    %371 = vmatpush1.msra.mxu0 %v195
    %372 = vmatprep.subr.mxu0 %v198
    %373 = vmatpush1.msra.mxu0 %v197
    %374 = vmatprep.subr.mxu0 %v200
    %375 = vmatpush1.msra.mxu0 %v199
    %376 = vmatprep.subr.mxu0 %v202
    %377 = vmatpush1.msra.mxu0 %v201
    %378 = vmatprep.subr.mxu0 %v204
    %379 = vmatpush1.msra.mxu0 %v203
    %380 = vmatprep.subr.mxu0 %v206
    %381 = vmatpush1.msra.mxu0 %v205
    %382 = vmatprep.subr.mxu0 %v208
    %383 = vmatpush1.msra.mxu0 %v207
    %384 = vmatprep.subr.mxu0 %v210
    %385 = vmatpush1.msra.mxu0 %v209
    %386 = vmatprep.subr.mxu0 %v212
    %387 = vmatpush1.msra.mxu0 %v211
    %388 = vmatprep.subr.mxu0 %v214
    %389 = vmatpush1.msra.mxu0 %v213
    %390 = vmatprep.subr.mxu0 %v216
    %391 = vmatpush1.msra.mxu0 %v215
    %392 = vmatprep.subr.mxu0 0.0
    %393 = vmatpush1.msra.mxu0 0.0
    %394 = vmatprep.subr.mxu0 0.0
    %395 = vmatpush1.msra.mxu0 0.0
    %396 = vmatprep.subr.mxu0 0.0
    %397 = vmatpush1.msra.mxu0 0.0
    %398 = vmatprep.subr.mxu0 0.0
    %399 = vmatpush1.msra.mxu0 0.0
    %400 = vmatprep.subr.mxu0 0.0
    %401 = vmatpush1.msra.mxu0 0.0
    %402 = vmatprep.subr.mxu0 0.0
    %403 = vmatpush1.msra.mxu0 0.0
    %404 = vmatprep.subr.mxu0 0.0
    %405 = vmatpush1.msra.mxu0 0.0
    %406 = vmatprep.subr.mxu0 0.0
    %407 = vmatpush1.msra.mxu0 0.0
    %408 = vmatprep.subr.mxu0 0.0
    %409 = vmatpush1.msra.mxu0 0.0
    %410 = vmatprep.subr.mxu0 0.0
    %411 = vmatpush1.msra.mxu0 0.0
    %412 = vmatprep.subr.mxu0 0.0
    %413 = vmatpush1.msra.mxu0 0.0
    %414 = vmatprep.subr.mxu0 0.0
    %415 = vmatpush1.msra.mxu0 0.0
    %416 = vmatprep.subr.mxu0 0.0
    %417 = vmatpush1.msra.mxu0 0.0
    %418 = vmatprep.subr.mxu0 0.0
    %419 = vmatpush1.msra.mxu0 0.0
    %420 = vmatprep.mubr.f32.mxu0 %v219
    %421 = vmatmul.mubr.f32.gmra.mrb[0].mxu0 %v50
    %v422 = vpop.f32.mrb[0].mxu0
    %v423 = vadd.f32 0.0, %v422
    %v424 = vpop.f32.mrb[0].mxu0
    %v425 = vadd.f32 0.0, %v424
    %426 = vmatprep.mubr.f32.mxu0 %v222
    %427 = vmatmul.mubr.f32.gmra.mrb[0].mxu0 %v52
    %v428 = vpop.f32.mrb[0].mxu0
    %v429 = vadd.f32 0.0, %v428
    %v430 = vpop.f32.mrb[0].mxu0
    %v431 = vadd.f32 0.0, %v430
    %432 = vmatprep.mubr.f32.mxu0 %v225
    %433 = vmatmul.mubr.f32.gmra.mrb[0].mxu0 %v54
    %v434 = vpop.f32.mrb[0].mxu0
    %v435 = vadd.f32 0.0, %v434
    %v436 = vpop.f32.mrb[0].mxu0
    %v437 = vadd.f32 0.0, %v436
    %438 = vmatprep.mubr.f32.mxu0 %v228
    %439 = vmatmul.mubr.f32.gmra.mrb[0].mxu0 %v56
    %v440 = vpop.f32.mrb[0].mxu0
    %v441 = vadd.f32 0.0, %v440
    %v442 = vpop.f32.mrb[0].mxu0
    %v443 = vadd.f32 0.0, %v442
    %444 = vmatprep.mubr.f32.mxu0 %v231
    %445 = vmatmul.mubr.f32.gmra.mrb[0].mxu0 %v58
    %v446 = vpop.f32.mrb[0].mxu0
    %v447 = vadd.f32 0.0, %v446
    %v448 = vpop.f32.mrb[0].mxu0
    %v449 = vadd.f32 0.0, %v448
    %450 = vmatprep.mubr.f32.mxu0 %v234
    %451 = vmatmul.mubr.f32.gmra.mrb[0].mxu0 %v60
    %v452 = vpop.f32.mrb[0].mxu0
    %v453 = vadd.f32 0.0, %v452
    %v454 = vpop.f32.mrb[0].mxu0
    %v455 = vadd.f32 0.0, %v454
    %456 = vmatprep.mubr.f32.mxu0 %v237
    %457 = vmatmul.mubr.f32.gmra.mrb[0].mxu0 %v62
    %v458 = vpop.f32.mrb[0].mxu0
    %v459 = vadd.f32 0.0, %v458
    %v460 = vpop.f32.mrb[0].mxu0
    %v461 = vadd.f32 0.0, %v460
    %462 = vmatprep.mubr.f32.mxu0 %v240
    %463 = vmatmul.mubr.f32.gmra.mrb[0].mxu0 %v64
    %v464 = vpop.f32.mrb[0].mxu0
    %v465 = vadd.f32 0.0, %v464
    %v466 = vpop.f32.mrb[0].mxu0
    %v467 = vadd.f32 0.0, %v466
    %468 = vmatprep.mubr.f32.mxu0 %v243
    %469 = vmatmul.mubr.f32.gmra.mrb[0].mxu0 %v66
    %v470 = vpop.f32.mrb[0].mxu0
    %v471 = vadd.f32 0.0, %v470
    %v472 = vpop.f32.mrb[0].mxu0
    %v473 = vadd.f32 0.0, %v472
    %474 = vmatprep.mubr.f32.mxu0 %v246
    %475 = vmatmul.mubr.f32.gmra.mrb[0].mxu0 %v68
    %v476 = vpop.f32.mrb[0].mxu0
    %v477 = vadd.f32 0.0, %v476
    %v478 = vpop.f32.mrb[0].mxu0
    %v479 = vadd.f32 0.0, %v478
    %480 = vmatprep.mubr.f32.mxu0 %v249
    %481 = vmatmul.mubr.f32.gmra.mrb[0].mxu0 %v70
    %v482 = vpop.f32.mrb[0].mxu0
    %v483 = vadd.f32 0.0, %v482
    %v484 = vpop.f32.mrb[0].mxu0
    %v485 = vadd.f32 0.0, %v484
    %486 = vmatprep.mubr.f32.mxu0 %v252
    %487 = vmatmul.mubr.f32.gmra.mrb[0].mxu0 %v72
    %v488 = vpop.f32.mrb[0].mxu0
    %v489 = vadd.f32 0.0, %v488
    %v490 = vpop.f32.mrb[0].mxu0
    %v491 = vadd.f32 0.0, %v490
    %492 = vmatprep.mubr.f32.mxu0 %v255
    %493 = vmatmul.mubr.f32.gmra.mrb[0].mxu0 %v74
    %v494 = vpop.f32.mrb[0].mxu0
    %v495 = vadd.f32 0.0, %v494
    %v496 = vpop.f32.mrb[0].mxu0
    %v497 = vadd.f32 0.0, %v496
    %498 = vmatprep.mubr.f32.mxu0 %v258
    %499 = vmatmul.mubr.f32.gmra.mrb[0].mxu0 %v76
    %v500 = vpop.f32.mrb[0].mxu0
    %v501 = vadd.f32 0.0, %v500
    %v502 = vpop.f32.mrb[0].mxu0
    %v503 = vadd.f32 0.0, %v502
    %504 = vmatprep.mubr.f32.mxu0 %v261
    %505 = vmatmul.mubr.f32.gmra.mrb[0].mxu0 %v78
    %v506 = vpop.f32.mrb[0].mxu0
    %v507 = vadd.f32 0.0, %v506
    %v508 = vpop.f32.mrb[0].mxu0
    %v509 = vadd.f32 0.0, %v508
    %510 = vmatprep.mubr.f32.mxu0 %v264
    %511 = vmatmul.mubr.f32.gmra.mrb[0].mxu0 %v80
    %v512 = vpop.f32.mrb[0].mxu0
    %v513 = vadd.f32 0.0, %v512
    %v514 = vpop.f32.mrb[0].mxu0
    %v515 = vadd.f32 0.0, %v514
    %516 = vmatprep.mubr.f32.mxu0 %v267
    %517 = vmatmul.mubr.f32.gmra.mrb[0].mxu0 %v82
    %v518 = vpop.f32.mrb[0].mxu0
    %v519 = vadd.f32 0.0, %v518
    %v520 = vpop.f32.mrb[0].mxu0
    %v521 = vadd.f32 0.0, %v520
    %522 = vmatprep.mubr.f32.mxu0 %v270
    %523 = vmatmul.mubr.f32.gmra.mrb[0].mxu0 %v84
    %v524 = vpop.f32.mrb[0].mxu0
    %v525 = vadd.f32 0.0, %v524
    %v526 = vpop.f32.mrb[0].mxu0
    %v527 = vadd.f32 0.0, %v526
    %528 = vmatprep.mubr.f32.mxu0 %v273
    %529 = vmatmul.mubr.f32.gmra.mrb[0].mxu0 %v86
    %v530 = vpop.f32.mrb[0].mxu0
    %v531 = vadd.f32 0.0, %v530
    %v532 = vpop.f32.mrb[0].mxu0
    %v533 = vadd.f32 0.0, %v532
    %534 = vmatprep.mubr.f32.mxu0 %v276
    %535 = vmatmul.mubr.f32.gmra.mrb[0].mxu0 %v88
    %v536 = vpop.f32.mrb[0].mxu0
    %v537 = vadd.f32 0.0, %v536
    %v538 = vpop.f32.mrb[0].mxu0
    %v539 = vadd.f32 0.0, %v538
    %540 = vmatprep.mubr.f32.mxu0 %v279
    %541 = vmatmul.mubr.f32.gmra.mrb[0].mxu0 %v90
    %v542 = vpop.f32.mrb[0].mxu0
    %v543 = vadd.f32 0.0, %v542
    %v544 = vpop.f32.mrb[0].mxu0
    %v545 = vadd.f32 0.0, %v544
    %546 = vmatprep.mubr.f32.mxu0 %v282
    %547 = vmatmul.mubr.f32.gmra.mrb[0].mxu0 %v92
    %v548 = vpop.f32.mrb[0].mxu0
    %v549 = vadd.f32 0.0, %v548
    %v550 = vpop.f32.mrb[0].mxu0
    %v551 = vadd.f32 0.0, %v550
    %552 = vmatprep.mubr.f32.mxu0 %v285
    %553 = vmatmul.mubr.f32.gmra.mrb[0].mxu0 %v94
    %v554 = vpop.f32.mrb[0].mxu0
    %v555 = vadd.f32 0.0, %v554
    %v556 = vpop.f32.mrb[0].mxu0
    %v557 = vadd.f32 0.0, %v556
    %558 = vmatprep.mubr.f32.mxu0 %v288
    %559 = vmatmul.mubr.f32.gmra.mrb[0].mxu0 %v96
    %v560 = vpop.f32.mrb[0].mxu0
    %v561 = vadd.f32 0.0, %v560
    %v562 = vpop.f32.mrb[0].mxu0
    %v563 = vadd.f32 0.0, %v562
    %564 = vmatprep.mubr.f32.mxu0 %v291
    %565 = vmatmul.mubr.f32.gmra.mrb[0].mxu0 %v98
    %v566 = vpop.f32.mrb[0].mxu0
    %v567 = vadd.f32 0.0, %v566
    %v568 = vpop.f32.mrb[0].mxu0
    %v569 = vadd.f32 0.0, %v568
    %570 = vmatprep.mubr.f32.mxu0 %v294
    %571 = vmatmul.mubr.f32.gmra.mrb[0].mxu0 %v100
    %v572 = vpop.f32.mrb[0].mxu0
    %v573 = vadd.f32 0.0, %v572
    %v574 = vpop.f32.mrb[0].mxu0
    %v575 = vadd.f32 0.0, %v574
    %576 = vmatprep.mubr.f32.mxu0 %v297
    %577 = vmatmul.mubr.f32.gmra.mrb[0].mxu0 %v102
    %v578 = vpop.f32.mrb[0].mxu0
    %v579 = vadd.f32 0.0, %v578
    %v580 = vpop.f32.mrb[0].mxu0
    %v581 = vadd.f32 0.0, %v580
    %582 = vmatprep.mubr.f32.mxu0 %v300
    %583 = vmatmul.mubr.f32.gmra.mrb[0].mxu0 %v104
    %v584 = vpop.f32.mrb[0].mxu0
    %v585 = vadd.f32 0.0, %v584
    %v586 = vpop.f32.mrb[0].mxu0
    %v587 = vadd.f32 0.0, %v586
    %588 = vmatprep.mubr.f32.mxu0 %v303
    %589 = vmatmul.mubr.f32.gmra.mrb[0].mxu0 %v106
    %v590 = vpop.f32.mrb[0].mxu0
    %v591 = vadd.f32 0.0, %v590
    %v592 = vpop.f32.mrb[0].mxu0
    %v593 = vadd.f32 0.0, %v592
    %594 = vmatprep.mubr.f32.mxu0 %v306
    %595 = vmatmul.mubr.f32.gmra.mrb[0].mxu0 %v108
    %v596 = vpop.f32.mrb[0].mxu0
    %v597 = vadd.f32 0.0, %v596
    %v598 = vpop.f32.mrb[0].mxu0
    %v599 = vadd.f32 0.0, %v598
    %600 = vmatprep.mubr.f32.mxu0 %v309
    %601 = vmatmul.mubr.f32.gmra.mrb[0].mxu0 %v110
    %v602 = vpop.f32.mrb[0].mxu0
    %v603 = vadd.f32 0.0, %v602
    %v604 = vpop.f32.mrb[0].mxu0
    %v605 = vadd.f32 0.0, %v604
    %606 = vmatprep.mubr.f32.mxu0 %v312
    %607 = vmatmul.mubr.f32.gmra.mrb[0].mxu0 %v112
    %v608 = vpop.f32.mrb[0].mxu0
    %v609 = vadd.f32 0.0, %v608
    %v610 = vpop.f32.mrb[0].mxu0
    %v611 = vadd.f32 0.0, %v610
    %612 = vmatprep.mubr.f32.mxu0 %v315
    %613 = vmatmul.mubr.f32.gmra.mrb[0].mxu0 %v114
    %v614 = vpop.f32.mrb[0].mxu0
    %v615 = vadd.f32 0.0, %v614
    %v616 = vpop.f32.mrb[0].mxu0
    %v617 = vadd.f32 0.0, %v616
    %618 = vmatprep.mubr.f32.mxu0 %v318
    %619 = vmatmul.mubr.f32.gmra.mrb[0].mxu0 %v116
    %v620 = vpop.f32.mrb[0].mxu0
    %v621 = vadd.f32 0.0, %v620
    %v622 = vpop.f32.mrb[0].mxu0
    %v623 = vadd.f32 0.0, %v622
    %624 = vmatprep.mubr.f32.mxu0 %v321
    %625 = vmatmul.mubr.f32.gmra.mrb[0].mxu0 %v118
    %v626 = vpop.f32.mrb[0].mxu0
    %v627 = vadd.f32 0.0, %v626
    %v628 = vpop.f32.mrb[0].mxu0
    %v629 = vadd.f32 0.0, %v628
    %630 = vmatprep.mubr.f32.mxu0 %v324
    %631 = vmatmul.mubr.f32.gmra.mrb[0].mxu0 %v120
    %v632 = vpop.f32.mrb[0].mxu0
    %v633 = vadd.f32 0.0, %v632
    %v634 = vpop.f32.mrb[0].mxu0
    %v635 = vadd.f32 0.0, %v634
    %636 = vmatprep.mubr.f32.mxu0 %v327
    %637 = vmatmul.mubr.f32.gmra.mrb[0].mxu0 %v122
    %v638 = vpop.f32.mrb[0].mxu0
    %v639 = vadd.f32 0.0, %v638
    %v640 = vpop.f32.mrb[0].mxu0
    %v641 = vadd.f32 0.0, %v640
    %642 = vmatprep.mubr.f32.mxu0 %v330
    %643 = vmatmul.mubr.f32.gmra.mrb[0].mxu0 %v124
    %v644 = vpop.f32.mrb[0].mxu0
    %v645 = vadd.f32 0.0, %v644
    %v646 = vpop.f32.mrb[0].mxu0
    %v647 = vadd.f32 0.0, %v646
    %648 = vmatprep.mubr.f32.mxu0 %v333
    %649 = vmatmul.mubr.f32.gmra.mrb[0].mxu0 %v126
    %v650 = vpop.f32.mrb[0].mxu0
    %v651 = vadd.f32 0.0, %v650
    %v652 = vpop.f32.mrb[0].mxu0
    %v653 = vadd.f32 0.0, %v652
    %654 = vmatprep.mubr.f32.mxu0 %v336
    %655 = vmatmul.mubr.f32.gmra.mrb[0].mxu0 %v128
    %v656 = vpop.f32.mrb[0].mxu0
    %v657 = vadd.f32 0.0, %v656
    %v658 = vpop.f32.mrb[0].mxu0
    %v659 = vadd.f32 0.0, %v658
    %660 = vmatprep.mubr.f32.mxu0 %v339
    %661 = vmatmul.mubr.f32.gmra.mrb[0].mxu0 %v130
    %v662 = vpop.f32.mrb[0].mxu0
    %v663 = vadd.f32 0.0, %v662
    %v664 = vpop.f32.mrb[0].mxu0
    %v665 = vadd.f32 0.0, %v664
    %666 = vmatprep.mubr.f32.mxu0 %v342
    %667 = vmatmul.mubr.f32.gmra.mrb[0].mxu0 %v132
    %v668 = vpop.f32.mrb[0].mxu0
    %v669 = vadd.f32 0.0, %v668
    %v670 = vpop.f32.mrb[0].mxu0
    %v671 = vadd.f32 0.0, %v670
    %672 = vmatprep.mubr.f32.mxu0 %v345
    %673 = vmatmul.mubr.f32.gmra.mrb[0].mxu0 %v134
    %v674 = vpop.f32.mrb[0].mxu0
    %v675 = vadd.f32 0.0, %v674
    %v676 = vpop.f32.mrb[0].mxu0
    %v677 = vadd.f32 0.0, %v676
    %678 = vmatprep.mubr.f32.mxu0 %v348
    %679 = vmatmul.mubr.f32.gmra.mrb[0].mxu0 %v136
    %v680 = vpop.f32.mrb[0].mxu0
    %v681 = vadd.f32 0.0, %v680
    %v682 = vpop.f32.mrb[0].mxu0
    %v683 = vadd.f32 0.0, %v682
    %684 = vmatprep.mubr.f32.mxu0 %v351
    %685 = vmatmul.mubr.f32.gmra.mrb[0].mxu0 %v138
    %v686 = vpop.f32.mrb[0].mxu0
    %v687 = vadd.f32 0.0, %v686
    %v688 = vpop.f32.mrb[0].mxu0
    %v689 = vadd.f32 0.0, %v688
    %690 = vmatprep.mubr.f32.mxu0 %v354
    %691 = vmatmul.mubr.f32.gmra.mrb[0].mxu0 %v140
    %v692 = vpop.f32.mrb[0].mxu0
    %v693 = vadd.f32 0.0, %v692
    %v694 = vpop.f32.mrb[0].mxu0
    %v695 = vadd.f32 0.0, %v694
    %696 = vdwg.mxu0
    %v698 = vsel %vm217, %v49, 0
    %700 = vmatprep.subr.mxu0 %v145
    %701 = vmatpush1.msra.mxu0 %v144
    %702 = vmatprep.subr.mxu0 %v147
    %703 = vmatpush1.msra.mxu0 %v146
    %704 = vmatprep.subr.mxu0 %v149
    %705 = vmatpush1.msra.mxu0 %v148
    %706 = vmatprep.subr.mxu0 %v151
    %707 = vmatpush1.msra.mxu0 %v150
    %708 = vmatprep.subr.mxu0 %v153
    %709 = vmatpush1.msra.mxu0 %v152
    %710 = vmatprep.subr.mxu0 %v155
    %711 = vmatpush1.msra.mxu0 %v154
    %712 = vmatprep.subr.mxu0 %v157
    %713 = vmatpush1.msra.mxu0 %v156
    %714 = vmatprep.subr.mxu0 %v159
    %715 = vmatpush1.msra.mxu0 %v158
    %716 = vmatprep.subr.mxu0 %v161
    %717 = vmatpush1.msra.mxu0 %v160
    %718 = vmatprep.subr.mxu0 %v163
    %719 = vmatpush1.msra.mxu0 %v162
    %720 = vmatprep.subr.mxu0 %v165
    %721 = vmatpush1.msra.mxu0 %v164
    %722 = vmatprep.subr.mxu0 %v167
    %723 = vmatpush1.msra.mxu0 %v166
    %724 = vmatprep.subr.mxu0 %v169
    %725 = vmatpush1.msra.mxu0 %v168
    %726 = vmatprep.subr.mxu0 %v171
    %727 = vmatpush1.msra.mxu0 %v170
    %728 = vmatprep.subr.mxu0 %v173
    %729 = vmatpush1.msra.mxu0 %v172
    %730 = vmatprep.subr.mxu0 %v175
    %731 = vmatpush1.msra.mxu0 %v174
    %732 = vmatprep.subr.mxu0 %v177
    %733 = vmatpush1.msra.mxu0 %v176
    %734 = vmatprep.subr.mxu0 %v179
    %735 = vmatpush1.msra.mxu0 %v178
    %736 = vmatprep.subr.mxu0 0.0
    %737 = vmatpush1.msra.mxu0 0.0
    %738 = vmatprep.subr.mxu0 0.0
    %739 = vmatpush1.msra.mxu0 0.0
    %740 = vmatprep.subr.mxu0 0.0
    %741 = vmatpush1.msra.mxu0 0.0
    %742 = vmatprep.subr.mxu0 0.0
    %743 = vmatpush1.msra.mxu0 0.0
    %744 = vmatprep.subr.mxu0 0.0
    %745 = vmatpush1.msra.mxu0 0.0
    %746 = vmatprep.subr.mxu0 0.0
    %747 = vmatpush1.msra.mxu0 0.0
    %748 = vmatprep.subr.mxu0 0.0
    %749 = vmatpush1.msra.mxu0 0.0
    %750 = vmatprep.subr.mxu0 0.0
    %751 = vmatpush1.msra.mxu0 0.0
    %752 = vmatprep.subr.mxu0 0.0
    %753 = vmatpush1.msra.mxu0 0.0
    %754 = vmatprep.subr.mxu0 0.0
    %755 = vmatpush1.msra.mxu0 0.0
    %756 = vmatprep.subr.mxu0 0.0
    %757 = vmatpush1.msra.mxu0 0.0
    %758 = vmatprep.subr.mxu0 0.0
    %759 = vmatpush1.msra.mxu0 0.0
    %760 = vmatprep.subr.mxu0 0.0
    %761 = vmatpush1.msra.mxu0 0.0
    %762 = vmatprep.subr.mxu0 0.0
    %763 = vmatpush1.msra.mxu0 0.0
    %764 = vmatprep.mubr.f32.mxu0 %v698
    %765 = vmatmul.mubr.f32.gmra.mrb[0].mxu0 %v48
    %v766 = vpop.f32.mrb[0].mxu0
    %v767 = vadd.f32 %v423, %v766
    %v768 = vpop.f32.mrb[0].mxu0
    %v769 = vadd.f32 %v425, %v768
    %770 = vmatprep.mubr.f32.mxu0 %v219
    %771 = vmatmul.mubr.f32.gmra.mrb[0].mxu0 %v50
    %v772 = vpop.f32.mrb[0].mxu0
    %v773 = vadd.f32 %v429, %v772
    %v774 = vpop.f32.mrb[0].mxu0
    %v775 = vadd.f32 %v431, %v774
    %776 = vmatprep.mubr.f32.mxu0 %v222
    %777 = vmatmul.mubr.f32.gmra.mrb[0].mxu0 %v52
    %v778 = vpop.f32.mrb[0].mxu0
    %v779 = vadd.f32 %v435, %v778
    %v780 = vpop.f32.mrb[0].mxu0
    %v781 = vadd.f32 %v437, %v780
    %782 = vmatprep.mubr.f32.mxu0 %v225
    %783 = vmatmul.mubr.f32.gmra.mrb[0].mxu0 %v54
    %v784 = vpop.f32.mrb[0].mxu0
    %v785 = vadd.f32 %v441, %v784
    %v786 = vpop.f32.mrb[0].mxu0
    %v787 = vadd.f32 %v443, %v786
    %788 = vmatprep.mubr.f32.mxu0 %v228
    %789 = vmatmul.mubr.f32.gmra.mrb[0].mxu0 %v56
    %v790 = vpop.f32.mrb[0].mxu0
    %v791 = vadd.f32 %v447, %v790
    %v792 = vpop.f32.mrb[0].mxu0
    %v793 = vadd.f32 %v449, %v792
    %794 = vmatprep.mubr.f32.mxu0 %v231
    %795 = vmatmul.mubr.f32.gmra.mrb[0].mxu0 %v58
    %v796 = vpop.f32.mrb[0].mxu0
    %v797 = vadd.f32 %v453, %v796
    %v798 = vpop.f32.mrb[0].mxu0
    %v799 = vadd.f32 %v455, %v798
    %800 = vmatprep.mubr.f32.mxu0 %v234
    %801 = vmatmul.mubr.f32.gmra.mrb[0].mxu0 %v60
    %v802 = vpop.f32.mrb[0].mxu0
    %v803 = vadd.f32 %v459, %v802
    %v804 = vpop.f32.mrb[0].mxu0
    %v805 = vadd.f32 %v461, %v804
    %806 = vmatprep.mubr.f32.mxu0 %v237
    %807 = vmatmul.mubr.f32.gmra.mrb[0].mxu0 %v62
    %v808 = vpop.f32.mrb[0].mxu0
    %v809 = vadd.f32 %v465, %v808
    %v810 = vpop.f32.mrb[0].mxu0
    %v811 = vadd.f32 %v467, %v810
    %812 = vmatprep.mubr.f32.mxu0 %v240
    %813 = vmatmul.mubr.f32.gmra.mrb[0].mxu0 %v64
    %v814 = vpop.f32.mrb[0].mxu0
    %v815 = vadd.f32 %v471, %v814
    %v816 = vpop.f32.mrb[0].mxu0
    %v817 = vadd.f32 %v473, %v816
    %818 = vmatprep.mubr.f32.mxu0 %v243
    %819 = vmatmul.mubr.f32.gmra.mrb[0].mxu0 %v66
    %v820 = vpop.f32.mrb[0].mxu0
    %v821 = vadd.f32 %v477, %v820
    %v822 = vpop.f32.mrb[0].mxu0
    %v823 = vadd.f32 %v479, %v822
    %824 = vmatprep.mubr.f32.mxu0 %v246
    %825 = vmatmul.mubr.f32.gmra.mrb[0].mxu0 %v68
    %v826 = vpop.f32.mrb[0].mxu0
    %v827 = vadd.f32 %v483, %v826
    %v828 = vpop.f32.mrb[0].mxu0
    %v829 = vadd.f32 %v485, %v828
    %830 = vmatprep.mubr.f32.mxu0 %v249
    %831 = vmatmul.mubr.f32.gmra.mrb[0].mxu0 %v70
    %v832 = vpop.f32.mrb[0].mxu0
    %v833 = vadd.f32 %v489, %v832
    %v834 = vpop.f32.mrb[0].mxu0
    %v835 = vadd.f32 %v491, %v834
    %836 = vmatprep.mubr.f32.mxu0 %v252
    %837 = vmatmul.mubr.f32.gmra.mrb[0].mxu0 %v72
    %v838 = vpop.f32.mrb[0].mxu0
    %v839 = vadd.f32 %v495, %v838
    %v840 = vpop.f32.mrb[0].mxu0
    %v841 = vadd.f32 %v497, %v840
    %842 = vmatprep.mubr.f32.mxu0 %v255
    %843 = vmatmul.mubr.f32.gmra.mrb[0].mxu0 %v74
    %v844 = vpop.f32.mrb[0].mxu0
    %v845 = vadd.f32 %v501, %v844
    %v846 = vpop.f32.mrb[0].mxu0
    %v847 = vadd.f32 %v503, %v846
    %848 = vmatprep.mubr.f32.mxu0 %v258
    %849 = vmatmul.mubr.f32.gmra.mrb[0].mxu0 %v76
    %v850 = vpop.f32.mrb[0].mxu0
    %v851 = vadd.f32 %v507, %v850
    %v852 = vpop.f32.mrb[0].mxu0
    %v853 = vadd.f32 %v509, %v852
    %854 = vmatprep.mubr.f32.mxu0 %v261
    %855 = vmatmul.mubr.f32.gmra.mrb[0].mxu0 %v78
    %v856 = vpop.f32.mrb[0].mxu0
    %v857 = vadd.f32 %v513, %v856
    %v858 = vpop.f32.mrb[0].mxu0
    %v859 = vadd.f32 %v515, %v858
    %860 = vmatprep.mubr.f32.mxu0 %v264
    %861 = vmatmul.mubr.f32.gmra.mrb[0].mxu0 %v80
    %v862 = vpop.f32.mrb[0].mxu0
    %v863 = vadd.f32 %v519, %v862
    %v864 = vpop.f32.mrb[0].mxu0
    %v865 = vadd.f32 %v521, %v864
    %866 = vmatprep.mubr.f32.mxu0 %v267
    %867 = vmatmul.mubr.f32.gmra.mrb[0].mxu0 %v82
    %v868 = vpop.f32.mrb[0].mxu0
    %v869 = vadd.f32 %v525, %v868
    %v870 = vpop.f32.mrb[0].mxu0
    %v871 = vadd.f32 %v527, %v870
    %872 = vmatprep.mubr.f32.mxu0 %v270
    %873 = vmatmul.mubr.f32.gmra.mrb[0].mxu0 %v84
    %v874 = vpop.f32.mrb[0].mxu0
    %v875 = vadd.f32 %v531, %v874
    %v876 = vpop.f32.mrb[0].mxu0
    %v877 = vadd.f32 %v533, %v876
    %878 = vmatprep.mubr.f32.mxu0 %v273
    %879 = vmatmul.mubr.f32.gmra.mrb[0].mxu0 %v86
    %v880 = vpop.f32.mrb[0].mxu0
    %v881 = vadd.f32 %v537, %v880
    %v882 = vpop.f32.mrb[0].mxu0
    %v883 = vadd.f32 %v539, %v882
    %884 = vmatprep.mubr.f32.mxu0 %v276
    %885 = vmatmul.mubr.f32.gmra.mrb[0].mxu0 %v88
    %v886 = vpop.f32.mrb[0].mxu0
    %v887 = vadd.f32 %v543, %v886
    %v888 = vpop.f32.mrb[0].mxu0
    %v889 = vadd.f32 %v545, %v888
    %890 = vmatprep.mubr.f32.mxu0 %v279
    %891 = vmatmul.mubr.f32.gmra.mrb[0].mxu0 %v90
    %v892 = vpop.f32.mrb[0].mxu0
    %v893 = vadd.f32 %v549, %v892
    %v894 = vpop.f32.mrb[0].mxu0
    %v895 = vadd.f32 %v551, %v894
    %896 = vmatprep.mubr.f32.mxu0 %v282
    %897 = vmatmul.mubr.f32.gmra.mrb[0].mxu0 %v92
    %v898 = vpop.f32.mrb[0].mxu0
    %v899 = vadd.f32 %v555, %v898
    %v900 = vpop.f32.mrb[0].mxu0
    %v901 = vadd.f32 %v557, %v900
    %902 = vmatprep.mubr.f32.mxu0 %v285
    %903 = vmatmul.mubr.f32.gmra.mrb[0].mxu0 %v94
    %v904 = vpop.f32.mrb[0].mxu0
    %v905 = vadd.f32 %v561, %v904
    %v906 = vpop.f32.mrb[0].mxu0
    %v907 = vadd.f32 %v563, %v906
    %908 = vmatprep.mubr.f32.mxu0 %v288
    %909 = vmatmul.mubr.f32.gmra.mrb[0].mxu0 %v96
    %v910 = vpop.f32.mrb[0].mxu0
    %v911 = vadd.f32 %v567, %v910
    %v912 = vpop.f32.mrb[0].mxu0
    %v913 = vadd.f32 %v569, %v912
    %914 = vmatprep.mubr.f32.mxu0 %v291
    %915 = vmatmul.mubr.f32.gmra.mrb[0].mxu0 %v98
    %v916 = vpop.f32.mrb[0].mxu0
    %v917 = vadd.f32 %v573, %v916
    %v918 = vpop.f32.mrb[0].mxu0
    %v919 = vadd.f32 %v575, %v918
    %920 = vmatprep.mubr.f32.mxu0 %v294
    %921 = vmatmul.mubr.f32.gmra.mrb[0].mxu0 %v100
    %v922 = vpop.f32.mrb[0].mxu0
    %v923 = vadd.f32 %v579, %v922
    %v924 = vpop.f32.mrb[0].mxu0
    %v925 = vadd.f32 %v581, %v924
    %926 = vmatprep.mubr.f32.mxu0 %v297
    %927 = vmatmul.mubr.f32.gmra.mrb[0].mxu0 %v102
    %v928 = vpop.f32.mrb[0].mxu0
    %v929 = vadd.f32 %v585, %v928
    %v930 = vpop.f32.mrb[0].mxu0
    %v931 = vadd.f32 %v587, %v930
    %932 = vmatprep.mubr.f32.mxu0 %v300
    %933 = vmatmul.mubr.f32.gmra.mrb[0].mxu0 %v104
    %v934 = vpop.f32.mrb[0].mxu0
    %v935 = vadd.f32 %v591, %v934
    %v936 = vpop.f32.mrb[0].mxu0
    %v937 = vadd.f32 %v593, %v936
    %938 = vmatprep.mubr.f32.mxu0 %v303
    %939 = vmatmul.mubr.f32.gmra.mrb[0].mxu0 %v106
    %v940 = vpop.f32.mrb[0].mxu0
    %v941 = vadd.f32 %v597, %v940
    %v942 = vpop.f32.mrb[0].mxu0
    %v943 = vadd.f32 %v599, %v942
    %944 = vmatprep.mubr.f32.mxu0 %v306
    %945 = vmatmul.mubr.f32.gmra.mrb[0].mxu0 %v108
    %v946 = vpop.f32.mrb[0].mxu0
    %v947 = vadd.f32 %v603, %v946
    %v948 = vpop.f32.mrb[0].mxu0
    %v949 = vadd.f32 %v605, %v948
    %950 = vmatprep.mubr.f32.mxu0 %v309
    %951 = vmatmul.mubr.f32.gmra.mrb[0].mxu0 %v110
    %v952 = vpop.f32.mrb[0].mxu0
    %v953 = vadd.f32 %v609, %v952
    %v954 = vpop.f32.mrb[0].mxu0
    %v955 = vadd.f32 %v611, %v954
    %956 = vmatprep.mubr.f32.mxu0 %v312
    %957 = vmatmul.mubr.f32.gmra.mrb[0].mxu0 %v112
    %v958 = vpop.f32.mrb[0].mxu0
    %v959 = vadd.f32 %v615, %v958
    %v960 = vpop.f32.mrb[0].mxu0
    %v961 = vadd.f32 %v617, %v960
    %962 = vmatprep.mubr.f32.mxu0 %v315
    %963 = vmatmul.mubr.f32.gmra.mrb[0].mxu0 %v114
    %v964 = vpop.f32.mrb[0].mxu0
    %v965 = vadd.f32 %v621, %v964
    %v966 = vpop.f32.mrb[0].mxu0
    %v967 = vadd.f32 %v623, %v966
    %968 = vmatprep.mubr.f32.mxu0 %v318
    %969 = vmatmul.mubr.f32.gmra.mrb[0].mxu0 %v116
    %v970 = vpop.f32.mrb[0].mxu0
    %v971 = vadd.f32 %v627, %v970
    %v972 = vpop.f32.mrb[0].mxu0
    %v973 = vadd.f32 %v629, %v972
    %974 = vmatprep.mubr.f32.mxu0 %v321
    %975 = vmatmul.mubr.f32.gmra.mrb[0].mxu0 %v118
    %v976 = vpop.f32.mrb[0].mxu0
    %v977 = vadd.f32 %v633, %v976
    %v978 = vpop.f32.mrb[0].mxu0
    %v979 = vadd.f32 %v635, %v978
    %980 = vmatprep.mubr.f32.mxu0 %v324
    %981 = vmatmul.mubr.f32.gmra.mrb[0].mxu0 %v120
    %v982 = vpop.f32.mrb[0].mxu0
    %v983 = vadd.f32 %v639, %v982
    %v984 = vpop.f32.mrb[0].mxu0
    %v985 = vadd.f32 %v641, %v984
    %986 = vmatprep.mubr.f32.mxu0 %v327
    %987 = vmatmul.mubr.f32.gmra.mrb[0].mxu0 %v122
    %v988 = vpop.f32.mrb[0].mxu0
    %v989 = vadd.f32 %v645, %v988
    %v990 = vpop.f32.mrb[0].mxu0
    %v991 = vadd.f32 %v647, %v990
    %992 = vmatprep.mubr.f32.mxu0 %v330
    %993 = vmatmul.mubr.f32.gmra.mrb[0].mxu0 %v124
    %v994 = vpop.f32.mrb[0].mxu0
    %v995 = vadd.f32 %v651, %v994
    %v996 = vpop.f32.mrb[0].mxu0
    %v997 = vadd.f32 %v653, %v996
    %998 = vmatprep.mubr.f32.mxu0 %v333
    %999 = vmatmul.mubr.f32.gmra.mrb[0].mxu0 %v126
    %v1000 = vpop.f32.mrb[0].mxu0
    %v1001 = vadd.f32 %v657, %v1000
    %v1002 = vpop.f32.mrb[0].mxu0
    %v1003 = vadd.f32 %v659, %v1002
    %1004 = vmatprep.mubr.f32.mxu0 %v336
    %1005 = vmatmul.mubr.f32.gmra.mrb[0].mxu0 %v128
    %v1006 = vpop.f32.mrb[0].mxu0
    %v1007 = vadd.f32 %v663, %v1006
    %v1008 = vpop.f32.mrb[0].mxu0
    %v1009 = vadd.f32 %v665, %v1008
    %1010 = vmatprep.mubr.f32.mxu0 %v339
    %1011 = vmatmul.mubr.f32.gmra.mrb[0].mxu0 %v130
    %v1012 = vpop.f32.mrb[0].mxu0
    %v1013 = vadd.f32 %v669, %v1012
    %v1014 = vpop.f32.mrb[0].mxu0
    %v1015 = vadd.f32 %v671, %v1014
    %1016 = vmatprep.mubr.f32.mxu0 %v342
    %1017 = vmatmul.mubr.f32.gmra.mrb[0].mxu0 %v132
    %v1018 = vpop.f32.mrb[0].mxu0
    %v1019 = vadd.f32 %v675, %v1018
    %v1020 = vpop.f32.mrb[0].mxu0
    %v1021 = vadd.f32 %v677, %v1020
    %1022 = vmatprep.mubr.f32.mxu0 %v345
    %1023 = vmatmul.mubr.f32.gmra.mrb[0].mxu0 %v134
    %v1024 = vpop.f32.mrb[0].mxu0
    %v1025 = vadd.f32 %v681, %v1024
    %v1026 = vpop.f32.mrb[0].mxu0
    %v1027 = vadd.f32 %v683, %v1026
    %1028 = vmatprep.mubr.f32.mxu0 %v348
    %1029 = vmatmul.mubr.f32.gmra.mrb[0].mxu0 %v136
    %v1030 = vpop.f32.mrb[0].mxu0
    %v1031 = vadd.f32 %v687, %v1030
    %v1032 = vpop.f32.mrb[0].mxu0
    %v1033 = vadd.f32 %v689, %v1032
    %1034 = vmatprep.mubr.f32.mxu0 %v351
    %1035 = vmatmul.mubr.f32.gmra.mrb[0].mxu0 %v138
    %v1036 = vpop.f32.mrb[0].mxu0
    %v1037 = vadd.f32 %v693, %v1036
    %v1038 = vpop.f32.mrb[0].mxu0
    %v1039 = vadd.f32 %v695, %v1038
    %1040 = vdwg.mxu0
    %s1041 = scalar_lea.vmem %s1, 576
    %v1042 = vld [vmem:[%s1041] sm:$0xff]
    %v1043 = vld [vmem:[%s1041 + $0x8] sm:$0xff]
    %v1044 = vld [vmem:[%s1041 + $0x10] sm:$0xff]
    %v1045 = vld [vmem:[%s1041 + $0x18] sm:$0xff]
    %v1046 = vld [vmem:[%s1041 + $0x20] sm:$0xff]
    %v1047 = vld [vmem:[%s1041 + $0x28] sm:$0xff]
    %v1048 = vld [vmem:[%s1041 + $0x30] sm:$0xff]
    %v1049 = vld [vmem:[%s1041 + $0x38] sm:$0xff]
    %v1050 = vld [vmem:[%s1041 + $0x40] sm:$0xff]
    %v1051 = vld [vmem:[%s1041 + $0x48] sm:$0xff]
    %v1052 = vld [vmem:[%s1041 + $0x50] sm:$0xff]
    %v1053 = vld [vmem:[%s1041 + $0x58] sm:$0xff]
    %v1054 = vld [vmem:[%s1041 + $0x60] sm:$0xff]
    %v1055 = vld [vmem:[%s1041 + $0x68] sm:$0xff]
    %v1056 = vld [vmem:[%s1041 + $0x70] sm:$0xff]
    %v1057 = vld [vmem:[%s1041 + $0x78] sm:$0xff]
    %v1058 = vld [vmem:[%s1041 + $0x80] sm:$0xff]
    %v1059 = vld [vmem:[%s1041 + $0x88] sm:$0xff]
    %v1060 = vld [vmem:[%s1041 + $0x90] sm:$0xff]
    %v1061 = vld [vmem:[%s1041 + $0x98] sm:$0xff]
    %v1062 = vld [vmem:[%s1041 + $0xa0] sm:$0xff]
    %v1063 = vld [vmem:[%s1041 + $0xa8] sm:$0xff]
    %v1064 = vld [vmem:[%s1041 + $0xb0] sm:$0xff]
    %v1065 = vld [vmem:[%s1041 + $0xb8] sm:$0xff]
    %v1066 = vld [vmem:[%s1041 + $0xc0] sm:$0xff]
    %v1067 = vld [vmem:[%s1041 + $0xc8] sm:$0xff]
    %v1068 = vld [vmem:[%s1041 + $0xd0] sm:$0xff]
    %v1069 = vld [vmem:[%s1041 + $0xd8] sm:$0xff]
    %v1070 = vld [vmem:[%s1041 + $0xe0] sm:$0xff]
    %v1071 = vld [vmem:[%s1041 + $0xe8] sm:$0xff]
    %v1072 = vld [vmem:[%s1041 + $0xf0] sm:$0xff]
    %v1073 = vld [vmem:[%s1041 + $0xf8] sm:$0xff]
    %v1074 = vld [vmem:[%s1041 + $0x100] sm:$0xff]
    %v1075 = vld [vmem:[%s1041 + $0x108] sm:$0xff]
    %v1076 = vld [vmem:[%s1041 + $0x110] sm:$0xff]
    %v1077 = vld [vmem:[%s1041 + $0x118] sm:$0xff]
    %v1079 = vsel %vm217, %v143, 0
    %1081 = vmatprep.subr.mxu0 %v1043
    %1082 = vmatpush1.msra.mxu0 %v1042
    %1083 = vmatprep.subr.mxu0 %v1045
    %1084 = vmatpush1.msra.mxu0 %v1044
    %1085 = vmatprep.subr.mxu0 %v1047
    %1086 = vmatpush1.msra.mxu0 %v1046
    %1087 = vmatprep.subr.mxu0 %v1049
    %1088 = vmatpush1.msra.mxu0 %v1048
    %1089 = vmatprep.subr.mxu0 %v1051
    %1090 = vmatpush1.msra.mxu0 %v1050
    %1091 = vmatprep.subr.mxu0 %v1053
    %1092 = vmatpush1.msra.mxu0 %v1052
    %1093 = vmatprep.subr.mxu0 %v1055
    %1094 = vmatpush1.msra.mxu0 %v1054
    %1095 = vmatprep.subr.mxu0 %v1057
    %1096 = vmatpush1.msra.mxu0 %v1056
    %1097 = vmatprep.subr.mxu0 %v1059
    %1098 = vmatpush1.msra.mxu0 %v1058
    %1099 = vmatprep.subr.mxu0 %v1061
    %1100 = vmatpush1.msra.mxu0 %v1060
    %1101 = vmatprep.subr.mxu0 %v1063
    %1102 = vmatpush1.msra.mxu0 %v1062
    %1103 = vmatprep.subr.mxu0 %v1065
    %1104 = vmatpush1.msra.mxu0 %v1064
    %1105 = vmatprep.subr.mxu0 %v1067
    %1106 = vmatpush1.msra.mxu0 %v1066
    %1107 = vmatprep.subr.mxu0 %v1069
    %1108 = vmatpush1.msra.mxu0 %v1068
    %1109 = vmatprep.subr.mxu0 %v1071
    %1110 = vmatpush1.msra.mxu0 %v1070
    %1111 = vmatprep.subr.mxu0 %v1073
    %1112 = vmatpush1.msra.mxu0 %v1072
    %1113 = vmatprep.subr.mxu0 %v1075
    %1114 = vmatpush1.msra.mxu0 %v1074
    %1115 = vmatprep.subr.mxu0 %v1077
    %1116 = vmatpush1.msra.mxu0 %v1076
    %1117 = vmatprep.subr.mxu0 0.0
    %1118 = vmatpush1.msra.mxu0 0.0
    %1119 = vmatprep.subr.mxu0 0.0
    %1120 = vmatpush1.msra.mxu0 0.0
    %1121 = vmatprep.subr.mxu0 0.0
    %1122 = vmatpush1.msra.mxu0 0.0
    %1123 = vmatprep.subr.mxu0 0.0
    %1124 = vmatpush1.msra.mxu0 0.0
    %1125 = vmatprep.subr.mxu0 0.0
    %1126 = vmatpush1.msra.mxu0 0.0
    %1127 = vmatprep.subr.mxu0 0.0
    %1128 = vmatpush1.msra.mxu0 0.0
    %1129 = vmatprep.subr.mxu0 0.0
    %1130 = vmatpush1.msra.mxu0 0.0
    %1131 = vmatprep.subr.mxu0 0.0
    %1132 = vmatpush1.msra.mxu0 0.0
    %1133 = vmatprep.subr.mxu0 0.0
    %1134 = vmatpush1.msra.mxu0 0.0
    %1135 = vmatprep.subr.mxu0 0.0
    %1136 = vmatpush1.msra.mxu0 0.0
    %1137 = vmatprep.subr.mxu0 0.0
    %1138 = vmatpush1.msra.mxu0 0.0
    %1139 = vmatprep.subr.mxu0 0.0
    %1140 = vmatpush1.msra.mxu0 0.0
    %1141 = vmatprep.subr.mxu0 0.0
    %1142 = vmatpush1.msra.mxu0 0.0
    %1143 = vmatprep.subr.mxu0 0.0
    %1144 = vmatpush1.msra.mxu0 0.0
    %1145 = vmatprep.mubr.f32.mxu0 %v222
    %1146 = vmatmul.mubr.f32.gmra.mrb[0].mxu0 %v52
    %v1147 = vpop.f32.mrb[0].mxu0
    %v1148 = vadd.f32 0.0, %v1147
    %v1149 = vpop.f32.mrb[0].mxu0
    %v1150 = vadd.f32 0.0, %v1149
    %1151 = vmatprep.mubr.f32.mxu0 %v225
    %1152 = vmatmul.mubr.f32.gmra.mrb[0].mxu0 %v54
    %v1153 = vpop.f32.mrb[0].mxu0
    %v1154 = vadd.f32 0.0, %v1153
    %v1155 = vpop.f32.mrb[0].mxu0
    %v1156 = vadd.f32 0.0, %v1155
    %1157 = vmatprep.mubr.f32.mxu0 %v228
    %1158 = vmatmul.mubr.f32.gmra.mrb[0].mxu0 %v56
    %v1159 = vpop.f32.mrb[0].mxu0
    %v1160 = vadd.f32 0.0, %v1159
    %v1161 = vpop.f32.mrb[0].mxu0
    %v1162 = vadd.f32 0.0, %v1161
    %1163 = vmatprep.mubr.f32.mxu0 %v231
    %1164 = vmatmul.mubr.f32.gmra.mrb[0].mxu0 %v58
    %v1165 = vpop.f32.mrb[0].mxu0
    %v1166 = vadd.f32 0.0, %v1165
    %v1167 = vpop.f32.mrb[0].mxu0
    %v1168 = vadd.f32 0.0, %v1167
    %1169 = vmatprep.mubr.f32.mxu0 %v234
    %1170 = vmatmul.mubr.f32.gmra.mrb[0].mxu0 %v60
    %v1171 = vpop.f32.mrb[0].mxu0
    %v1172 = vadd.f32 0.0, %v1171
    %v1173 = vpop.f32.mrb[0].mxu0
    %v1174 = vadd.f32 0.0, %v1173
    %1175 = vmatprep.mubr.f32.mxu0 %v237
    %1176 = vmatmul.mubr.f32.gmra.mrb[0].mxu0 %v62
    %v1177 = vpop.f32.mrb[0].mxu0
    %v1178 = vadd.f32 0.0, %v1177
    %v1179 = vpop.f32.mrb[0].mxu0
    %v1180 = vadd.f32 0.0, %v1179
    %1181 = vmatprep.mubr.f32.mxu0 %v240
    %1182 = vmatmul.mubr.f32.gmra.mrb[0].mxu0 %v64
    %v1183 = vpop.f32.mrb[0].mxu0
    %v1184 = vadd.f32 0.0, %v1183
    %v1185 = vpop.f32.mrb[0].mxu0
    %v1186 = vadd.f32 0.0, %v1185
    %1187 = vmatprep.mubr.f32.mxu0 %v243
    %1188 = vmatmul.mubr.f32.gmra.mrb[0].mxu0 %v66
    %v1189 = vpop.f32.mrb[0].mxu0
    %v1190 = vadd.f32 0.0, %v1189
    %v1191 = vpop.f32.mrb[0].mxu0
    %v1192 = vadd.f32 0.0, %v1191
    %1193 = vmatprep.mubr.f32.mxu0 %v246
    %1194 = vmatmul.mubr.f32.gmra.mrb[0].mxu0 %v68
    %v1195 = vpop.f32.mrb[0].mxu0
    %v1196 = vadd.f32 0.0, %v1195
    %v1197 = vpop.f32.mrb[0].mxu0
    %v1198 = vadd.f32 0.0, %v1197
    %1199 = vmatprep.mubr.f32.mxu0 %v249
    %1200 = vmatmul.mubr.f32.gmra.mrb[0].mxu0 %v70
    %v1201 = vpop.f32.mrb[0].mxu0
    %v1202 = vadd.f32 0.0, %v1201
    %v1203 = vpop.f32.mrb[0].mxu0
    %v1204 = vadd.f32 0.0, %v1203
    %1205 = vmatprep.mubr.f32.mxu0 %v252
    %1206 = vmatmul.mubr.f32.gmra.mrb[0].mxu0 %v72
    %v1207 = vpop.f32.mrb[0].mxu0
    %v1208 = vadd.f32 0.0, %v1207
    %v1209 = vpop.f32.mrb[0].mxu0
    %v1210 = vadd.f32 0.0, %v1209
    %1211 = vmatprep.mubr.f32.mxu0 %v255
    %1212 = vmatmul.mubr.f32.gmra.mrb[0].mxu0 %v74
    %v1213 = vpop.f32.mrb[0].mxu0
    %v1214 = vadd.f32 0.0, %v1213
    %v1215 = vpop.f32.mrb[0].mxu0
    %v1216 = vadd.f32 0.0, %v1215
    %1217 = vmatprep.mubr.f32.mxu0 %v258
    %1218 = vmatmul.mubr.f32.gmra.mrb[0].mxu0 %v76
    %v1219 = vpop.f32.mrb[0].mxu0
    %v1220 = vadd.f32 0.0, %v1219
    %v1221 = vpop.f32.mrb[0].mxu0
    %v1222 = vadd.f32 0.0, %v1221
    %1223 = vmatprep.mubr.f32.mxu0 %v261
    %1224 = vmatmul.mubr.f32.gmra.mrb[0].mxu0 %v78
    %v1225 = vpop.f32.mrb[0].mxu0
    %v1226 = vadd.f32 0.0, %v1225
    %v1227 = vpop.f32.mrb[0].mxu0
    %v1228 = vadd.f32 0.0, %v1227
    %1229 = vmatprep.mubr.f32.mxu0 %v264
    %1230 = vmatmul.mubr.f32.gmra.mrb[0].mxu0 %v80
    %v1231 = vpop.f32.mrb[0].mxu0
    %v1232 = vadd.f32 0.0, %v1231
    %v1233 = vpop.f32.mrb[0].mxu0
    %v1234 = vadd.f32 0.0, %v1233
    %1235 = vmatprep.mubr.f32.mxu0 %v267
    %1236 = vmatmul.mubr.f32.gmra.mrb[0].mxu0 %v82
    %v1237 = vpop.f32.mrb[0].mxu0
    %v1238 = vadd.f32 0.0, %v1237
    %v1239 = vpop.f32.mrb[0].mxu0
    %v1240 = vadd.f32 0.0, %v1239
    %1241 = vmatprep.mubr.f32.mxu0 %v270
    %1242 = vmatmul.mubr.f32.gmra.mrb[0].mxu0 %v84
    %v1243 = vpop.f32.mrb[0].mxu0
    %v1244 = vadd.f32 0.0, %v1243
    %v1245 = vpop.f32.mrb[0].mxu0
    %v1246 = vadd.f32 0.0, %v1245
    %1247 = vmatprep.mubr.f32.mxu0 %v273
    %1248 = vmatmul.mubr.f32.gmra.mrb[0].mxu0 %v86
    %v1249 = vpop.f32.mrb[0].mxu0
    %v1250 = vadd.f32 0.0, %v1249
    %v1251 = vpop.f32.mrb[0].mxu0
    %v1252 = vadd.f32 0.0, %v1251
    %1253 = vmatprep.mubr.f32.mxu0 %v276
    %1254 = vmatmul.mubr.f32.gmra.mrb[0].mxu0 %v88
    %v1255 = vpop.f32.mrb[0].mxu0
    %v1256 = vadd.f32 0.0, %v1255
    %v1257 = vpop.f32.mrb[0].mxu0
    %v1258 = vadd.f32 0.0, %v1257
    %1259 = vmatprep.mubr.f32.mxu0 %v279
    %1260 = vmatmul.mubr.f32.gmra.mrb[0].mxu0 %v90
    %v1261 = vpop.f32.mrb[0].mxu0
    %v1262 = vadd.f32 0.0, %v1261
    %v1263 = vpop.f32.mrb[0].mxu0
    %v1264 = vadd.f32 0.0, %v1263
    %1265 = vmatprep.mubr.f32.mxu0 %v282
    %1266 = vmatmul.mubr.f32.gmra.mrb[0].mxu0 %v92
    %v1267 = vpop.f32.mrb[0].mxu0
    %v1268 = vadd.f32 0.0, %v1267
    %v1269 = vpop.f32.mrb[0].mxu0
    %v1270 = vadd.f32 0.0, %v1269
    %1271 = vmatprep.mubr.f32.mxu0 %v285
    %1272 = vmatmul.mubr.f32.gmra.mrb[0].mxu0 %v94
    %v1273 = vpop.f32.mrb[0].mxu0
    %v1274 = vadd.f32 0.0, %v1273
    %v1275 = vpop.f32.mrb[0].mxu0
    %v1276 = vadd.f32 0.0, %v1275
    %1277 = vmatprep.mubr.f32.mxu0 %v288
    %1278 = vmatmul.mubr.f32.gmra.mrb[0].mxu0 %v96
    %v1279 = vpop.f32.mrb[0].mxu0
    %v1280 = vadd.f32 0.0, %v1279
    %v1281 = vpop.f32.mrb[0].mxu0
    %v1282 = vadd.f32 0.0, %v1281
    %1283 = vmatprep.mubr.f32.mxu0 %v291
    %1284 = vmatmul.mubr.f32.gmra.mrb[0].mxu0 %v98
    %v1285 = vpop.f32.mrb[0].mxu0
    %v1286 = vadd.f32 0.0, %v1285
    %v1287 = vpop.f32.mrb[0].mxu0
    %v1288 = vadd.f32 0.0, %v1287
    %1289 = vmatprep.mubr.f32.mxu0 %v294
    %1290 = vmatmul.mubr.f32.gmra.mrb[0].mxu0 %v100
    %v1291 = vpop.f32.mrb[0].mxu0
    %v1292 = vadd.f32 0.0, %v1291
    %v1293 = vpop.f32.mrb[0].mxu0
    %v1294 = vadd.f32 0.0, %v1293
    %1295 = vmatprep.mubr.f32.mxu0 %v297
    %1296 = vmatmul.mubr.f32.gmra.mrb[0].mxu0 %v102
    %v1297 = vpop.f32.mrb[0].mxu0
    %v1298 = vadd.f32 0.0, %v1297
    %v1299 = vpop.f32.mrb[0].mxu0
    %v1300 = vadd.f32 0.0, %v1299
    %1301 = vmatprep.mubr.f32.mxu0 %v300
    %1302 = vmatmul.mubr.f32.gmra.mrb[0].mxu0 %v104
    %v1303 = vpop.f32.mrb[0].mxu0
    %v1304 = vadd.f32 0.0, %v1303
    %v1305 = vpop.f32.mrb[0].mxu0
    %v1306 = vadd.f32 0.0, %v1305
    %1307 = vmatprep.mubr.f32.mxu0 %v303
    %1308 = vmatmul.mubr.f32.gmra.mrb[0].mxu0 %v106
    %v1309 = vpop.f32.mrb[0].mxu0
    %v1310 = vadd.f32 0.0, %v1309
    %v1311 = vpop.f32.mrb[0].mxu0
    %v1312 = vadd.f32 0.0, %v1311
    %1313 = vmatprep.mubr.f32.mxu0 %v306
    %1314 = vmatmul.mubr.f32.gmra.mrb[0].mxu0 %v108
    %v1315 = vpop.f32.mrb[0].mxu0
    %v1316 = vadd.f32 0.0, %v1315
    %v1317 = vpop.f32.mrb[0].mxu0
    %v1318 = vadd.f32 0.0, %v1317
    %1319 = vmatprep.mubr.f32.mxu0 %v309
    %1320 = vmatmul.mubr.f32.gmra.mrb[0].mxu0 %v110
    %v1321 = vpop.f32.mrb[0].mxu0
    %v1322 = vadd.f32 0.0, %v1321
    %v1323 = vpop.f32.mrb[0].mxu0
    %v1324 = vadd.f32 0.0, %v1323
    %1325 = vmatprep.mubr.f32.mxu0 %v312
    %1326 = vmatmul.mubr.f32.gmra.mrb[0].mxu0 %v112
    %v1327 = vpop.f32.mrb[0].mxu0
    %v1328 = vadd.f32 0.0, %v1327
    %v1329 = vpop.f32.mrb[0].mxu0
    %v1330 = vadd.f32 0.0, %v1329
    %1331 = vmatprep.mubr.f32.mxu0 %v315
    %1332 = vmatmul.mubr.f32.gmra.mrb[0].mxu0 %v114
    %v1333 = vpop.f32.mrb[0].mxu0
    %v1334 = vadd.f32 0.0, %v1333
    %v1335 = vpop.f32.mrb[0].mxu0
    %v1336 = vadd.f32 0.0, %v1335
    %1337 = vmatprep.mubr.f32.mxu0 %v318
    %1338 = vmatmul.mubr.f32.gmra.mrb[0].mxu0 %v116
    %v1339 = vpop.f32.mrb[0].mxu0
    %v1340 = vadd.f32 0.0, %v1339
    %v1341 = vpop.f32.mrb[0].mxu0
    %v1342 = vadd.f32 0.0, %v1341
    %1343 = vmatprep.mubr.f32.mxu0 %v321
    %1344 = vmatmul.mubr.f32.gmra.mrb[0].mxu0 %v118
    %v1345 = vpop.f32.mrb[0].mxu0
    %v1346 = vadd.f32 0.0, %v1345
    %v1347 = vpop.f32.mrb[0].mxu0
    %v1348 = vadd.f32 0.0, %v1347
    %1349 = vmatprep.mubr.f32.mxu0 %v324
    %1350 = vmatmul.mubr.f32.gmra.mrb[0].mxu0 %v120
    %v1351 = vpop.f32.mrb[0].mxu0
    %v1352 = vadd.f32 0.0, %v1351
    %v1353 = vpop.f32.mrb[0].mxu0
    %v1354 = vadd.f32 0.0, %v1353
    %1355 = vmatprep.mubr.f32.mxu0 %v327
    %1356 = vmatmul.mubr.f32.gmra.mrb[0].mxu0 %v122
    %v1357 = vpop.f32.mrb[0].mxu0
    %v1358 = vadd.f32 0.0, %v1357
    %v1359 = vpop.f32.mrb[0].mxu0
    %v1360 = vadd.f32 0.0, %v1359
    %1361 = vmatprep.mubr.f32.mxu0 %v330
    %1362 = vmatmul.mubr.f32.gmra.mrb[0].mxu0 %v124
    %v1363 = vpop.f32.mrb[0].mxu0
    %v1364 = vadd.f32 0.0, %v1363
    %v1365 = vpop.f32.mrb[0].mxu0
    %v1366 = vadd.f32 0.0, %v1365
    %1367 = vmatprep.mubr.f32.mxu0 %v333
    %1368 = vmatmul.mubr.f32.gmra.mrb[0].mxu0 %v126
    %v1369 = vpop.f32.mrb[0].mxu0
    %v1370 = vadd.f32 0.0, %v1369
    %v1371 = vpop.f32.mrb[0].mxu0
    %v1372 = vadd.f32 0.0, %v1371
    %1373 = vmatprep.mubr.f32.mxu0 %v336
    %1374 = vmatmul.mubr.f32.gmra.mrb[0].mxu0 %v128
    %v1375 = vpop.f32.mrb[0].mxu0
    %v1376 = vadd.f32 0.0, %v1375
    %v1377 = vpop.f32.mrb[0].mxu0
    %v1378 = vadd.f32 0.0, %v1377
    %1379 = vmatprep.mubr.f32.mxu0 %v339
    %1380 = vmatmul.mubr.f32.gmra.mrb[0].mxu0 %v130
    %v1381 = vpop.f32.mrb[0].mxu0
    %v1382 = vadd.f32 0.0, %v1381
    %v1383 = vpop.f32.mrb[0].mxu0
    %v1384 = vadd.f32 0.0, %v1383
    %1385 = vmatprep.mubr.f32.mxu0 %v342
    %1386 = vmatmul.mubr.f32.gmra.mrb[0].mxu0 %v132
    %v1387 = vpop.f32.mrb[0].mxu0
    %v1388 = vadd.f32 0.0, %v1387
    %v1389 = vpop.f32.mrb[0].mxu0
    %v1390 = vadd.f32 0.0, %v1389
    %1391 = vmatprep.mubr.f32.mxu0 %v345
    %1392 = vmatmul.mubr.f32.gmra.mrb[0].mxu0 %v134
    %v1393 = vpop.f32.mrb[0].mxu0
    %v1394 = vadd.f32 0.0, %v1393
    %v1395 = vpop.f32.mrb[0].mxu0
    %v1396 = vadd.f32 0.0, %v1395
    %1397 = vmatprep.mubr.f32.mxu0 %v348
    %1398 = vmatmul.mubr.f32.gmra.mrb[0].mxu0 %v136
    %v1399 = vpop.f32.mrb[0].mxu0
    %v1400 = vadd.f32 0.0, %v1399
    %v1401 = vpop.f32.mrb[0].mxu0
    %v1402 = vadd.f32 0.0, %v1401
    %1403 = vmatprep.mubr.f32.mxu0 %v351
    %1404 = vmatmul.mubr.f32.gmra.mrb[0].mxu0 %v138
    %v1405 = vpop.f32.mrb[0].mxu0
    %v1406 = vadd.f32 0.0, %v1405
    %v1407 = vpop.f32.mrb[0].mxu0
    %v1408 = vadd.f32 0.0, %v1407
    %1409 = vmatprep.mubr.f32.mxu0 %v354
    %1410 = vmatmul.mubr.f32.gmra.mrb[0].mxu0 %v140
    %v1411 = vpop.f32.mrb[0].mxu0
    %v1412 = vadd.f32 0.0, %v1411
    %v1413 = vpop.f32.mrb[0].mxu0
    %v1414 = vadd.f32 0.0, %v1413
    %1415 = vmatprep.mubr.f32.mxu0 %v1079
    %1416 = vmatmul.mubr.f32.gmra.mrb[0].mxu0 %v142
    %v1417 = vpop.f32.mrb[0].mxu0
    %v1418 = vadd.f32 0.0, %v1417
    %v1419 = vpop.f32.mrb[0].mxu0
    %v1420 = vadd.f32 0.0, %v1419
    %1421 = vdwg.mxu0
    %v1422 = vadd.f32 %v767, %v1148
    %v1423 = vadd.f32 %v769, %v1150
    %v1424 = vadd.f32 %v773, %v1154
    %v1425 = vadd.f32 %v775, %v1156
    %v1426 = vadd.f32 %v779, %v1160
    %v1427 = vadd.f32 %v781, %v1162
    %v1428 = vadd.f32 %v785, %v1166
    %v1429 = vadd.f32 %v787, %v1168
    %v1430 = vadd.f32 %v791, %v1172
    %v1431 = vadd.f32 %v793, %v1174
    %v1432 = vadd.f32 %v797, %v1178
    %v1433 = vadd.f32 %v799, %v1180
    %v1434 = vadd.f32 %v803, %v1184
    %v1435 = vadd.f32 %v805, %v1186
    %v1436 = vadd.f32 %v809, %v1190
    %v1437 = vadd.f32 %v811, %v1192
    %v1438 = vadd.f32 %v815, %v1196
    %v1439 = vadd.f32 %v817, %v1198
    %v1440 = vadd.f32 %v821, %v1202
    %v1441 = vadd.f32 %v823, %v1204
    %v1442 = vadd.f32 %v827, %v1208
    %v1443 = vadd.f32 %v829, %v1210
    %v1444 = vadd.f32 %v833, %v1214
    %v1445 = vadd.f32 %v835, %v1216
    %v1446 = vadd.f32 %v839, %v1220
    %v1447 = vadd.f32 %v841, %v1222
    %v1448 = vadd.f32 %v845, %v1226
    %v1449 = vadd.f32 %v847, %v1228
    %v1450 = vadd.f32 %v851, %v1232
    %v1451 = vadd.f32 %v853, %v1234
    %v1452 = vadd.f32 %v857, %v1238
    %v1453 = vadd.f32 %v859, %v1240
    %v1454 = vadd.f32 %v863, %v1244
    %v1455 = vadd.f32 %v865, %v1246
    %v1456 = vadd.f32 %v869, %v1250
    %v1457 = vadd.f32 %v871, %v1252
    %v1458 = vadd.f32 %v875, %v1256
    %v1459 = vadd.f32 %v877, %v1258
    %v1460 = vadd.f32 %v881, %v1262
    %v1461 = vadd.f32 %v883, %v1264
    %v1462 = vadd.f32 %v887, %v1268
    %v1463 = vadd.f32 %v889, %v1270
    %v1464 = vadd.f32 %v893, %v1274
    %v1465 = vadd.f32 %v895, %v1276
    %v1466 = vadd.f32 %v899, %v1280
    %v1467 = vadd.f32 %v901, %v1282
    %v1468 = vadd.f32 %v905, %v1286
    %v1469 = vadd.f32 %v907, %v1288
    %v1470 = vadd.f32 %v911, %v1292
    %v1471 = vadd.f32 %v913, %v1294
    %v1472 = vadd.f32 %v917, %v1298
    %v1473 = vadd.f32 %v919, %v1300
    %v1474 = vadd.f32 %v923, %v1304
    %v1475 = vadd.f32 %v925, %v1306
    %v1476 = vadd.f32 %v929, %v1310
    %v1477 = vadd.f32 %v931, %v1312
    %v1478 = vadd.f32 %v935, %v1316
    %v1479 = vadd.f32 %v937, %v1318
    %v1480 = vadd.f32 %v941, %v1322
    %v1481 = vadd.f32 %v943, %v1324
    %v1482 = vadd.f32 %v947, %v1328
    %v1483 = vadd.f32 %v949, %v1330
    %v1484 = vadd.f32 %v953, %v1334
    %v1485 = vadd.f32 %v955, %v1336
    %v1486 = vadd.f32 %v959, %v1340
    %v1487 = vadd.f32 %v961, %v1342
    %v1488 = vadd.f32 %v965, %v1346
    %v1489 = vadd.f32 %v967, %v1348
    %v1490 = vadd.f32 %v971, %v1352
    %v1491 = vadd.f32 %v973, %v1354
    %v1492 = vadd.f32 %v977, %v1358
    %v1493 = vadd.f32 %v979, %v1360
    %v1494 = vadd.f32 %v983, %v1364
    %v1495 = vadd.f32 %v985, %v1366
    %v1496 = vadd.f32 %v989, %v1370
    %v1497 = vadd.f32 %v991, %v1372
    %v1498 = vadd.f32 %v995, %v1376
    %v1499 = vadd.f32 %v997, %v1378
    %v1500 = vadd.f32 %v1001, %v1382
    %v1501 = vadd.f32 %v1003, %v1384
    %v1502 = vadd.f32 %v1007, %v1388
    %v1503 = vadd.f32 %v1009, %v1390
    %v1504 = vadd.f32 %v1013, %v1394
    %v1505 = vadd.f32 %v1015, %v1396
    %v1506 = vadd.f32 %v1019, %v1400
    %v1507 = vadd.f32 %v1021, %v1402
    %v1508 = vadd.f32 %v1025, %v1406
    %v1509 = vadd.f32 %v1027, %v1408
    %v1510 = vadd.f32 %v1031, %v1412
    %v1511 = vadd.f32 %v1033, %v1414
    %v1512 = vadd.f32 %v1037, %v1418
    %v1513 = vadd.f32 %v1039, %v1420
    %v1514 = vld [vmem:[%s2] sm:$0x3]
    %v1516 = vlaneseq
    %v1517 = vshrl.u32 %v1516, 7
    %v1518 = vsub.s32 0, %v1517
    %v1519 = vrot.slane %v1514, %v1518
    %v1520 = vlaneseq
    %v1521 = vshrl.u32 %v1520, 7
    %v1522 = vsub.s32 1, %v1521
    %v1523 = vrot.slane %v1514, %v1522
    %v1526 = vadd.f32 %v1422, %v1519
    %v1527 = vadd.f32 %v1423, %v1523
    %v1528 = vadd.f32 %v1424, %v1519
    %v1529 = vadd.f32 %v1425, %v1523
    %v1530 = vadd.f32 %v1426, %v1519
    %v1531 = vadd.f32 %v1427, %v1523
    %v1532 = vadd.f32 %v1428, %v1519
    %v1533 = vadd.f32 %v1429, %v1523
    %v1534 = vadd.f32 %v1430, %v1519
    %v1535 = vadd.f32 %v1431, %v1523
    %v1536 = vadd.f32 %v1432, %v1519
    %v1537 = vadd.f32 %v1433, %v1523
    %v1538 = vadd.f32 %v1434, %v1519
    %v1539 = vadd.f32 %v1435, %v1523
    %v1540 = vadd.f32 %v1436, %v1519
    %v1541 = vadd.f32 %v1437, %v1523
    %v1542 = vadd.f32 %v1438, %v1519
    %v1543 = vadd.f32 %v1439, %v1523
    %v1544 = vadd.f32 %v1440, %v1519
    %v1545 = vadd.f32 %v1441, %v1523
    %v1546 = vadd.f32 %v1442, %v1519
    %v1547 = vadd.f32 %v1443, %v1523
    %v1548 = vadd.f32 %v1444, %v1519
    %v1549 = vadd.f32 %v1445, %v1523
    %v1550 = vadd.f32 %v1446, %v1519
    %v1551 = vadd.f32 %v1447, %v1523
    %v1552 = vadd.f32 %v1448, %v1519
    %v1553 = vadd.f32 %v1449, %v1523
    %v1554 = vadd.f32 %v1450, %v1519
    %v1555 = vadd.f32 %v1451, %v1523
    %v1556 = vadd.f32 %v1452, %v1519
    %v1557 = vadd.f32 %v1453, %v1523
    %v1558 = vadd.f32 %v1454, %v1519
    %v1559 = vadd.f32 %v1455, %v1523
    %v1560 = vadd.f32 %v1456, %v1519
    %v1561 = vadd.f32 %v1457, %v1523
    %v1562 = vadd.f32 %v1458, %v1519
    %v1563 = vadd.f32 %v1459, %v1523
    %v1564 = vadd.f32 %v1460, %v1519
    %v1565 = vadd.f32 %v1461, %v1523
    %v1566 = vadd.f32 %v1462, %v1519
    %v1567 = vadd.f32 %v1463, %v1523
    %v1568 = vadd.f32 %v1464, %v1519
    %v1569 = vadd.f32 %v1465, %v1523
    %v1570 = vadd.f32 %v1466, %v1519
    %v1571 = vadd.f32 %v1467, %v1523
    %v1572 = vadd.f32 %v1468, %v1519
    %v1573 = vadd.f32 %v1469, %v1523
    %v1574 = vadd.f32 %v1470, %v1519
    %v1575 = vadd.f32 %v1471, %v1523
    %v1576 = vadd.f32 %v1472, %v1519
    %v1577 = vadd.f32 %v1473, %v1523
    %v1578 = vadd.f32 %v1474, %v1519
    %v1579 = vadd.f32 %v1475, %v1523
    %v1580 = vadd.f32 %v1476, %v1519
    %v1581 = vadd.f32 %v1477, %v1523
    %v1582 = vadd.f32 %v1478, %v1519
    %v1583 = vadd.f32 %v1479, %v1523
    %v1584 = vadd.f32 %v1480, %v1519
    %v1585 = vadd.f32 %v1481, %v1523
    %v1586 = vadd.f32 %v1482, %v1519
    %v1587 = vadd.f32 %v1483, %v1523
    %v1588 = vadd.f32 %v1484, %v1519
    %v1589 = vadd.f32 %v1485, %v1523
    %v1590 = vadd.f32 %v1486, %v1519
    %v1591 = vadd.f32 %v1487, %v1523
    %v1592 = vadd.f32 %v1488, %v1519
    %v1593 = vadd.f32 %v1489, %v1523
    %v1594 = vadd.f32 %v1490, %v1519
    %v1595 = vadd.f32 %v1491, %v1523
    %v1596 = vadd.f32 %v1492, %v1519
    %v1597 = vadd.f32 %v1493, %v1523
    %v1598 = vadd.f32 %v1494, %v1519
    %v1599 = vadd.f32 %v1495, %v1523
    %v1600 = vadd.f32 %v1496, %v1519
    %v1601 = vadd.f32 %v1497, %v1523
    %v1602 = vadd.f32 %v1498, %v1519
    %v1603 = vadd.f32 %v1499, %v1523
    %v1604 = vadd.f32 %v1500, %v1519
    %v1605 = vadd.f32 %v1501, %v1523
    %v1606 = vadd.f32 %v1502, %v1519
    %v1607 = vadd.f32 %v1503, %v1523
    %v1608 = vadd.f32 %v1504, %v1519
    %v1609 = vadd.f32 %v1505, %v1523
    %v1610 = vadd.f32 %v1506, %v1519
    %v1611 = vadd.f32 %v1507, %v1523
    %v1612 = vadd.f32 %v1508, %v1519
    %v1613 = vadd.f32 %v1509, %v1523
    %v1614 = vadd.f32 %v1510, %v1519
    %v1615 = vadd.f32 %v1511, %v1523
    %v1616 = vadd.f32 %v1512, %v1519
    %v1617 = vadd.f32 %v1513, %v1523
    %v1618 = vmax.f32 %v1526, 0.0
    %v1619 = vmax.f32 %v1527, 0.0
    %v1620 = vmax.f32 %v1528, 0.0
    %v1621 = vmax.f32 %v1529, 0.0
    %v1622 = vmax.f32 %v1530, 0.0
    %v1623 = vmax.f32 %v1531, 0.0
    %v1624 = vmax.f32 %v1532, 0.0
    %v1625 = vmax.f32 %v1533, 0.0
    %v1626 = vmax.f32 %v1534, 0.0
    %v1627 = vmax.f32 %v1535, 0.0
    %v1628 = vmax.f32 %v1536, 0.0
    %v1629 = vmax.f32 %v1537, 0.0
    %v1630 = vmax.f32 %v1538, 0.0
    %v1631 = vmax.f32 %v1539, 0.0
    %v1632 = vmax.f32 %v1540, 0.0
    %v1633 = vmax.f32 %v1541, 0.0
    %v1634 = vmax.f32 %v1542, 0.0
    %v1635 = vmax.f32 %v1543, 0.0
    %v1636 = vmax.f32 %v1544, 0.0
    %v1637 = vmax.f32 %v1545, 0.0
    %v1638 = vmax.f32 %v1546, 0.0
    %v1639 = vmax.f32 %v1547, 0.0
    %v1640 = vmax.f32 %v1548, 0.0
    %v1641 = vmax.f32 %v1549, 0.0
    %v1642 = vmax.f32 %v1550, 0.0
    %v1643 = vmax.f32 %v1551, 0.0
    %v1644 = vmax.f32 %v1552, 0.0
    %v1645 = vmax.f32 %v1553, 0.0
    %v1646 = vmax.f32 %v1554, 0.0
    %v1647 = vmax.f32 %v1555, 0.0
    %v1648 = vmax.f32 %v1556, 0.0
    %v1649 = vmax.f32 %v1557, 0.0
    %v1650 = vmax.f32 %v1558, 0.0
    %v1651 = vmax.f32 %v1559, 0.0
    %v1652 = vmax.f32 %v1560, 0.0
    %v1653 = vmax.f32 %v1561, 0.0
    %v1654 = vmax.f32 %v1562, 0.0
    %v1655 = vmax.f32 %v1563, 0.0
    %v1656 = vmax.f32 %v1564, 0.0
    %v1657 = vmax.f32 %v1565, 0.0
    %v1658 = vmax.f32 %v1566, 0.0
    %v1659 = vmax.f32 %v1567, 0.0
    %v1660 = vmax.f32 %v1568, 0.0
    %v1661 = vmax.f32 %v1569, 0.0
    %v1662 = vmax.f32 %v1570, 0.0
    %v1663 = vmax.f32 %v1571, 0.0
    %v1664 = vmax.f32 %v1572, 0.0
    %v1665 = vmax.f32 %v1573, 0.0
    %v1666 = vmax.f32 %v1574, 0.0
    %v1667 = vmax.f32 %v1575, 0.0
    %v1668 = vmax.f32 %v1576, 0.0
    %v1669 = vmax.f32 %v1577, 0.0
    %v1670 = vmax.f32 %v1578, 0.0
    %v1671 = vmax.f32 %v1579, 0.0
    %v1672 = vmax.f32 %v1580, 0.0
    %v1673 = vmax.f32 %v1581, 0.0
    %v1674 = vmax.f32 %v1582, 0.0
    %v1675 = vmax.f32 %v1583, 0.0
    %v1676 = vmax.f32 %v1584, 0.0
    %v1677 = vmax.f32 %v1585, 0.0
    %v1678 = vmax.f32 %v1586, 0.0
    %v1679 = vmax.f32 %v1587, 0.0
    %v1680 = vmax.f32 %v1588, 0.0
    %v1681 = vmax.f32 %v1589, 0.0
    %v1682 = vmax.f32 %v1590, 0.0
    %v1683 = vmax.f32 %v1591, 0.0
    %v1684 = vmax.f32 %v1592, 0.0
    %v1685 = vmax.f32 %v1593, 0.0
    %v1686 = vmax.f32 %v1594, 0.0
    %v1687 = vmax.f32 %v1595, 0.0
    %v1688 = vmax.f32 %v1596, 0.0
    %v1689 = vmax.f32 %v1597, 0.0
    %v1690 = vmax.f32 %v1598, 0.0
    %v1691 = vmax.f32 %v1599, 0.0
    %v1692 = vmax.f32 %v1600, 0.0
    %v1693 = vmax.f32 %v1601, 0.0
    %v1694 = vmax.f32 %v1602, 0.0
    %v1695 = vmax.f32 %v1603, 0.0
    %v1696 = vmax.f32 %v1604, 0.0
    %v1697 = vmax.f32 %v1605, 0.0
    %v1698 = vmax.f32 %v1606, 0.0
    %v1699 = vmax.f32 %v1607, 0.0
    %v1700 = vmax.f32 %v1608, 0.0
    %v1701 = vmax.f32 %v1609, 0.0
    %v1702 = vmax.f32 %v1610, 0.0
    %v1703 = vmax.f32 %v1611, 0.0
    %v1704 = vmax.f32 %v1612, 0.0
    %v1705 = vmax.f32 %v1613, 0.0
    %v1706 = vmax.f32 %v1614, 0.0
    %v1707 = vmax.f32 %v1615, 0.0
    %v1708 = vmax.f32 %v1616, 0.0
    %v1709 = vmax.f32 %v1617, 0.0
    %v1710 = vmax.f32 %v1618, %v1620
    %v1711 = vmax.f32 %v1619, %v1621
    %v1712 = vmax.f32 %v1622, %v1624
    %v1713 = vmax.f32 %v1623, %v1625
    %v1714 = vmax.f32 %v1626, %v1628
    %v1715 = vmax.f32 %v1627, %v1629
    %v1716 = vmax.f32 %v1630, %v1632
    %v1717 = vmax.f32 %v1631, %v1633
    %v1718 = vmax.f32 %v1634, %v1636
    %v1719 = vmax.f32 %v1635, %v1637
    %v1720 = vmax.f32 %v1638, %v1640
    %v1721 = vmax.f32 %v1639, %v1641
    %v1722 = vmax.f32 %v1642, %v1644
    %v1723 = vmax.f32 %v1643, %v1645
    %v1724 = vmax.f32 %v1646, %v1648
    %v1725 = vmax.f32 %v1647, %v1649
    %v1726 = vmax.f32 %v1650, %v1652
    %v1727 = vmax.f32 %v1651, %v1653
    %v1728 = vmax.f32 %v1654, %v1656
    %v1729 = vmax.f32 %v1655, %v1657
    %v1730 = vmax.f32 %v1658, %v1660
    %v1731 = vmax.f32 %v1659, %v1661
    %v1732 = vmax.f32 %v1662, %v1664
    %v1733 = vmax.f32 %v1663, %v1665
    %v1734 = vmax.f32 %v1666, %v1668
    %v1735 = vmax.f32 %v1667, %v1669
    %v1736 = vmax.f32 %v1670, %v1672
    %v1737 = vmax.f32 %v1671, %v1673
    %v1738 = vmax.f32 %v1674, %v1676
    %v1739 = vmax.f32 %v1675, %v1677
    %v1740 = vmax.f32 %v1678, %v1680
    %v1741 = vmax.f32 %v1679, %v1681
    %v1742 = vmax.f32 %v1682, %v1684
    %v1743 = vmax.f32 %v1683, %v1685
    %v1744 = vmax.f32 %v1686, %v1688
    %v1745 = vmax.f32 %v1687, %v1689
    %v1746 = vmax.f32 %v1690, %v1692
    %v1747 = vmax.f32 %v1691, %v1693
    %v1748 = vmax.f32 %v1694, %v1696
    %v1749 = vmax.f32 %v1695, %v1697
    %v1750 = vmax.f32 %v1698, %v1700
    %v1751 = vmax.f32 %v1699, %v1701
    %v1752 = vmax.f32 %v1702, %v1704
    %v1753 = vmax.f32 %v1703, %v1705
    %v1754 = vmax.f32 %v1706, %v1708
    %v1755 = vmax.f32 %v1707, %v1709
    %1802 = vrot.lane.b32.xlu0 %v1710, 124
    %v1803 = vpop.permute.xlu0 %1802
    %1804 = vrot.lane.b32.xlu0 %v1711, 124
    %v1805 = vpop.permute.xlu0 %1804
    %1806 = vrot.lane.b32.xlu0 %v1712, 124
    %v1807 = vpop.permute.xlu0 %1806
    %1808 = vrot.lane.b32.xlu0 %v1713, 124
    %v1809 = vpop.permute.xlu0 %1808
    %1810 = vrot.lane.b32.xlu0 %v1714, 124
    %v1811 = vpop.permute.xlu0 %1810
    %1812 = vrot.lane.b32.xlu0 %v1715, 124
    %v1813 = vpop.permute.xlu0 %1812
    %1814 = vrot.lane.b32.xlu0 %v1716, 124
    %v1815 = vpop.permute.xlu0 %1814
    %1816 = vrot.lane.b32.xlu0 %v1717, 124
    %v1817 = vpop.permute.xlu0 %1816
    %1818 = vrot.lane.b32.xlu0 %v1718, 124
    %v1819 = vpop.permute.xlu0 %1818
    %1820 = vrot.lane.b32.xlu0 %v1719, 124
    %v1821 = vpop.permute.xlu0 %1820
    %1822 = vrot.lane.b32.xlu0 %v1720, 124
    %v1823 = vpop.permute.xlu0 %1822
    %1824 = vrot.lane.b32.xlu0 %v1721, 124
    %v1825 = vpop.permute.xlu0 %1824
    %1826 = vrot.lane.b32.xlu0 %v1722, 124
    %v1827 = vpop.permute.xlu0 %1826
    %1828 = vrot.lane.b32.xlu0 %v1723, 124
    %v1829 = vpop.permute.xlu0 %1828
    %1830 = vrot.lane.b32.xlu0 %v1724, 124
    %v1831 = vpop.permute.xlu0 %1830
    %1832 = vrot.lane.b32.xlu0 %v1725, 124
    %v1833 = vpop.permute.xlu0 %1832
    %1834 = vrot.lane.b32.xlu0 %v1726, 124
    %v1835 = vpop.permute.xlu0 %1834
    %1836 = vrot.lane.b32.xlu0 %v1727, 124
    %v1837 = vpop.permute.xlu0 %1836
    %1838 = vrot.lane.b32.xlu0 %v1728, 124
    %v1839 = vpop.permute.xlu0 %1838
    %1840 = vrot.lane.b32.xlu0 %v1729, 124
    %v1841 = vpop.permute.xlu0 %1840
    %1842 = vrot.lane.b32.xlu0 %v1730, 124
    %v1843 = vpop.permute.xlu0 %1842
    %1844 = vrot.lane.b32.xlu0 %v1731, 124
    %v1845 = vpop.permute.xlu0 %1844
    %1846 = vrot.lane.b32.xlu0 %v1732, 124
    %v1847 = vpop.permute.xlu0 %1846
    %1848 = vrot.lane.b32.xlu0 %v1733, 124
    %v1849 = vpop.permute.xlu0 %1848
    %1850 = vrot.lane.b32.xlu0 %v1734, 124
    %v1851 = vpop.permute.xlu0 %1850
    %1852 = vrot.lane.b32.xlu0 %v1735, 124
    %v1853 = vpop.permute.xlu0 %1852
    %1854 = vrot.lane.b32.xlu0 %v1736, 124
    %v1855 = vpop.permute.xlu0 %1854
    %1856 = vrot.lane.b32.xlu0 %v1737, 124
    %v1857 = vpop.permute.xlu0 %1856
    %1858 = vrot.lane.b32.xlu0 %v1738, 124
    %v1859 = vpop.permute.xlu0 %1858
    %1860 = vrot.lane.b32.xlu0 %v1739, 124
    %v1861 = vpop.permute.xlu0 %1860
    %1862 = vrot.lane.b32.xlu0 %v1740, 124
    %v1863 = vpop.permute.xlu0 %1862
    %1864 = vrot.lane.b32.xlu0 %v1741, 124
    %v1865 = vpop.permute.xlu0 %1864
    %1866 = vrot.lane.b32.xlu0 %v1742, 124
    %v1867 = vpop.permute.xlu0 %1866
    %1868 = vrot.lane.b32.xlu0 %v1743, 124
    %v1869 = vpop.permute.xlu0 %1868
    %1870 = vrot.lane.b32.xlu0 %v1744, 124
    %v1871 = vpop.permute.xlu0 %1870
    %1872 = vrot.lane.b32.xlu0 %v1745, 124
    %v1873 = vpop.permute.xlu0 %1872
    %1874 = vrot.lane.b32.xlu0 %v1746, 124
    %v1875 = vpop.permute.xlu0 %1874
    %1876 = vrot.lane.b32.xlu0 %v1747, 124
    %v1877 = vpop.permute.xlu0 %1876
    %1878 = vrot.lane.b32.xlu0 %v1748, 124
    %v1879 = vpop.permute.xlu0 %1878
    %1880 = vrot.lane.b32.xlu0 %v1749, 124
    %v1881 = vpop.permute.xlu0 %1880
    %1882 = vrot.lane.b32.xlu0 %v1750, 124
    %v1883 = vpop.permute.xlu0 %1882
    %1884 = vrot.lane.b32.xlu0 %v1751, 124
    %v1885 = vpop.permute.xlu0 %1884
    %1886 = vrot.lane.b32.xlu0 %v1752, 124
    %v1887 = vpop.permute.xlu0 %1886
    %1888 = vrot.lane.b32.xlu0 %v1753, 124
    %v1889 = vpop.permute.xlu0 %1888
    %1890 = vrot.lane.b32.xlu0 %v1754, 124
    %v1891 = vpop.permute.xlu0 %1890
    %1892 = vrot.lane.b32.xlu0 %v1755, 124
    %v1893 = vpop.permute.xlu0 %1892
    %vm1894 = vcmask 1014784
    %v1895 = vsel %vm1894, %v1803, %v1805
    %v1896 = vsel %vm1894, %v1807, %v1809
    %v1897 = vsel %vm1894, %v1811, %v1813
    %v1898 = vsel %vm1894, %v1815, %v1817
    %v1899 = vsel %vm1894, %v1819, %v1821
    %v1900 = vsel %vm1894, %v1823, %v1825
    %v1901 = vsel %vm1894, %v1827, %v1829
    %v1902 = vsel %vm1894, %v1831, %v1833
    %v1903 = vsel %vm1894, %v1835, %v1837
    %v1904 = vsel %vm1894, %v1839, %v1841
    %v1905 = vsel %vm1894, %v1843, %v1845
    %v1906 = vsel %vm1894, %v1847, %v1849
    %v1907 = vsel %vm1894, %v1851, %v1853
    %v1908 = vsel %vm1894, %v1855, %v1857
    %v1909 = vsel %vm1894, %v1859, %v1861
    %v1910 = vsel %vm1894, %v1863, %v1865
    %v1911 = vsel %vm1894, %v1867, %v1869
    %v1912 = vsel %vm1894, %v1871, %v1873
    %v1913 = vsel %vm1894, %v1875, %v1877
    %v1914 = vsel %vm1894, %v1879, %v1881
    %v1915 = vsel %vm1894, %v1883, %v1885
    %v1916 = vsel %vm1894, %v1887, %v1889
    %v1917 = vsel %vm1894, %v1891, %v1893
    %v1964 = vmax.f32 %v1710, %v1895
    %v1965 = vmax.f32 %v1711, %v1805
    %v1966 = vmax.f32 %v1712, %v1896
    %v1967 = vmax.f32 %v1713, %v1809
    %v1968 = vmax.f32 %v1714, %v1897
    %v1969 = vmax.f32 %v1715, %v1813
    %v1970 = vmax.f32 %v1716, %v1898
    %v1971 = vmax.f32 %v1717, %v1817
    %v1972 = vmax.f32 %v1718, %v1899
    %v1973 = vmax.f32 %v1719, %v1821
    %v1974 = vmax.f32 %v1720, %v1900
    %v1975 = vmax.f32 %v1721, %v1825
    %v1976 = vmax.f32 %v1722, %v1901
    %v1977 = vmax.f32 %v1723, %v1829
    %v1978 = vmax.f32 %v1724, %v1902
    %v1979 = vmax.f32 %v1725, %v1833
    %v1980 = vmax.f32 %v1726, %v1903
    %v1981 = vmax.f32 %v1727, %v1837
    %v1982 = vmax.f32 %v1728, %v1904
    %v1983 = vmax.f32 %v1729, %v1841
    %v1984 = vmax.f32 %v1730, %v1905
    %v1985 = vmax.f32 %v1731, %v1845
    %v1986 = vmax.f32 %v1732, %v1906
    %v1987 = vmax.f32 %v1733, %v1849
    %v1988 = vmax.f32 %v1734, %v1907
    %v1989 = vmax.f32 %v1735, %v1853
    %v1990 = vmax.f32 %v1736, %v1908
    %v1991 = vmax.f32 %v1737, %v1857
    %v1992 = vmax.f32 %v1738, %v1909
    %v1993 = vmax.f32 %v1739, %v1861
    %v1994 = vmax.f32 %v1740, %v1910
    %v1995 = vmax.f32 %v1741, %v1865
    %v1996 = vmax.f32 %v1742, %v1911
    %v1997 = vmax.f32 %v1743, %v1869
    %v1998 = vmax.f32 %v1744, %v1912
    %v1999 = vmax.f32 %v1745, %v1873
    %v2000 = vmax.f32 %v1746, %v1913
    %v2001 = vmax.f32 %v1747, %v1877
    %v2002 = vmax.f32 %v1748, %v1914
    %v2003 = vmax.f32 %v1749, %v1881
    %v2004 = vmax.f32 %v1750, %v1915
    %v2005 = vmax.f32 %v1751, %v1885
    %v2006 = vmax.f32 %v1752, %v1916
    %v2007 = vmax.f32 %v1753, %v1889
    %v2008 = vmax.f32 %v1754, %v1917
    %v2009 = vmax.f32 %v1755, %v1893
    %v2010 = vld [vmem:[%s3] sm:$0xff]
    %v2011 = vld [vmem:[%s3 + $0x8] sm:$0xff]
    %v2012 = vld [vmem:[%s3 + $0x10] sm:$0xff]
    %v2013 = vld [vmem:[%s3 + $0x18] sm:$0xff]
    %v2014 = vld [vmem:[%s3 + $0x20] sm:$0xff]
    %v2015 = vld [vmem:[%s3 + $0x28] sm:$0xff]
    %v2016 = vld [vmem:[%s3 + $0x30] sm:$0xff]
    %v2017 = vld [vmem:[%s3 + $0x38] sm:$0xff]
    %v2018 = vld [vmem:[%s3 + $0x40] sm:$0xff]
    %v2019 = vld [vmem:[%s3 + $0x48] sm:$0xff]
    %v2020 = vld [vmem:[%s3 + $0x50] sm:$0xff]
    %v2021 = vld [vmem:[%s3 + $0x58] sm:$0xff]
    %v2022 = vld [vmem:[%s3 + $0x60] sm:$0xff]
    %v2023 = vld [vmem:[%s3 + $0x68] sm:$0xff]
    %v2024 = vld [vmem:[%s3 + $0x70] sm:$0xff]
    %v2025 = vld [vmem:[%s3 + $0x78] sm:$0xff]
    %v2026 = vld [vmem:[%s3 + $0x80] sm:$0xff]
    %v2027 = vld [vmem:[%s3 + $0x88] sm:$0xff]
    %v2028 = vld [vmem:[%s3 + $0x90] sm:$0xff]
    %v2029 = vld [vmem:[%s3 + $0x98] sm:$0xff]
    %v2030 = vld [vmem:[%s3 + $0xa0] sm:$0xff]
    %v2031 = vld [vmem:[%s3 + $0xa8] sm:$0xff]
    %v2032 = vld [vmem:[%s3 + $0xb0] sm:$0xff]
    %v2033 = vld [vmem:[%s3 + $0xb8] sm:$0xff]
    %v2034 = vld [vmem:[%s3 + $0xc0] sm:$0xff]
    %v2035 = vld [vmem:[%s3 + $0xc8] sm:$0xff]
    %v2036 = vld [vmem:[%s3 + $0xd0] sm:$0xff]
    %v2037 = vld [vmem:[%s3 + $0xd8] sm:$0xff]
    %v2038 = vld [vmem:[%s3 + $0xe0] sm:$0xff]
    %v2039 = vld [vmem:[%s3 + $0xe8] sm:$0xff]
    %v2040 = vld [vmem:[%s3 + $0xf0] sm:$0xff]
    %v2041 = vld [vmem:[%s3 + $0xf8] sm:$0xff]
    %v2042 = vld [vmem:[%s3 + $0x100] sm:$0xff]
    %v2043 = vld [vmem:[%s3 + $0x108] sm:$0xff]
    %v2044 = vld [vmem:[%s3 + $0x110] sm:$0xff]
    %v2045 = vld [vmem:[%s3 + $0x118] sm:$0xff]
    %v2046 = vld [vmem:[%s3 + $0x120] sm:$0xff]
    %v2047 = vld [vmem:[%s3 + $0x128] sm:$0xff]
    %v2048 = vld [vmem:[%s3 + $0x130] sm:$0xff]
    %v2049 = vld [vmem:[%s3 + $0x138] sm:$0xff]
    %v2050 = vld [vmem:[%s3 + $0x140] sm:$0xff]
    %v2051 = vld [vmem:[%s3 + $0x148] sm:$0xff]
    %v2052 = vld [vmem:[%s3 + $0x150] sm:$0xff]
    %v2053 = vld [vmem:[%s3 + $0x158] sm:$0xff]
    %v2054 = vld [vmem:[%s3 + $0x160] sm:$0xf]
    %v2055 = vld [vmem:[%s3 + $0x168] sm:$0xf]
    %s2056 = scalar_lea.vmem %s3, 368
    %v2057 = vld [vmem:[%s2056] sm:$0xff]
    %v2058 = vld [vmem:[%s2056 + $0x8] sm:$0xff]
    %v2059 = vld [vmem:[%s2056 + $0x10] sm:$0xff]
    %v2060 = vld [vmem:[%s2056 + $0x18] sm:$0xff]
    %v2061 = vld [vmem:[%s2056 + $0x20] sm:$0xff]
    %v2062 = vld [vmem:[%s2056 + $0x28] sm:$0xff]
    %v2063 = vld [vmem:[%s2056 + $0x30] sm:$0xff]
    %v2064 = vld [vmem:[%s2056 + $0x38] sm:$0xff]
    %v2065 = vld [vmem:[%s2056 + $0x40] sm:$0xff]
    %v2066 = vld [vmem:[%s2056 + $0x48] sm:$0xff]
    %v2067 = vld [vmem:[%s2056 + $0x50] sm:$0xff]
    %v2068 = vld [vmem:[%s2056 + $0x58] sm:$0xff]
    %v2069 = vld [vmem:[%s2056 + $0x60] sm:$0xff]
    %v2070 = vld [vmem:[%s2056 + $0x68] sm:$0xff]
    %v2071 = vld [vmem:[%s2056 + $0x70] sm:$0xff]
    %v2072 = vld [vmem:[%s2056 + $0x78] sm:$0xff]
    %v2073 = vld [vmem:[%s2056 + $0x80] sm:$0xff]
    %v2074 = vld [vmem:[%s2056 + $0x88] sm:$0xff]
    %v2075 = vld [vmem:[%s2056 + $0x90] sm:$0xff]
    %v2076 = vld [vmem:[%s2056 + $0x98] sm:$0xff]
    %v2077 = vld [vmem:[%s2056 + $0xa0] sm:$0xff]
    %v2078 = vld [vmem:[%s2056 + $0xa8] sm:$0xff]
    %v2079 = vld [vmem:[%s2056 + $0xb0] sm:$0xff]
    %v2080 = vld [vmem:[%s2056 + $0xb8] sm:$0xff]
    %v2081 = vld [vmem:[%s2056 + $0xc0] sm:$0xff]
    %v2082 = vld [vmem:[%s2056 + $0xc8] sm:$0xff]
    %v2083 = vld [vmem:[%s2056 + $0xd0] sm:$0xff]
    %v2084 = vld [vmem:[%s2056 + $0xd8] sm:$0xff]
    %v2085 = vld [vmem:[%s2056 + $0xe0] sm:$0xff]
    %v2086 = vld [vmem:[%s2056 + $0xe8] sm:$0xff]
    %v2087 = vld [vmem:[%s2056 + $0xf0] sm:$0xff]
    %v2088 = vld [vmem:[%s2056 + $0xf8] sm:$0xff]
    %v2089 = vld [vmem:[%s2056 + $0x100] sm:$0xff]
    %v2090 = vld [vmem:[%s2056 + $0x108] sm:$0xff]
    %v2091 = vld [vmem:[%s2056 + $0x110] sm:$0xff]
    %v2092 = vld [vmem:[%s2056 + $0x118] sm:$0xff]
    %v2093 = vld [vmem:[%s2056 + $0x120] sm:$0xff]
    %v2094 = vld [vmem:[%s2056 + $0x128] sm:$0xff]
    %v2095 = vld [vmem:[%s2056 + $0x130] sm:$0xff]
    %v2096 = vld [vmem:[%s2056 + $0x138] sm:$0xff]
    %v2097 = vld [vmem:[%s2056 + $0x140] sm:$0xff]
    %v2098 = vld [vmem:[%s2056 + $0x148] sm:$0xff]
    %v2099 = vld [vmem:[%s2056 + $0x150] sm:$0xff]
    %v2100 = vld [vmem:[%s2056 + $0x158] sm:$0xff]
    %v2101 = vld [vmem:[%s2056 + $0x160] sm:$0xf]
    %v2102 = vld [vmem:[%s2056 + $0x168] sm:$0xf]
    %vm2103 = vcmask 424960
    %v2105 = vsel %vm2103, %v1967, 0
    %v2108 = vsel %vm2103, %v1969, 0
    %v2111 = vsel %vm2103, %v1971, 0
    %v2114 = vsel %vm2103, %v1973, 0
    %v2117 = vsel %vm2103, %v1975, 0
    %v2120 = vsel %vm2103, %v1977, 0
    %v2123 = vsel %vm2103, %v1979, 0
    %v2126 = vsel %vm2103, %v1981, 0
    %v2129 = vsel %vm2103, %v1983, 0
    %v2132 = vsel %vm2103, %v1985, 0
    %v2135 = vsel %vm2103, %v1987, 0
    %v2138 = vsel %vm2103, %v1989, 0
    %v2141 = vsel %vm2103, %v1991, 0
    %v2144 = vsel %vm2103, %v1993, 0
    %v2147 = vsel %vm2103, %v1995, 0
    %v2150 = vsel %vm2103, %v1997, 0
    %v2153 = vsel %vm2103, %v1999, 0
    %v2156 = vsel %vm2103, %v2001, 0
    %v2159 = vsel %vm2103, %v2003, 0
    %v2162 = vsel %vm2103, %v2005, 0
    %v2165 = vsel %vm2103, %v2007, 0
    %vm2167 = vcmask 1043456
    %v2169 = vsel %vm2167, %v2101, 0
    %v2172 = vsel %vm2167, %v2102, 0
    %2174 = vmatprep.subr.mxu0 %v2058
    %2175 = vmatpush1.msra.mxu0 %v2057
    %2176 = vmatprep.subr.mxu0 %v2060
    %2177 = vmatpush1.msra.mxu0 %v2059
    %2178 = vmatprep.subr.mxu0 %v2062
    %2179 = vmatpush1.msra.mxu0 %v2061
    %2180 = vmatprep.subr.mxu0 %v2064
    %2181 = vmatpush1.msra.mxu0 %v2063
    %2182 = vmatprep.subr.mxu0 %v2066
    %2183 = vmatpush1.msra.mxu0 %v2065
    %2184 = vmatprep.subr.mxu0 %v2068
    %2185 = vmatpush1.msra.mxu0 %v2067
    %2186 = vmatprep.subr.mxu0 %v2070
    %2187 = vmatpush1.msra.mxu0 %v2069
    %2188 = vmatprep.subr.mxu0 %v2072
    %2189 = vmatpush1.msra.mxu0 %v2071
    %2190 = vmatprep.subr.mxu0 %v2074
    %2191 = vmatpush1.msra.mxu0 %v2073
    %2192 = vmatprep.subr.mxu0 %v2076
    %2193 = vmatpush1.msra.mxu0 %v2075
    %2194 = vmatprep.subr.mxu0 %v2078
    %2195 = vmatpush1.msra.mxu0 %v2077
    %2196 = vmatprep.subr.mxu0 %v2080
    %2197 = vmatpush1.msra.mxu0 %v2079
    %2198 = vmatprep.subr.mxu0 %v2082
    %2199 = vmatpush1.msra.mxu0 %v2081
    %2200 = vmatprep.subr.mxu0 %v2084
    %2201 = vmatpush1.msra.mxu0 %v2083
    %2202 = vmatprep.subr.mxu0 %v2086
    %2203 = vmatpush1.msra.mxu0 %v2085
    %2204 = vmatprep.subr.mxu0 %v2088
    %2205 = vmatpush1.msra.mxu0 %v2087
    %2206 = vmatprep.subr.mxu0 %v2090
    %2207 = vmatpush1.msra.mxu0 %v2089
    %2208 = vmatprep.subr.mxu0 %v2092
    %2209 = vmatpush1.msra.mxu0 %v2091
    %2210 = vmatprep.subr.mxu0 %v2094
    %2211 = vmatpush1.msra.mxu0 %v2093
    %2212 = vmatprep.subr.mxu0 %v2096
    %2213 = vmatpush1.msra.mxu0 %v2095
    %2214 = vmatprep.subr.mxu0 %v2098
    %2215 = vmatpush1.msra.mxu0 %v2097
    %2216 = vmatprep.subr.mxu0 %v2100
    %2217 = vmatpush1.msra.mxu0 %v2099
    %2218 = vmatprep.subr.mxu0 %v2172
    %2219 = vmatpush1.msra.mxu0 %v2169
    %2220 = vmatprep.subr.mxu0 0.0
    %2221 = vmatpush1.msra.mxu0 0.0
    %2222 = vmatprep.subr.mxu0 0.0
    %2223 = vmatpush1.msra.mxu0 0.0
    %2224 = vmatprep.subr.mxu0 0.0
    %2225 = vmatpush1.msra.mxu0 0.0
    %2226 = vmatprep.subr.mxu0 0.0
    %2227 = vmatpush1.msra.mxu0 0.0
    %2228 = vmatprep.subr.mxu0 0.0
    %2229 = vmatpush1.msra.mxu0 0.0
    %2230 = vmatprep.subr.mxu0 0.0
    %2231 = vmatpush1.msra.mxu0 0.0
    %2232 = vmatprep.subr.mxu0 0.0
    %2233 = vmatpush1.msra.mxu0 0.0
    %2234 = vmatprep.subr.mxu0 0.0
    %2235 = vmatpush1.msra.mxu0 0.0
    %2236 = vmatprep.subr.mxu0 0.0
    %2237 = vmatpush1.msra.mxu0 0.0
    %2238 = vmatprep.mubr.f32.mxu0 %v2105
    %2239 = vmatmul.mubr.f32.gmra.mrb[0].mxu0 %v1966
    %v2240 = vpop.f32.mrb[0].mxu0
    %v2241 = vadd.f32 0.0, %v2240
    %v2242 = vpop.f32.mrb[0].mxu0
    %v2243 = vadd.f32 0.0, %v2242
    %2244 = vmatprep.mubr.f32.mxu0 %v2108
    %2245 = vmatmul.mubr.f32.gmra.mrb[0].mxu0 %v1968
    %v2246 = vpop.f32.mrb[0].mxu0
    %v2247 = vadd.f32 0.0, %v2246
    %v2248 = vpop.f32.mrb[0].mxu0
    %v2249 = vadd.f32 0.0, %v2248
    %2250 = vmatprep.mubr.f32.mxu0 %v2111
    %2251 = vmatmul.mubr.f32.gmra.mrb[0].mxu0 %v1970
    %v2252 = vpop.f32.mrb[0].mxu0
    %v2253 = vadd.f32 0.0, %v2252
    %v2254 = vpop.f32.mrb[0].mxu0
    %v2255 = vadd.f32 0.0, %v2254
    %2256 = vmatprep.mubr.f32.mxu0 %v2114
    %2257 = vmatmul.mubr.f32.gmra.mrb[0].mxu0 %v1972
    %v2258 = vpop.f32.mrb[0].mxu0
    %v2259 = vadd.f32 0.0, %v2258
    %v2260 = vpop.f32.mrb[0].mxu0
    %v2261 = vadd.f32 0.0, %v2260
    %2262 = vmatprep.mubr.f32.mxu0 %v2117
    %2263 = vmatmul.mubr.f32.gmra.mrb[0].mxu0 %v1974
    %v2264 = vpop.f32.mrb[0].mxu0
    %v2265 = vadd.f32 0.0, %v2264
    %v2266 = vpop.f32.mrb[0].mxu0
    %v2267 = vadd.f32 0.0, %v2266
    %2268 = vmatprep.mubr.f32.mxu0 %v2120
    %2269 = vmatmul.mubr.f32.gmra.mrb[0].mxu0 %v1976
    %v2270 = vpop.f32.mrb[0].mxu0
    %v2271 = vadd.f32 0.0, %v2270
    %v2272 = vpop.f32.mrb[0].mxu0
    %v2273 = vadd.f32 0.0, %v2272
    %2274 = vmatprep.mubr.f32.mxu0 %v2123
    %2275 = vmatmul.mubr.f32.gmra.mrb[0].mxu0 %v1978
    %v2276 = vpop.f32.mrb[0].mxu0
    %v2277 = vadd.f32 0.0, %v2276
    %v2278 = vpop.f32.mrb[0].mxu0
    %v2279 = vadd.f32 0.0, %v2278
    %2280 = vmatprep.mubr.f32.mxu0 %v2126
    %2281 = vmatmul.mubr.f32.gmra.mrb[0].mxu0 %v1980
    %v2282 = vpop.f32.mrb[0].mxu0
    %v2283 = vadd.f32 0.0, %v2282
    %v2284 = vpop.f32.mrb[0].mxu0
    %v2285 = vadd.f32 0.0, %v2284
    %2286 = vmatprep.mubr.f32.mxu0 %v2129
    %2287 = vmatmul.mubr.f32.gmra.mrb[0].mxu0 %v1982
    %v2288 = vpop.f32.mrb[0].mxu0
    %v2289 = vadd.f32 0.0, %v2288
    %v2290 = vpop.f32.mrb[0].mxu0
    %v2291 = vadd.f32 0.0, %v2290
    %2292 = vmatprep.mubr.f32.mxu0 %v2132
    %2293 = vmatmul.mubr.f32.gmra.mrb[0].mxu0 %v1984
    %v2294 = vpop.f32.mrb[0].mxu0
    %v2295 = vadd.f32 0.0, %v2294
    %v2296 = vpop.f32.mrb[0].mxu0
    %v2297 = vadd.f32 0.0, %v2296
    %2298 = vmatprep.mubr.f32.mxu0 %v2135
    %2299 = vmatmul.mubr.f32.gmra.mrb[0].mxu0 %v1986
    %v2300 = vpop.f32.mrb[0].mxu0
    %v2301 = vadd.f32 0.0, %v2300
    %v2302 = vpop.f32.mrb[0].mxu0
    %v2303 = vadd.f32 0.0, %v2302
    %2304 = vmatprep.mubr.f32.mxu0 %v2138
    %2305 = vmatmul.mubr.f32.gmra.mrb[0].mxu0 %v1988
    %v2306 = vpop.f32.mrb[0].mxu0
    %v2307 = vadd.f32 0.0, %v2306
    %v2308 = vpop.f32.mrb[0].mxu0
    %v2309 = vadd.f32 0.0, %v2308
    %2310 = vmatprep.mubr.f32.mxu0 %v2141
    %2311 = vmatmul.mubr.f32.gmra.mrb[0].mxu0 %v1990
    %v2312 = vpop.f32.mrb[0].mxu0
    %v2313 = vadd.f32 0.0, %v2312
    %v2314 = vpop.f32.mrb[0].mxu0
    %v2315 = vadd.f32 0.0, %v2314
    %2316 = vmatprep.mubr.f32.mxu0 %v2144
    %2317 = vmatmul.mubr.f32.gmra.mrb[0].mxu0 %v1992
    %v2318 = vpop.f32.mrb[0].mxu0
    %v2319 = vadd.f32 0.0, %v2318
    %v2320 = vpop.f32.mrb[0].mxu0
    %v2321 = vadd.f32 0.0, %v2320
    %2322 = vmatprep.mubr.f32.mxu0 %v2147
    %2323 = vmatmul.mubr.f32.gmra.mrb[0].mxu0 %v1994
    %v2324 = vpop.f32.mrb[0].mxu0
    %v2325 = vadd.f32 0.0, %v2324
    %v2326 = vpop.f32.mrb[0].mxu0
    %v2327 = vadd.f32 0.0, %v2326
    %2328 = vmatprep.mubr.f32.mxu0 %v2150
    %2329 = vmatmul.mubr.f32.gmra.mrb[0].mxu0 %v1996
    %v2330 = vpop.f32.mrb[0].mxu0
    %v2331 = vadd.f32 0.0, %v2330
    %v2332 = vpop.f32.mrb[0].mxu0
    %v2333 = vadd.f32 0.0, %v2332
    %2334 = vmatprep.mubr.f32.mxu0 %v2153
    %2335 = vmatmul.mubr.f32.gmra.mrb[0].mxu0 %v1998
    %v2336 = vpop.f32.mrb[0].mxu0
    %v2337 = vadd.f32 0.0, %v2336
    %v2338 = vpop.f32.mrb[0].mxu0
    %v2339 = vadd.f32 0.0, %v2338
    %2340 = vmatprep.mubr.f32.mxu0 %v2156
    %2341 = vmatmul.mubr.f32.gmra.mrb[0].mxu0 %v2000
    %v2342 = vpop.f32.mrb[0].mxu0
    %v2343 = vadd.f32 0.0, %v2342
    %v2344 = vpop.f32.mrb[0].mxu0
    %v2345 = vadd.f32 0.0, %v2344
    %2346 = vmatprep.mubr.f32.mxu0 %v2159
    %2347 = vmatmul.mubr.f32.gmra.mrb[0].mxu0 %v2002
    %v2348 = vpop.f32.mrb[0].mxu0
    %v2349 = vadd.f32 0.0, %v2348
    %v2350 = vpop.f32.mrb[0].mxu0
    %v2351 = vadd.f32 0.0, %v2350
    %2352 = vmatprep.mubr.f32.mxu0 %v2162
    %2353 = vmatmul.mubr.f32.gmra.mrb[0].mxu0 %v2004
    %v2354 = vpop.f32.mrb[0].mxu0
    %v2355 = vadd.f32 0.0, %v2354
    %v2356 = vpop.f32.mrb[0].mxu0
    %v2357 = vadd.f32 0.0, %v2356
    %2358 = vmatprep.mubr.f32.mxu0 %v2165
    %2359 = vmatmul.mubr.f32.gmra.mrb[0].mxu0 %v2006
    %v2360 = vpop.f32.mrb[0].mxu0
    %v2361 = vpop.f32.mrb[0].mxu0
    %2362 = vdwg.mxu0
    %v2364 = vsel %vm2103, %v1965, 0
    %v2367 = vsel %vm2167, %v2054, 0
    %v2370 = vsel %vm2167, %v2055, 0
    %2372 = vmatprep.subr.mxu0 %v2011
    %2373 = vmatpush1.msra.mxu0 %v2010
    %2374 = vmatprep.subr.mxu0 %v2013
    %2375 = vmatpush1.msra.mxu0 %v2012
    %2376 = vmatprep.subr.mxu0 %v2015
    %2377 = vmatpush1.msra.mxu0 %v2014
    %2378 = vmatprep.subr.mxu0 %v2017
    %2379 = vmatpush1.msra.mxu0 %v2016
    %2380 = vmatprep.subr.mxu0 %v2019
    %2381 = vmatpush1.msra.mxu0 %v2018
    %2382 = vmatprep.subr.mxu0 %v2021
    %2383 = vmatpush1.msra.mxu0 %v2020
    %2384 = vmatprep.subr.mxu0 %v2023
    %2385 = vmatpush1.msra.mxu0 %v2022
    %2386 = vmatprep.subr.mxu0 %v2025
    %2387 = vmatpush1.msra.mxu0 %v2024
    %2388 = vmatprep.subr.mxu0 %v2027
    %2389 = vmatpush1.msra.mxu0 %v2026
    %2390 = vmatprep.subr.mxu0 %v2029
    %2391 = vmatpush1.msra.mxu0 %v2028
    %2392 = vmatprep.subr.mxu0 %v2031
    %2393 = vmatpush1.msra.mxu0 %v2030
    %2394 = vmatprep.subr.mxu0 %v2033
    %2395 = vmatpush1.msra.mxu0 %v2032
    %2396 = vmatprep.subr.mxu0 %v2035
    %2397 = vmatpush1.msra.mxu0 %v2034
    %2398 = vmatprep.subr.mxu0 %v2037
    %2399 = vmatpush1.msra.mxu0 %v2036
    %2400 = vmatprep.subr.mxu0 %v2039
    %2401 = vmatpush1.msra.mxu0 %v2038
    %2402 = vmatprep.subr.mxu0 %v2041
    %2403 = vmatpush1.msra.mxu0 %v2040
    %2404 = vmatprep.subr.mxu0 %v2043
    %2405 = vmatpush1.msra.mxu0 %v2042
    %2406 = vmatprep.subr.mxu0 %v2045
    %2407 = vmatpush1.msra.mxu0 %v2044
    %2408 = vmatprep.subr.mxu0 %v2047
    %2409 = vmatpush1.msra.mxu0 %v2046
    %2410 = vmatprep.subr.mxu0 %v2049
    %2411 = vmatpush1.msra.mxu0 %v2048
    %2412 = vmatprep.subr.mxu0 %v2051
    %2413 = vmatpush1.msra.mxu0 %v2050
    %2414 = vmatprep.subr.mxu0 %v2053
    %2415 = vmatpush1.msra.mxu0 %v2052
    %2416 = vmatprep.subr.mxu0 %v2370
    %2417 = vmatpush1.msra.mxu0 %v2367
    %2418 = vmatprep.subr.mxu0 0.0
    %2419 = vmatpush1.msra.mxu0 0.0
    %2420 = vmatprep.subr.mxu0 0.0
    %2421 = vmatpush1.msra.mxu0 0.0
    %2422 = vmatprep.subr.mxu0 0.0
    %2423 = vmatpush1.msra.mxu0 0.0
    %2424 = vmatprep.subr.mxu0 0.0
    %2425 = vmatpush1.msra.mxu0 0.0
    %2426 = vmatprep.subr.mxu0 0.0
    %2427 = vmatpush1.msra.mxu0 0.0
    %2428 = vmatprep.subr.mxu0 0.0
    %2429 = vmatpush1.msra.mxu0 0.0
    %2430 = vmatprep.subr.mxu0 0.0
    %2431 = vmatpush1.msra.mxu0 0.0
    %2432 = vmatprep.subr.mxu0 0.0
    %2433 = vmatpush1.msra.mxu0 0.0
    %2434 = vmatprep.subr.mxu0 0.0
    %2435 = vmatpush1.msra.mxu0 0.0
    %2436 = vmatprep.mubr.f32.mxu0 %v2364
    %2437 = vmatmul.mubr.f32.gmra.mrb[0].mxu0 %v1964
    %v2438 = vpop.f32.mrb[0].mxu0
    %v2439 = vadd.f32 %v2241, %v2438
    %v2440 = vpop.f32.mrb[0].mxu0
    %v2441 = vadd.f32 %v2243, %v2440
    %2442 = vmatprep.mubr.f32.mxu0 %v2105
    %2443 = vmatmul.mubr.f32.gmra.mrb[0].mxu0 %v1966
    %v2444 = vpop.f32.mrb[0].mxu0
    %v2445 = vadd.f32 %v2247, %v2444
    %v2446 = vpop.f32.mrb[0].mxu0
    %v2447 = vadd.f32 %v2249, %v2446
    %2448 = vmatprep.mubr.f32.mxu0 %v2108
    %2449 = vmatmul.mubr.f32.gmra.mrb[0].mxu0 %v1968
    %v2450 = vpop.f32.mrb[0].mxu0
    %v2451 = vadd.f32 %v2253, %v2450
    %v2452 = vpop.f32.mrb[0].mxu0
    %v2453 = vadd.f32 %v2255, %v2452
    %2454 = vmatprep.mubr.f32.mxu0 %v2111
    %2455 = vmatmul.mubr.f32.gmra.mrb[0].mxu0 %v1970
    %v2456 = vpop.f32.mrb[0].mxu0
    %v2457 = vadd.f32 %v2259, %v2456
    %v2458 = vpop.f32.mrb[0].mxu0
    %v2459 = vadd.f32 %v2261, %v2458
    %2460 = vmatprep.mubr.f32.mxu0 %v2114
    %2461 = vmatmul.mubr.f32.gmra.mrb[0].mxu0 %v1972
    %v2462 = vpop.f32.mrb[0].mxu0
    %v2463 = vadd.f32 %v2265, %v2462
    %v2464 = vpop.f32.mrb[0].mxu0
    %v2465 = vadd.f32 %v2267, %v2464
    %2466 = vmatprep.mubr.f32.mxu0 %v2117
    %2467 = vmatmul.mubr.f32.gmra.mrb[0].mxu0 %v1974
    %v2468 = vpop.f32.mrb[0].mxu0
    %v2469 = vadd.f32 %v2271, %v2468
    %v2470 = vpop.f32.mrb[0].mxu0
    %v2471 = vadd.f32 %v2273, %v2470
    %2472 = vmatprep.mubr.f32.mxu0 %v2120
    %2473 = vmatmul.mubr.f32.gmra.mrb[0].mxu0 %v1976
    %v2474 = vpop.f32.mrb[0].mxu0
    %v2475 = vadd.f32 %v2277, %v2474
    %v2476 = vpop.f32.mrb[0].mxu0
    %v2477 = vadd.f32 %v2279, %v2476
    %2478 = vmatprep.mubr.f32.mxu0 %v2123
    %2479 = vmatmul.mubr.f32.gmra.mrb[0].mxu0 %v1978
    %v2480 = vpop.f32.mrb[0].mxu0
    %v2481 = vadd.f32 %v2283, %v2480
    %v2482 = vpop.f32.mrb[0].mxu0
    %v2483 = vadd.f32 %v2285, %v2482
    %2484 = vmatprep.mubr.f32.mxu0 %v2126
    %2485 = vmatmul.mubr.f32.gmra.mrb[0].mxu0 %v1980
    %v2486 = vpop.f32.mrb[0].mxu0
    %v2487 = vadd.f32 %v2289, %v2486
    %v2488 = vpop.f32.mrb[0].mxu0
    %v2489 = vadd.f32 %v2291, %v2488
    %2490 = vmatprep.mubr.f32.mxu0 %v2129
    %2491 = vmatmul.mubr.f32.gmra.mrb[0].mxu0 %v1982
    %v2492 = vpop.f32.mrb[0].mxu0
    %v2493 = vadd.f32 %v2295, %v2492
    %v2494 = vpop.f32.mrb[0].mxu0
    %v2495 = vadd.f32 %v2297, %v2494
    %2496 = vmatprep.mubr.f32.mxu0 %v2132
    %2497 = vmatmul.mubr.f32.gmra.mrb[0].mxu0 %v1984
    %v2498 = vpop.f32.mrb[0].mxu0
    %v2499 = vadd.f32 %v2301, %v2498
    %v2500 = vpop.f32.mrb[0].mxu0
    %v2501 = vadd.f32 %v2303, %v2500
    %2502 = vmatprep.mubr.f32.mxu0 %v2135
    %2503 = vmatmul.mubr.f32.gmra.mrb[0].mxu0 %v1986
    %v2504 = vpop.f32.mrb[0].mxu0
    %v2505 = vadd.f32 %v2307, %v2504
    %v2506 = vpop.f32.mrb[0].mxu0
    %v2507 = vadd.f32 %v2309, %v2506
    %2508 = vmatprep.mubr.f32.mxu0 %v2138
    %2509 = vmatmul.mubr.f32.gmra.mrb[0].mxu0 %v1988
    %v2510 = vpop.f32.mrb[0].mxu0
    %v2511 = vadd.f32 %v2313, %v2510
    %v2512 = vpop.f32.mrb[0].mxu0
    %v2513 = vadd.f32 %v2315, %v2512
    %2514 = vmatprep.mubr.f32.mxu0 %v2141
    %2515 = vmatmul.mubr.f32.gmra.mrb[0].mxu0 %v1990
    %v2516 = vpop.f32.mrb[0].mxu0
    %v2517 = vadd.f32 %v2319, %v2516
    %v2518 = vpop.f32.mrb[0].mxu0
    %v2519 = vadd.f32 %v2321, %v2518
    %2520 = vmatprep.mubr.f32.mxu0 %v2144
    %2521 = vmatmul.mubr.f32.gmra.mrb[0].mxu0 %v1992
    %v2522 = vpop.f32.mrb[0].mxu0
    %v2523 = vadd.f32 %v2325, %v2522
    %v2524 = vpop.f32.mrb[0].mxu0
    %v2525 = vadd.f32 %v2327, %v2524
    %2526 = vmatprep.mubr.f32.mxu0 %v2147
    %2527 = vmatmul.mubr.f32.gmra.mrb[0].mxu0 %v1994
    %v2528 = vpop.f32.mrb[0].mxu0
    %v2529 = vadd.f32 %v2331, %v2528
    %v2530 = vpop.f32.mrb[0].mxu0
    %v2531 = vadd.f32 %v2333, %v2530
    %2532 = vmatprep.mubr.f32.mxu0 %v2150
    %2533 = vmatmul.mubr.f32.gmra.mrb[0].mxu0 %v1996
    %v2534 = vpop.f32.mrb[0].mxu0
    %v2535 = vadd.f32 %v2337, %v2534
    %v2536 = vpop.f32.mrb[0].mxu0
    %v2537 = vadd.f32 %v2339, %v2536
    %2538 = vmatprep.mubr.f32.mxu0 %v2153
    %2539 = vmatmul.mubr.f32.gmra.mrb[0].mxu0 %v1998
    %v2540 = vpop.f32.mrb[0].mxu0
    %v2541 = vadd.f32 %v2343, %v2540
    %v2542 = vpop.f32.mrb[0].mxu0
    %v2543 = vadd.f32 %v2345, %v2542
    %2544 = vmatprep.mubr.f32.mxu0 %v2156
    %2545 = vmatmul.mubr.f32.gmra.mrb[0].mxu0 %v2000
    %v2546 = vpop.f32.mrb[0].mxu0
    %v2547 = vadd.f32 %v2349, %v2546
    %v2548 = vpop.f32.mrb[0].mxu0
    %v2549 = vadd.f32 %v2351, %v2548
    %2550 = vmatprep.mubr.f32.mxu0 %v2159
    %2551 = vmatmul.mubr.f32.gmra.mrb[0].mxu0 %v2002
    %v2552 = vpop.f32.mrb[0].mxu0
    %v2553 = vadd.f32 %v2355, %v2552
    %v2554 = vpop.f32.mrb[0].mxu0
    %v2555 = vadd.f32 %v2357, %v2554
    %2556 = vmatprep.mubr.f32.mxu0 %v2162
    %2557 = vmatmul.mubr.f32.gmra.mrb[0].mxu0 %v2004
    %v2558 = vpop.f32.mrb[0].mxu0
    %v2559 = vpop.f32.mrb[0].mxu0
    %2560 = vdwg.mxu0
    %s2561 = scalar_lea.vmem %s3, 736
    %v2562 = vld [vmem:[%s2561] sm:$0xff]
    %v2563 = vld [vmem:[%s2561 + $0x8] sm:$0xff]
    %v2564 = vld [vmem:[%s2561 + $0x10] sm:$0xff]
    %v2565 = vld [vmem:[%s2561 + $0x18] sm:$0xff]
    %v2566 = vld [vmem:[%s2561 + $0x20] sm:$0xff]
    %v2567 = vld [vmem:[%s2561 + $0x28] sm:$0xff]
    %v2568 = vld [vmem:[%s2561 + $0x30] sm:$0xff]
    %v2569 = vld [vmem:[%s2561 + $0x38] sm:$0xff]
    %v2570 = vld [vmem:[%s2561 + $0x40] sm:$0xff]
    %v2571 = vld [vmem:[%s2561 + $0x48] sm:$0xff]
    %v2572 = vld [vmem:[%s2561 + $0x50] sm:$0xff]
    %v2573 = vld [vmem:[%s2561 + $0x58] sm:$0xff]
    %v2574 = vld [vmem:[%s2561 + $0x60] sm:$0xff]
    %v2575 = vld [vmem:[%s2561 + $0x68] sm:$0xff]
    %v2576 = vld [vmem:[%s2561 + $0x70] sm:$0xff]
    %v2577 = vld [vmem:[%s2561 + $0x78] sm:$0xff]
    %v2578 = vld [vmem:[%s2561 + $0x80] sm:$0xff]
    %v2579 = vld [vmem:[%s2561 + $0x88] sm:$0xff]
    %v2580 = vld [vmem:[%s2561 + $0x90] sm:$0xff]
    %v2581 = vld [vmem:[%s2561 + $0x98] sm:$0xff]
    %v2582 = vld [vmem:[%s2561 + $0xa0] sm:$0xff]
    %v2583 = vld [vmem:[%s2561 + $0xa8] sm:$0xff]
    %v2584 = vld [vmem:[%s2561 + $0xb0] sm:$0xff]
    %v2585 = vld [vmem:[%s2561 + $0xb8] sm:$0xff]
    %v2586 = vld [vmem:[%s2561 + $0xc0] sm:$0xff]
    %v2587 = vld [vmem:[%s2561 + $0xc8] sm:$0xff]
    %v2588 = vld [vmem:[%s2561 + $0xd0] sm:$0xff]
    %v2589 = vld [vmem:[%s2561 + $0xd8] sm:$0xff]
    %v2590 = vld [vmem:[%s2561 + $0xe0] sm:$0xff]
    %v2591 = vld [vmem:[%s2561 + $0xe8] sm:$0xff]
    %v2592 = vld [vmem:[%s2561 + $0xf0] sm:$0xff]
    %v2593 = vld [vmem:[%s2561 + $0xf8] sm:$0xff]
    %v2594 = vld [vmem:[%s2561 + $0x100] sm:$0xff]
    %v2595 = vld [vmem:[%s2561 + $0x108] sm:$0xff]
    %v2596 = vld [vmem:[%s2561 + $0x110] sm:$0xff]
    %v2597 = vld [vmem:[%s2561 + $0x118] sm:$0xff]
    %v2598 = vld [vmem:[%s2561 + $0x120] sm:$0xff]
    %v2599 = vld [vmem:[%s2561 + $0x128] sm:$0xff]
    %v2600 = vld [vmem:[%s2561 + $0x130] sm:$0xff]
    %v2601 = vld [vmem:[%s2561 + $0x138] sm:$0xff]
    %v2602 = vld [vmem:[%s2561 + $0x140] sm:$0xff]
    %v2603 = vld [vmem:[%s2561 + $0x148] sm:$0xff]
    %v2604 = vld [vmem:[%s2561 + $0x150] sm:$0xff]
    %v2605 = vld [vmem:[%s2561 + $0x158] sm:$0xff]
    %v2606 = vld [vmem:[%s2561 + $0x160] sm:$0xf]
    %v2607 = vld [vmem:[%s2561 + $0x168] sm:$0xf]
    %v2609 = vsel %vm2103, %v2009, 0
    %v2612 = vsel %vm2167, %v2606, 0
    %v2615 = vsel %vm2167, %v2607, 0
    %2617 = vmatprep.subr.mxu0 %v2563
    %2618 = vmatpush1.msra.mxu0 %v2562
    %2619 = vmatprep.subr.mxu0 %v2565
    %2620 = vmatpush1.msra.mxu0 %v2564
    %2621 = vmatprep.subr.mxu0 %v2567
    %2622 = vmatpush1.msra.mxu0 %v2566
    %2623 = vmatprep.subr.mxu0 %v2569
    %2624 = vmatpush1.msra.mxu0 %v2568
    %2625 = vmatprep.subr.mxu0 %v2571
    %2626 = vmatpush1.msra.mxu0 %v2570
    %2627 = vmatprep.subr.mxu0 %v2573
    %2628 = vmatpush1.msra.mxu0 %v2572
    %2629 = vmatprep.subr.mxu0 %v2575
    %2630 = vmatpush1.msra.mxu0 %v2574
    %2631 = vmatprep.subr.mxu0 %v2577
    %2632 = vmatpush1.msra.mxu0 %v2576
    %2633 = vmatprep.subr.mxu0 %v2579
    %2634 = vmatpush1.msra.mxu0 %v2578
    %2635 = vmatprep.subr.mxu0 %v2581
    %2636 = vmatpush1.msra.mxu0 %v2580
    %2637 = vmatprep.subr.mxu0 %v2583
    %2638 = vmatpush1.msra.mxu0 %v2582
    %2639 = vmatprep.subr.mxu0 %v2585
    %2640 = vmatpush1.msra.mxu0 %v2584
    %2641 = vmatprep.subr.mxu0 %v2587
    %2642 = vmatpush1.msra.mxu0 %v2586
    %2643 = vmatprep.subr.mxu0 %v2589
    %2644 = vmatpush1.msra.mxu0 %v2588
    %2645 = vmatprep.subr.mxu0 %v2591
    %2646 = vmatpush1.msra.mxu0 %v2590
    %2647 = vmatprep.subr.mxu0 %v2593
    %2648 = vmatpush1.msra.mxu0 %v2592
    %2649 = vmatprep.subr.mxu0 %v2595
    %2650 = vmatpush1.msra.mxu0 %v2594
    %2651 = vmatprep.subr.mxu0 %v2597
    %2652 = vmatpush1.msra.mxu0 %v2596
    %2653 = vmatprep.subr.mxu0 %v2599
    %2654 = vmatpush1.msra.mxu0 %v2598
    %2655 = vmatprep.subr.mxu0 %v2601
    %2656 = vmatpush1.msra.mxu0 %v2600
    %2657 = vmatprep.subr.mxu0 %v2603
    %2658 = vmatpush1.msra.mxu0 %v2602
    %2659 = vmatprep.subr.mxu0 %v2605
    %2660 = vmatpush1.msra.mxu0 %v2604
    %2661 = vmatprep.subr.mxu0 %v2615
    %2662 = vmatpush1.msra.mxu0 %v2612
    %2663 = vmatprep.subr.mxu0 0.0
    %2664 = vmatpush1.msra.mxu0 0.0
    %2665 = vmatprep.subr.mxu0 0.0
    %2666 = vmatpush1.msra.mxu0 0.0
    %2667 = vmatprep.subr.mxu0 0.0
    %2668 = vmatpush1.msra.mxu0 0.0
    %2669 = vmatprep.subr.mxu0 0.0
    %2670 = vmatpush1.msra.mxu0 0.0
    %2671 = vmatprep.subr.mxu0 0.0
    %2672 = vmatpush1.msra.mxu0 0.0
    %2673 = vmatprep.subr.mxu0 0.0
    %2674 = vmatpush1.msra.mxu0 0.0
    %2675 = vmatprep.subr.mxu0 0.0
    %2676 = vmatpush1.msra.mxu0 0.0
    %2677 = vmatprep.subr.mxu0 0.0
    %2678 = vmatpush1.msra.mxu0 0.0
    %2679 = vmatprep.subr.mxu0 0.0
    %2680 = vmatpush1.msra.mxu0 0.0
    %2681 = vmatprep.mubr.f32.mxu0 %v2108
    %2682 = vmatmul.mubr.f32.gmra.mrb[0].mxu0 %v1968
    %v2683 = vpop.f32.mrb[0].mxu0
    %v2684 = vadd.f32 0.0, %v2683
    %v2685 = vpop.f32.mrb[0].mxu0
    %v2686 = vadd.f32 0.0, %v2685
    %2687 = vmatprep.mubr.f32.mxu0 %v2111
    %2688 = vmatmul.mubr.f32.gmra.mrb[0].mxu0 %v1970
    %v2689 = vpop.f32.mrb[0].mxu0
    %v2690 = vadd.f32 0.0, %v2689
    %v2691 = vpop.f32.mrb[0].mxu0
    %v2692 = vadd.f32 0.0, %v2691
    %2693 = vmatprep.mubr.f32.mxu0 %v2114
    %2694 = vmatmul.mubr.f32.gmra.mrb[0].mxu0 %v1972
    %v2695 = vpop.f32.mrb[0].mxu0
    %v2696 = vadd.f32 0.0, %v2695
    %v2697 = vpop.f32.mrb[0].mxu0
    %v2698 = vadd.f32 0.0, %v2697
    %2699 = vmatprep.mubr.f32.mxu0 %v2117
    %2700 = vmatmul.mubr.f32.gmra.mrb[0].mxu0 %v1974
    %v2701 = vpop.f32.mrb[0].mxu0
    %v2702 = vadd.f32 0.0, %v2701
    %v2703 = vpop.f32.mrb[0].mxu0
    %v2704 = vadd.f32 0.0, %v2703
    %2705 = vmatprep.mubr.f32.mxu0 %v2120
    %2706 = vmatmul.mubr.f32.gmra.mrb[0].mxu0 %v1976
    %v2707 = vpop.f32.mrb[0].mxu0
    %v2708 = vadd.f32 0.0, %v2707
    %v2709 = vpop.f32.mrb[0].mxu0
    %v2710 = vadd.f32 0.0, %v2709
    %2711 = vmatprep.mubr.f32.mxu0 %v2123
    %2712 = vmatmul.mubr.f32.gmra.mrb[0].mxu0 %v1978
    %v2713 = vpop.f32.mrb[0].mxu0
    %v2714 = vadd.f32 0.0, %v2713
    %v2715 = vpop.f32.mrb[0].mxu0
    %v2716 = vadd.f32 0.0, %v2715
    %2717 = vmatprep.mubr.f32.mxu0 %v2126
    %2718 = vmatmul.mubr.f32.gmra.mrb[0].mxu0 %v1980
    %v2719 = vpop.f32.mrb[0].mxu0
    %v2720 = vadd.f32 0.0, %v2719
    %v2721 = vpop.f32.mrb[0].mxu0
    %v2722 = vadd.f32 0.0, %v2721
    %2723 = vmatprep.mubr.f32.mxu0 %v2129
    %2724 = vmatmul.mubr.f32.gmra.mrb[0].mxu0 %v1982
    %v2725 = vpop.f32.mrb[0].mxu0
    %v2726 = vadd.f32 0.0, %v2725
    %v2727 = vpop.f32.mrb[0].mxu0
    %v2728 = vadd.f32 0.0, %v2727
    %2729 = vmatprep.mubr.f32.mxu0 %v2132
    %2730 = vmatmul.mubr.f32.gmra.mrb[0].mxu0 %v1984
    %v2731 = vpop.f32.mrb[0].mxu0
    %v2732 = vadd.f32 0.0, %v2731
    %v2733 = vpop.f32.mrb[0].mxu0
    %v2734 = vadd.f32 0.0, %v2733
    %2735 = vmatprep.mubr.f32.mxu0 %v2135
    %2736 = vmatmul.mubr.f32.gmra.mrb[0].mxu0 %v1986
    %v2737 = vpop.f32.mrb[0].mxu0
    %v2738 = vadd.f32 0.0, %v2737
    %v2739 = vpop.f32.mrb[0].mxu0
    %v2740 = vadd.f32 0.0, %v2739
    %2741 = vmatprep.mubr.f32.mxu0 %v2138
    %2742 = vmatmul.mubr.f32.gmra.mrb[0].mxu0 %v1988
    %v2743 = vpop.f32.mrb[0].mxu0
    %v2744 = vadd.f32 0.0, %v2743
    %v2745 = vpop.f32.mrb[0].mxu0
    %v2746 = vadd.f32 0.0, %v2745
    %2747 = vmatprep.mubr.f32.mxu0 %v2141
    %2748 = vmatmul.mubr.f32.gmra.mrb[0].mxu0 %v1990
    %v2749 = vpop.f32.mrb[0].mxu0
    %v2750 = vadd.f32 0.0, %v2749
    %v2751 = vpop.f32.mrb[0].mxu0
    %v2752 = vadd.f32 0.0, %v2751
    %2753 = vmatprep.mubr.f32.mxu0 %v2144
    %2754 = vmatmul.mubr.f32.gmra.mrb[0].mxu0 %v1992
    %v2755 = vpop.f32.mrb[0].mxu0
    %v2756 = vadd.f32 0.0, %v2755
    %v2757 = vpop.f32.mrb[0].mxu0
    %v2758 = vadd.f32 0.0, %v2757
    %2759 = vmatprep.mubr.f32.mxu0 %v2147
    %2760 = vmatmul.mubr.f32.gmra.mrb[0].mxu0 %v1994
    %v2761 = vpop.f32.mrb[0].mxu0
    %v2762 = vadd.f32 0.0, %v2761
    %v2763 = vpop.f32.mrb[0].mxu0
    %v2764 = vadd.f32 0.0, %v2763
    %2765 = vmatprep.mubr.f32.mxu0 %v2150
    %2766 = vmatmul.mubr.f32.gmra.mrb[0].mxu0 %v1996
    %v2767 = vpop.f32.mrb[0].mxu0
    %v2768 = vadd.f32 0.0, %v2767
    %v2769 = vpop.f32.mrb[0].mxu0
    %v2770 = vadd.f32 0.0, %v2769
    %2771 = vmatprep.mubr.f32.mxu0 %v2153
    %2772 = vmatmul.mubr.f32.gmra.mrb[0].mxu0 %v1998
    %v2773 = vpop.f32.mrb[0].mxu0
    %v2774 = vadd.f32 0.0, %v2773
    %v2775 = vpop.f32.mrb[0].mxu0
    %v2776 = vadd.f32 0.0, %v2775
    %2777 = vmatprep.mubr.f32.mxu0 %v2156
    %2778 = vmatmul.mubr.f32.gmra.mrb[0].mxu0 %v2000
    %v2779 = vpop.f32.mrb[0].mxu0
    %v2780 = vadd.f32 0.0, %v2779
    %v2781 = vpop.f32.mrb[0].mxu0
    %v2782 = vadd.f32 0.0, %v2781
    %2783 = vmatprep.mubr.f32.mxu0 %v2159
    %2784 = vmatmul.mubr.f32.gmra.mrb[0].mxu0 %v2002
    %v2785 = vpop.f32.mrb[0].mxu0
    %v2786 = vadd.f32 0.0, %v2785
    %v2787 = vpop.f32.mrb[0].mxu0
    %v2788 = vadd.f32 0.0, %v2787
    %2789 = vmatprep.mubr.f32.mxu0 %v2162
    %2790 = vmatmul.mubr.f32.gmra.mrb[0].mxu0 %v2004
    %v2791 = vpop.f32.mrb[0].mxu0
    %v2792 = vadd.f32 0.0, %v2791
    %v2793 = vpop.f32.mrb[0].mxu0
    %v2794 = vadd.f32 0.0, %v2793
    %2795 = vmatprep.mubr.f32.mxu0 %v2165
    %2796 = vmatmul.mubr.f32.gmra.mrb[0].mxu0 %v2006
    %v2797 = vpop.f32.mrb[0].mxu0
    %v2798 = vadd.f32 0.0, %v2797
    %v2799 = vpop.f32.mrb[0].mxu0
    %v2800 = vadd.f32 0.0, %v2799
    %2801 = vmatprep.mubr.f32.mxu0 %v2609
    %2802 = vmatmul.mubr.f32.gmra.mrb[0].mxu0 %v2008
    %v2803 = vpop.f32.mrb[0].mxu0
    %v2804 = vpop.f32.mrb[0].mxu0
    %2805 = vdwg.mxu0
    %v2806 = vadd.f32 %v2439, %v2684
    %v2807 = vadd.f32 %v2441, %v2686
    %v2808 = vadd.f32 %v2445, %v2690
    %v2809 = vadd.f32 %v2447, %v2692
    %v2810 = vadd.f32 %v2451, %v2696
    %v2811 = vadd.f32 %v2453, %v2698
    %v2812 = vadd.f32 %v2457, %v2702
    %v2813 = vadd.f32 %v2459, %v2704
    %v2814 = vadd.f32 %v2463, %v2708
    %v2815 = vadd.f32 %v2465, %v2710
    %v2816 = vadd.f32 %v2469, %v2714
    %v2817 = vadd.f32 %v2471, %v2716
    %v2818 = vadd.f32 %v2475, %v2720
    %v2819 = vadd.f32 %v2477, %v2722
    %v2820 = vadd.f32 %v2481, %v2726
    %v2821 = vadd.f32 %v2483, %v2728
    %v2822 = vadd.f32 %v2487, %v2732
    %v2823 = vadd.f32 %v2489, %v2734
    %v2824 = vadd.f32 %v2493, %v2738
    %v2825 = vadd.f32 %v2495, %v2740
    %v2826 = vadd.f32 %v2499, %v2744
    %v2827 = vadd.f32 %v2501, %v2746
    %v2828 = vadd.f32 %v2505, %v2750
    %v2829 = vadd.f32 %v2507, %v2752
    %v2830 = vadd.f32 %v2511, %v2756
    %v2831 = vadd.f32 %v2513, %v2758
    %v2832 = vadd.f32 %v2517, %v2762
    %v2833 = vadd.f32 %v2519, %v2764
    %v2834 = vadd.f32 %v2523, %v2768
    %v2835 = vadd.f32 %v2525, %v2770
    %v2836 = vadd.f32 %v2529, %v2774
    %v2837 = vadd.f32 %v2531, %v2776
    %v2838 = vadd.f32 %v2535, %v2780
    %v2839 = vadd.f32 %v2537, %v2782
    %v2840 = vadd.f32 %v2541, %v2786
    %v2841 = vadd.f32 %v2543, %v2788
    %v2842 = vadd.f32 %v2547, %v2792
    %v2843 = vadd.f32 %v2549, %v2794
    %v2844 = vadd.f32 %v2553, %v2798
    %v2845 = vadd.f32 %v2555, %v2800
    %v2846 = vld [vmem:[%s4] sm:$0x3]
    %v2848 = vlaneseq
    %v2849 = vshrl.u32 %v2848, 7
    %v2850 = vsub.s32 0, %v2849
    %v2851 = vrot.slane %v2846, %v2850
    %v2852 = vlaneseq
    %v2853 = vshrl.u32 %v2852, 7
    %v2854 = vsub.s32 1, %v2853
    %v2855 = vrot.slane %v2846, %v2854
    %v2858 = vadd.f32 %v2806, %v2851
    %v2859 = vadd.f32 %v2807, %v2855
    %v2860 = vadd.f32 %v2808, %v2851
    %v2861 = vadd.f32 %v2809, %v2855
    %v2862 = vadd.f32 %v2810, %v2851
    %v2863 = vadd.f32 %v2811, %v2855
    %v2864 = vadd.f32 %v2812, %v2851
    %v2865 = vadd.f32 %v2813, %v2855
    %v2866 = vadd.f32 %v2814, %v2851
    %v2867 = vadd.f32 %v2815, %v2855
    %v2868 = vadd.f32 %v2816, %v2851
    %v2869 = vadd.f32 %v2817, %v2855
    %v2870 = vadd.f32 %v2818, %v2851
    %v2871 = vadd.f32 %v2819, %v2855
    %v2872 = vadd.f32 %v2820, %v2851
    %v2873 = vadd.f32 %v2821, %v2855
    %v2874 = vadd.f32 %v2822, %v2851
    %v2875 = vadd.f32 %v2823, %v2855
    %v2876 = vadd.f32 %v2824, %v2851
    %v2877 = vadd.f32 %v2825, %v2855
    %v2878 = vadd.f32 %v2826, %v2851
    %v2879 = vadd.f32 %v2827, %v2855
    %v2880 = vadd.f32 %v2828, %v2851
    %v2881 = vadd.f32 %v2829, %v2855
    %v2882 = vadd.f32 %v2830, %v2851
    %v2883 = vadd.f32 %v2831, %v2855
    %v2884 = vadd.f32 %v2832, %v2851
    %v2885 = vadd.f32 %v2833, %v2855
    %v2886 = vadd.f32 %v2834, %v2851
    %v2887 = vadd.f32 %v2835, %v2855
    %v2888 = vadd.f32 %v2836, %v2851
    %v2889 = vadd.f32 %v2837, %v2855
    %v2890 = vadd.f32 %v2838, %v2851
    %v2891 = vadd.f32 %v2839, %v2855
    %v2892 = vadd.f32 %v2840, %v2851
    %v2893 = vadd.f32 %v2841, %v2855
    %v2894 = vadd.f32 %v2842, %v2851
    %v2895 = vadd.f32 %v2843, %v2855
    %v2896 = vadd.f32 %v2844, %v2851
    %v2897 = vadd.f32 %v2845, %v2855
    %v2898 = vmax.f32 %v2858, 0.0
    %v2899 = vmax.f32 %v2859, 0.0
    %v2900 = vmax.f32 %v2860, 0.0
    %v2901 = vmax.f32 %v2861, 0.0
    %v2902 = vmax.f32 %v2862, 0.0
    %v2903 = vmax.f32 %v2863, 0.0
    %v2904 = vmax.f32 %v2864, 0.0
    %v2905 = vmax.f32 %v2865, 0.0
    %v2906 = vmax.f32 %v2866, 0.0
    %v2907 = vmax.f32 %v2867, 0.0
    %v2908 = vmax.f32 %v2868, 0.0
    %v2909 = vmax.f32 %v2869, 0.0
    %v2910 = vmax.f32 %v2870, 0.0
    %v2911 = vmax.f32 %v2871, 0.0
    %v2912 = vmax.f32 %v2872, 0.0
    %v2913 = vmax.f32 %v2873, 0.0
    %v2914 = vmax.f32 %v2874, 0.0
    %v2915 = vmax.f32 %v2875, 0.0
    %v2916 = vmax.f32 %v2876, 0.0
    %v2917 = vmax.f32 %v2877, 0.0
    %v2918 = vmax.f32 %v2878, 0.0
    %v2919 = vmax.f32 %v2879, 0.0
    %v2920 = vmax.f32 %v2880, 0.0
    %v2921 = vmax.f32 %v2881, 0.0
    %v2922 = vmax.f32 %v2882, 0.0
    %v2923 = vmax.f32 %v2883, 0.0
    %v2924 = vmax.f32 %v2884, 0.0
    %v2925 = vmax.f32 %v2885, 0.0
    %v2926 = vmax.f32 %v2886, 0.0
    %v2927 = vmax.f32 %v2887, 0.0
    %v2928 = vmax.f32 %v2888, 0.0
    %v2929 = vmax.f32 %v2889, 0.0
    %v2930 = vmax.f32 %v2890, 0.0
    %v2931 = vmax.f32 %v2891, 0.0
    %v2932 = vmax.f32 %v2892, 0.0
    %v2933 = vmax.f32 %v2893, 0.0
    %v2934 = vmax.f32 %v2894, 0.0
    %v2935 = vmax.f32 %v2895, 0.0
    %v2936 = vmax.f32 %v2896, 0.0
    %v2937 = vmax.f32 %v2897, 0.0
    %v2938 = vmax.f32 %v2898, %v2900
    %v2939 = vmax.f32 %v2899, %v2901
    %v2940 = vmax.f32 %v2902, %v2904
    %v2941 = vmax.f32 %v2903, %v2905
    %v2942 = vmax.f32 %v2906, %v2908
    %v2943 = vmax.f32 %v2907, %v2909
    %v2944 = vmax.f32 %v2910, %v2912
    %v2945 = vmax.f32 %v2911, %v2913
    %v2946 = vmax.f32 %v2914, %v2916
    %v2947 = vmax.f32 %v2915, %v2917
    %v2948 = vmax.f32 %v2918, %v2920
    %v2949 = vmax.f32 %v2919, %v2921
    %v2950 = vmax.f32 %v2922, %v2924
    %v2951 = vmax.f32 %v2923, %v2925
    %v2952 = vmax.f32 %v2926, %v2928
    %v2953 = vmax.f32 %v2927, %v2929
    %v2954 = vmax.f32 %v2930, %v2932
    %v2955 = vmax.f32 %v2931, %v2933
    %v2956 = vmax.f32 %v2934, %v2936
    %v2957 = vmax.f32 %v2935, %v2937
    %2978 = vrot.lane.b32.xlu0 %v2938, 120
    %v2979 = vpop.permute.xlu0 %2978
    %2980 = vrot.lane.b32.xlu0 %v2939, 120
    %v2981 = vpop.permute.xlu0 %2980
    %2982 = vrot.lane.b32.xlu0 %v2940, 120
    %v2983 = vpop.permute.xlu0 %2982
    %2984 = vrot.lane.b32.xlu0 %v2941, 120
    %v2985 = vpop.permute.xlu0 %2984
    %2986 = vrot.lane.b32.xlu0 %v2942, 120
    %v2987 = vpop.permute.xlu0 %2986
    %2988 = vrot.lane.b32.xlu0 %v2943, 120
    %v2989 = vpop.permute.xlu0 %2988
    %2990 = vrot.lane.b32.xlu0 %v2944, 120
    %v2991 = vpop.permute.xlu0 %2990
    %2992 = vrot.lane.b32.xlu0 %v2945, 120
    %v2993 = vpop.permute.xlu0 %2992
    %2994 = vrot.lane.b32.xlu0 %v2946, 120
    %v2995 = vpop.permute.xlu0 %2994
    %2996 = vrot.lane.b32.xlu0 %v2947, 120
    %v2997 = vpop.permute.xlu0 %2996
    %2998 = vrot.lane.b32.xlu0 %v2948, 120
    %v2999 = vpop.permute.xlu0 %2998
    %3000 = vrot.lane.b32.xlu0 %v2949, 120
    %v3001 = vpop.permute.xlu0 %3000
    %3002 = vrot.lane.b32.xlu0 %v2950, 120
    %v3003 = vpop.permute.xlu0 %3002
    %3004 = vrot.lane.b32.xlu0 %v2951, 120
    %v3005 = vpop.permute.xlu0 %3004
    %3006 = vrot.lane.b32.xlu0 %v2952, 120
    %v3007 = vpop.permute.xlu0 %3006
    %3008 = vrot.lane.b32.xlu0 %v2953, 120
    %v3009 = vpop.permute.xlu0 %3008
    %3010 = vrot.lane.b32.xlu0 %v2954, 120
    %v3011 = vpop.permute.xlu0 %3010
    %3012 = vrot.lane.b32.xlu0 %v2955, 120
    %v3013 = vpop.permute.xlu0 %3012
    %3014 = vrot.lane.b32.xlu0 %v2956, 120
    %v3015 = vpop.permute.xlu0 %3014
    %3016 = vrot.lane.b32.xlu0 %v2957, 120
    %v3017 = vpop.permute.xlu0 %3016
    %vm3018 = vcmask 982016
    %v3019 = vsel %vm3018, %v2979, %v2981
    %v3020 = vsel %vm3018, %v2983, %v2985
    %v3021 = vsel %vm3018, %v2987, %v2989
    %v3022 = vsel %vm3018, %v2991, %v2993
    %v3023 = vsel %vm3018, %v2995, %v2997
    %v3024 = vsel %vm3018, %v2999, %v3001
    %v3025 = vsel %vm3018, %v3003, %v3005
    %v3026 = vsel %vm3018, %v3007, %v3009
    %v3027 = vsel %vm3018, %v3011, %v3013
    %v3028 = vsel %vm3018, %v3015, %v3017
    %v3049 = vmax.f32 %v2938, %v3019
    %v3050 = vmax.f32 %v2939, %v2981
    %v3051 = vmax.f32 %v2940, %v3020
    %v3052 = vmax.f32 %v2941, %v2985
    %v3053 = vmax.f32 %v2942, %v3021
    %v3054 = vmax.f32 %v2943, %v2989
    %v3055 = vmax.f32 %v2944, %v3022
    %v3056 = vmax.f32 %v2945, %v2993
    %v3057 = vmax.f32 %v2946, %v3023
    %v3058 = vmax.f32 %v2947, %v2997
    %v3059 = vmax.f32 %v2948, %v3024
    %v3060 = vmax.f32 %v2949, %v3001
    %v3061 = vmax.f32 %v2950, %v3025
    %v3062 = vmax.f32 %v2951, %v3005
    %v3063 = vmax.f32 %v2952, %v3026
    %v3064 = vmax.f32 %v2953, %v3009
    %v3065 = vmax.f32 %v2954, %v3027
    %v3066 = vmax.f32 %v2955, %v3013
    %v3067 = vmax.f32 %v2956, %v3028
    %v3068 = vmax.f32 %v2957, %v3017
    %v3069 = vld [vmem:[%s5] sm:$0xff]
    %v3070 = vld [vmem:[%s5 + $0x8] sm:$0xff]
    %v3071 = vld [vmem:[%s5 + $0x10] sm:$0xff]
    %v3072 = vld [vmem:[%s5 + $0x18] sm:$0xff]
    %v3073 = vld [vmem:[%s5 + $0x20] sm:$0xff]
    %v3074 = vld [vmem:[%s5 + $0x28] sm:$0xff]
    %v3075 = vld [vmem:[%s5 + $0x30] sm:$0xff]
    %v3076 = vld [vmem:[%s5 + $0x38] sm:$0xff]
    %v3077 = vld [vmem:[%s5 + $0x40] sm:$0xff]
    %v3078 = vld [vmem:[%s5 + $0x48] sm:$0xff]
    %v3079 = vld [vmem:[%s5 + $0x50] sm:$0xff]
    %v3080 = vld [vmem:[%s5 + $0x58] sm:$0xff]
    %v3081 = vld [vmem:[%s5 + $0x60] sm:$0xff]
    %v3082 = vld [vmem:[%s5 + $0x68] sm:$0xff]
    %v3083 = vld [vmem:[%s5 + $0x70] sm:$0xff]
    %v3084 = vld [vmem:[%s5 + $0x78] sm:$0xff]
    %v3085 = vld [vmem:[%s5 + $0x80] sm:$0xff]
    %v3086 = vld [vmem:[%s5 + $0x88] sm:$0xff]
    %v3087 = vld [vmem:[%s5 + $0x90] sm:$0xff]
    %v3088 = vld [vmem:[%s5 + $0x98] sm:$0xff]
    %s3089 = scalar_lea.vmem %s5, 160
    %v3090 = vld [vmem:[%s3089] sm:$0xff]
    %v3091 = vld [vmem:[%s3089 + $0x8] sm:$0xff]
    %v3092 = vld [vmem:[%s3089 + $0x10] sm:$0xff]
    %v3093 = vld [vmem:[%s3089 + $0x18] sm:$0xff]
    %v3094 = vld [vmem:[%s3089 + $0x20] sm:$0xff]
    %v3095 = vld [vmem:[%s3089 + $0x28] sm:$0xff]
    %v3096 = vld [vmem:[%s3089 + $0x30] sm:$0xff]
    %v3097 = vld [vmem:[%s3089 + $0x38] sm:$0xff]
    %v3098 = vld [vmem:[%s3089 + $0x40] sm:$0xff]
    %v3099 = vld [vmem:[%s3089 + $0x48] sm:$0xff]
    %v3100 = vld [vmem:[%s3089 + $0x50] sm:$0xff]
    %v3101 = vld [vmem:[%s3089 + $0x58] sm:$0xff]
    %v3102 = vld [vmem:[%s3089 + $0x60] sm:$0xff]
    %v3103 = vld [vmem:[%s3089 + $0x68] sm:$0xff]
    %v3104 = vld [vmem:[%s3089 + $0x70] sm:$0xff]
    %v3105 = vld [vmem:[%s3089 + $0x78] sm:$0xff]
    %v3106 = vld [vmem:[%s3089 + $0x80] sm:$0xff]
    %v3107 = vld [vmem:[%s3089 + $0x88] sm:$0xff]
    %v3108 = vld [vmem:[%s3089 + $0x90] sm:$0xff]
    %v3109 = vld [vmem:[%s3089 + $0x98] sm:$0xff]
    %vm3110 = vcmask 261120
    %v3112 = vsel %vm3110, %v3052, 0
    %v3115 = vsel %vm3110, %v3054, 0
    %v3118 = vsel %vm3110, %v3056, 0
    %v3121 = vsel %vm3110, %v3058, 0
    %v3124 = vsel %vm3110, %v3060, 0
    %v3127 = vsel %vm3110, %v3062, 0
    %v3130 = vsel %vm3110, %v3064, 0
    %v3133 = vsel %vm3110, %v3066, 0
    %3135 = vmatprep.subr.mxu0 0.0
    %3136 = vmatpush1.msra.mxu0 %v3090
    %3137 = vmatprep.subr.mxu0 0.0
    %3138 = vmatpush1.msra.mxu0 %v3091
    %3139 = vmatprep.subr.mxu0 0.0
    %3140 = vmatpush1.msra.mxu0 %v3092
    %3141 = vmatprep.subr.mxu0 0.0
    %3142 = vmatpush1.msra.mxu0 %v3093
    %3143 = vmatprep.subr.mxu0 0.0
    %3144 = vmatpush1.msra.mxu0 %v3094
    %3145 = vmatprep.subr.mxu0 0.0
    %3146 = vmatpush1.msra.mxu0 %v3095
    %3147 = vmatprep.subr.mxu0 0.0
    %3148 = vmatpush1.msra.mxu0 %v3096
    %3149 = vmatprep.subr.mxu0 0.0
    %3150 = vmatpush1.msra.mxu0 %v3097
    %3151 = vmatprep.subr.mxu0 0.0
    %3152 = vmatpush1.msra.mxu0 %v3098
    %3153 = vmatprep.subr.mxu0 0.0
    %3154 = vmatpush1.msra.mxu0 %v3099
    %3155 = vmatprep.subr.mxu0 0.0
    %3156 = vmatpush1.msra.mxu0 %v3100
    %3157 = vmatprep.subr.mxu0 0.0
    %3158 = vmatpush1.msra.mxu0 %v3101
    %3159 = vmatprep.subr.mxu0 0.0
    %3160 = vmatpush1.msra.mxu0 %v3102
    %3161 = vmatprep.subr.mxu0 0.0
    %3162 = vmatpush1.msra.mxu0 %v3103
    %3163 = vmatprep.subr.mxu0 0.0
    %3164 = vmatpush1.msra.mxu0 %v3104
    %3165 = vmatprep.subr.mxu0 0.0
    %3166 = vmatpush1.msra.mxu0 %v3105
    %3167 = vmatprep.subr.mxu0 0.0
    %3168 = vmatpush1.msra.mxu0 %v3106
    %3169 = vmatprep.subr.mxu0 0.0
    %3170 = vmatpush1.msra.mxu0 %v3107
    %3171 = vmatprep.subr.mxu0 0.0
    %3172 = vmatpush1.msra.mxu0 %v3108
    %3173 = vmatprep.subr.mxu0 0.0
    %3174 = vmatpush1.msra.mxu0 %v3109
    %3175 = vmatprep.subr.mxu0 0.0
    %3176 = vmatpush1.msra.mxu0 0.0
    %3177 = vmatprep.subr.mxu0 0.0
    %3178 = vmatpush1.msra.mxu0 0.0
    %3179 = vmatprep.subr.mxu0 0.0
    %3180 = vmatpush1.msra.mxu0 0.0
    %3181 = vmatprep.subr.mxu0 0.0
    %3182 = vmatpush1.msra.mxu0 0.0
    %3183 = vmatprep.subr.mxu0 0.0
    %3184 = vmatpush1.msra.mxu0 0.0
    %3185 = vmatprep.subr.mxu0 0.0
    %3186 = vmatpush1.msra.mxu0 0.0
    %3187 = vmatprep.subr.mxu0 0.0
    %3188 = vmatpush1.msra.mxu0 0.0
    %3189 = vmatprep.subr.mxu0 0.0
    %3190 = vmatpush1.msra.mxu0 0.0
    %3191 = vmatprep.subr.mxu0 0.0
    %3192 = vmatpush1.msra.mxu0 0.0
    %3193 = vmatprep.subr.mxu0 0.0
    %3194 = vmatpush1.msra.mxu0 0.0
    %3195 = vmatprep.subr.mxu0 0.0
    %3196 = vmatpush1.msra.mxu0 0.0
    %3197 = vmatprep.subr.mxu0 0.0
    %3198 = vmatpush1.msra.mxu0 0.0
    %3199 = vmatprep.mubr.f32.mxu0 %v3112
    %3200 = vmatmul.mubr.f32.gmra.mrb[0].mxu0 %v3051
    %v3201 = vpop.f32.mrb[0].mxu0
    %v3202 = vadd.f32 0.0, %v3201
    %v3203 = vpop.f32.mrb[0].mxu0
    %3204 = vmatprep.mubr.f32.mxu0 %v3115
    %3205 = vmatmul.mubr.f32.gmra.mrb[0].mxu0 %v3053
    %v3206 = vpop.f32.mrb[0].mxu0
    %v3207 = vadd.f32 0.0, %v3206
    %v3208 = vpop.f32.mrb[0].mxu0
    %3209 = vmatprep.mubr.f32.mxu0 %v3118
    %3210 = vmatmul.mubr.f32.gmra.mrb[0].mxu0 %v3055
    %v3211 = vpop.f32.mrb[0].mxu0
    %v3212 = vadd.f32 0.0, %v3211
    %v3213 = vpop.f32.mrb[0].mxu0
    %3214 = vmatprep.mubr.f32.mxu0 %v3121
    %3215 = vmatmul.mubr.f32.gmra.mrb[0].mxu0 %v3057
    %v3216 = vpop.f32.mrb[0].mxu0
    %v3217 = vadd.f32 0.0, %v3216
    %v3218 = vpop.f32.mrb[0].mxu0
    %3219 = vmatprep.mubr.f32.mxu0 %v3124
    %3220 = vmatmul.mubr.f32.gmra.mrb[0].mxu0 %v3059
    %v3221 = vpop.f32.mrb[0].mxu0
    %v3222 = vadd.f32 0.0, %v3221
    %v3223 = vpop.f32.mrb[0].mxu0
    %3224 = vmatprep.mubr.f32.mxu0 %v3127
    %3225 = vmatmul.mubr.f32.gmra.mrb[0].mxu0 %v3061
    %v3226 = vpop.f32.mrb[0].mxu0
    %v3227 = vadd.f32 0.0, %v3226
    %v3228 = vpop.f32.mrb[0].mxu0
    %3229 = vmatprep.mubr.f32.mxu0 %v3130
    %3230 = vmatmul.mubr.f32.gmra.mrb[0].mxu0 %v3063
    %v3231 = vpop.f32.mrb[0].mxu0
    %v3232 = vadd.f32 0.0, %v3231
    %v3233 = vpop.f32.mrb[0].mxu0
    %3234 = vmatprep.mubr.f32.mxu0 %v3133
    %3235 = vmatmul.mubr.f32.gmra.mrb[0].mxu0 %v3065
    %v3236 = vpop.f32.mrb[0].mxu0
    %v3237 = vadd.f32 0.0, %v3236
    %v3238 = vpop.f32.mrb[0].mxu0
    %3239 = vdwg.mxu0
    %v3241 = vsel %vm3110, %v3050, 0
    %3243 = vmatprep.subr.mxu0 0.0
    %3244 = vmatpush1.msra.mxu0 %v3069
    %3245 = vmatprep.subr.mxu0 0.0
    %3246 = vmatpush1.msra.mxu0 %v3070
    %3247 = vmatprep.subr.mxu0 0.0
    %3248 = vmatpush1.msra.mxu0 %v3071
    %3249 = vmatprep.subr.mxu0 0.0
    %3250 = vmatpush1.msra.mxu0 %v3072
    %3251 = vmatprep.subr.mxu0 0.0
    %3252 = vmatpush1.msra.mxu0 %v3073
    %3253 = vmatprep.subr.mxu0 0.0
    %3254 = vmatpush1.msra.mxu0 %v3074
    %3255 = vmatprep.subr.mxu0 0.0
    %3256 = vmatpush1.msra.mxu0 %v3075
    %3257 = vmatprep.subr.mxu0 0.0
    %3258 = vmatpush1.msra.mxu0 %v3076
    %3259 = vmatprep.subr.mxu0 0.0
    %3260 = vmatpush1.msra.mxu0 %v3077
    %3261 = vmatprep.subr.mxu0 0.0
    %3262 = vmatpush1.msra.mxu0 %v3078
    %3263 = vmatprep.subr.mxu0 0.0
    %3264 = vmatpush1.msra.mxu0 %v3079
    %3265 = vmatprep.subr.mxu0 0.0
    %3266 = vmatpush1.msra.mxu0 %v3080
    %3267 = vmatprep.subr.mxu0 0.0
    %3268 = vmatpush1.msra.mxu0 %v3081
    %3269 = vmatprep.subr.mxu0 0.0
    %3270 = vmatpush1.msra.mxu0 %v3082
    %3271 = vmatprep.subr.mxu0 0.0
    %3272 = vmatpush1.msra.mxu0 %v3083
    %3273 = vmatprep.subr.mxu0 0.0
    %3274 = vmatpush1.msra.mxu0 %v3084
    %3275 = vmatprep.subr.mxu0 0.0
    %3276 = vmatpush1.msra.mxu0 %v3085
    %3277 = vmatprep.subr.mxu0 0.0
    %3278 = vmatpush1.msra.mxu0 %v3086
    %3279 = vmatprep.subr.mxu0 0.0
    %3280 = vmatpush1.msra.mxu0 %v3087
    %3281 = vmatprep.subr.mxu0 0.0
    %3282 = vmatpush1.msra.mxu0 %v3088
    %3283 = vmatprep.subr.mxu0 0.0
    %3284 = vmatpush1.msra.mxu0 0.0
    %3285 = vmatprep.subr.mxu0 0.0
    %3286 = vmatpush1.msra.mxu0 0.0
    %3287 = vmatprep.subr.mxu0 0.0
    %3288 = vmatpush1.msra.mxu0 0.0
    %3289 = vmatprep.subr.mxu0 0.0
    %3290 = vmatpush1.msra.mxu0 0.0
    %3291 = vmatprep.subr.mxu0 0.0
    %3292 = vmatpush1.msra.mxu0 0.0
    %3293 = vmatprep.subr.mxu0 0.0
    %3294 = vmatpush1.msra.mxu0 0.0
    %3295 = vmatprep.subr.mxu0 0.0
    %3296 = vmatpush1.msra.mxu0 0.0
    %3297 = vmatprep.subr.mxu0 0.0
    %3298 = vmatpush1.msra.mxu0 0.0
    %3299 = vmatprep.subr.mxu0 0.0
    %3300 = vmatpush1.msra.mxu0 0.0
    %3301 = vmatprep.subr.mxu0 0.0
    %3302 = vmatpush1.msra.mxu0 0.0
    %3303 = vmatprep.subr.mxu0 0.0
    %3304 = vmatpush1.msra.mxu0 0.0
    %3305 = vmatprep.subr.mxu0 0.0
    %3306 = vmatpush1.msra.mxu0 0.0
    %3307 = vmatprep.mubr.f32.mxu0 %v3241
    %3308 = vmatmul.mubr.f32.gmra.mrb[0].mxu0 %v3049
    %v3309 = vpop.f32.mrb[0].mxu0
    %v3310 = vadd.f32 %v3202, %v3309
    %v3311 = vpop.f32.mrb[0].mxu0
    %3312 = vmatprep.mubr.f32.mxu0 %v3112
    %3313 = vmatmul.mubr.f32.gmra.mrb[0].mxu0 %v3051
    %v3314 = vpop.f32.mrb[0].mxu0
    %v3315 = vadd.f32 %v3207, %v3314
    %v3316 = vpop.f32.mrb[0].mxu0
    %3317 = vmatprep.mubr.f32.mxu0 %v3115
    %3318 = vmatmul.mubr.f32.gmra.mrb[0].mxu0 %v3053
    %v3319 = vpop.f32.mrb[0].mxu0
    %v3320 = vadd.f32 %v3212, %v3319
    %v3321 = vpop.f32.mrb[0].mxu0
    %3322 = vmatprep.mubr.f32.mxu0 %v3118
    %3323 = vmatmul.mubr.f32.gmra.mrb[0].mxu0 %v3055
    %v3324 = vpop.f32.mrb[0].mxu0
    %v3325 = vadd.f32 %v3217, %v3324
    %v3326 = vpop.f32.mrb[0].mxu0
    %3327 = vmatprep.mubr.f32.mxu0 %v3121
    %3328 = vmatmul.mubr.f32.gmra.mrb[0].mxu0 %v3057
    %v3329 = vpop.f32.mrb[0].mxu0
    %v3330 = vadd.f32 %v3222, %v3329
    %v3331 = vpop.f32.mrb[0].mxu0
    %3332 = vmatprep.mubr.f32.mxu0 %v3124
    %3333 = vmatmul.mubr.f32.gmra.mrb[0].mxu0 %v3059
    %v3334 = vpop.f32.mrb[0].mxu0
    %v3335 = vadd.f32 %v3227, %v3334
    %v3336 = vpop.f32.mrb[0].mxu0
    %3337 = vmatprep.mubr.f32.mxu0 %v3127
    %3338 = vmatmul.mubr.f32.gmra.mrb[0].mxu0 %v3061
    %v3339 = vpop.f32.mrb[0].mxu0
    %v3340 = vadd.f32 %v3232, %v3339
    %v3341 = vpop.f32.mrb[0].mxu0
    %3342 = vmatprep.mubr.f32.mxu0 %v3130
    %3343 = vmatmul.mubr.f32.gmra.mrb[0].mxu0 %v3063
    %v3344 = vpop.f32.mrb[0].mxu0
    %v3345 = vadd.f32 %v3237, %v3344
    %v3346 = vpop.f32.mrb[0].mxu0
    %3347 = vdwg.mxu0
    %s3348 = scalar_lea.vmem %s5, 320
    %v3349 = vld [vmem:[%s3348] sm:$0xff]
    %v3350 = vld [vmem:[%s3348 + $0x8] sm:$0xff]
    %v3351 = vld [vmem:[%s3348 + $0x10] sm:$0xff]
    %v3352 = vld [vmem:[%s3348 + $0x18] sm:$0xff]
    %v3353 = vld [vmem:[%s3348 + $0x20] sm:$0xff]
    %v3354 = vld [vmem:[%s3348 + $0x28] sm:$0xff]
    %v3355 = vld [vmem:[%s3348 + $0x30] sm:$0xff]
    %v3356 = vld [vmem:[%s3348 + $0x38] sm:$0xff]
    %v3357 = vld [vmem:[%s3348 + $0x40] sm:$0xff]
    %v3358 = vld [vmem:[%s3348 + $0x48] sm:$0xff]
    %v3359 = vld [vmem:[%s3348 + $0x50] sm:$0xff]
    %v3360 = vld [vmem:[%s3348 + $0x58] sm:$0xff]
    %v3361 = vld [vmem:[%s3348 + $0x60] sm:$0xff]
    %v3362 = vld [vmem:[%s3348 + $0x68] sm:$0xff]
    %v3363 = vld [vmem:[%s3348 + $0x70] sm:$0xff]
    %v3364 = vld [vmem:[%s3348 + $0x78] sm:$0xff]
    %v3365 = vld [vmem:[%s3348 + $0x80] sm:$0xff]
    %v3366 = vld [vmem:[%s3348 + $0x88] sm:$0xff]
    %v3367 = vld [vmem:[%s3348 + $0x90] sm:$0xff]
    %v3368 = vld [vmem:[%s3348 + $0x98] sm:$0xff]
    %v3370 = vsel %vm3110, %v3068, 0
    %3372 = vmatprep.subr.mxu0 0.0
    %3373 = vmatpush1.msra.mxu0 %v3349
    %3374 = vmatprep.subr.mxu0 0.0
    %3375 = vmatpush1.msra.mxu0 %v3350
    %3376 = vmatprep.subr.mxu0 0.0
    %3377 = vmatpush1.msra.mxu0 %v3351
    %3378 = vmatprep.subr.mxu0 0.0
    %3379 = vmatpush1.msra.mxu0 %v3352
    %3380 = vmatprep.subr.mxu0 0.0
    %3381 = vmatpush1.msra.mxu0 %v3353
    %3382 = vmatprep.subr.mxu0 0.0
    %3383 = vmatpush1.msra.mxu0 %v3354
    %3384 = vmatprep.subr.mxu0 0.0
    %3385 = vmatpush1.msra.mxu0 %v3355
    %3386 = vmatprep.subr.mxu0 0.0
    %3387 = vmatpush1.msra.mxu0 %v3356
    %3388 = vmatprep.subr.mxu0 0.0
    %3389 = vmatpush1.msra.mxu0 %v3357
    %3390 = vmatprep.subr.mxu0 0.0
    %3391 = vmatpush1.msra.mxu0 %v3358
    %3392 = vmatprep.subr.mxu0 0.0
    %3393 = vmatpush1.msra.mxu0 %v3359
    %3394 = vmatprep.subr.mxu0 0.0
    %3395 = vmatpush1.msra.mxu0 %v3360
    %3396 = vmatprep.subr.mxu0 0.0
    %3397 = vmatpush1.msra.mxu0 %v3361
    %3398 = vmatprep.subr.mxu0 0.0
    %3399 = vmatpush1.msra.mxu0 %v3362
    %3400 = vmatprep.subr.mxu0 0.0
    %3401 = vmatpush1.msra.mxu0 %v3363
    %3402 = vmatprep.subr.mxu0 0.0
    %3403 = vmatpush1.msra.mxu0 %v3364
    %3404 = vmatprep.subr.mxu0 0.0
    %3405 = vmatpush1.msra.mxu0 %v3365
    %3406 = vmatprep.subr.mxu0 0.0
    %3407 = vmatpush1.msra.mxu0 %v3366
    %3408 = vmatprep.subr.mxu0 0.0
    %3409 = vmatpush1.msra.mxu0 %v3367
    %3410 = vmatprep.subr.mxu0 0.0
    %3411 = vmatpush1.msra.mxu0 %v3368
    %3412 = vmatprep.subr.mxu0 0.0
    %3413 = vmatpush1.msra.mxu0 0.0
    %3414 = vmatprep.subr.mxu0 0.0
    %3415 = vmatpush1.msra.mxu0 0.0
    %3416 = vmatprep.subr.mxu0 0.0
    %3417 = vmatpush1.msra.mxu0 0.0
    %3418 = vmatprep.subr.mxu0 0.0
    %3419 = vmatpush1.msra.mxu0 0.0
    %3420 = vmatprep.subr.mxu0 0.0
    %3421 = vmatpush1.msra.mxu0 0.0
    %3422 = vmatprep.subr.mxu0 0.0
    %3423 = vmatpush1.msra.mxu0 0.0
    %3424 = vmatprep.subr.mxu0 0.0
    %3425 = vmatpush1.msra.mxu0 0.0
    %3426 = vmatprep.subr.mxu0 0.0
    %3427 = vmatpush1.msra.mxu0 0.0
    %3428 = vmatprep.subr.mxu0 0.0
    %3429 = vmatpush1.msra.mxu0 0.0
    %3430 = vmatprep.subr.mxu0 0.0
    %3431 = vmatpush1.msra.mxu0 0.0
    %3432 = vmatprep.subr.mxu0 0.0
    %3433 = vmatpush1.msra.mxu0 0.0
    %3434 = vmatprep.subr.mxu0 0.0
    %3435 = vmatpush1.msra.mxu0 0.0
    %3436 = vmatprep.mubr.f32.mxu0 %v3115
    %3437 = vmatmul.mubr.f32.gmra.mrb[0].mxu0 %v3053
    %v3438 = vpop.f32.mrb[0].mxu0
    %v3439 = vadd.f32 0.0, %v3438
    %v3440 = vpop.f32.mrb[0].mxu0
    %3441 = vmatprep.mubr.f32.mxu0 %v3118
    %3442 = vmatmul.mubr.f32.gmra.mrb[0].mxu0 %v3055
    %v3443 = vpop.f32.mrb[0].mxu0
    %v3444 = vadd.f32 0.0, %v3443
    %v3445 = vpop.f32.mrb[0].mxu0
    %3446 = vmatprep.mubr.f32.mxu0 %v3121
    %3447 = vmatmul.mubr.f32.gmra.mrb[0].mxu0 %v3057
    %v3448 = vpop.f32.mrb[0].mxu0
    %v3449 = vadd.f32 0.0, %v3448
    %v3450 = vpop.f32.mrb[0].mxu0
    %3451 = vmatprep.mubr.f32.mxu0 %v3124
    %3452 = vmatmul.mubr.f32.gmra.mrb[0].mxu0 %v3059
    %v3453 = vpop.f32.mrb[0].mxu0
    %v3454 = vadd.f32 0.0, %v3453
    %v3455 = vpop.f32.mrb[0].mxu0
    %3456 = vmatprep.mubr.f32.mxu0 %v3127
    %3457 = vmatmul.mubr.f32.gmra.mrb[0].mxu0 %v3061
    %v3458 = vpop.f32.mrb[0].mxu0
    %v3459 = vadd.f32 0.0, %v3458
    %v3460 = vpop.f32.mrb[0].mxu0
    %3461 = vmatprep.mubr.f32.mxu0 %v3130
    %3462 = vmatmul.mubr.f32.gmra.mrb[0].mxu0 %v3063
    %v3463 = vpop.f32.mrb[0].mxu0
    %v3464 = vadd.f32 0.0, %v3463
    %v3465 = vpop.f32.mrb[0].mxu0
    %3466 = vmatprep.mubr.f32.mxu0 %v3133
    %3467 = vmatmul.mubr.f32.gmra.mrb[0].mxu0 %v3065
    %v3468 = vpop.f32.mrb[0].mxu0
    %v3469 = vadd.f32 0.0, %v3468
    %v3470 = vpop.f32.mrb[0].mxu0
    %3471 = vmatprep.mubr.f32.mxu0 %v3370
    %3472 = vmatmul.mubr.f32.gmra.mrb[0].mxu0 %v3067
    %v3473 = vpop.f32.mrb[0].mxu0
    %v3474 = vadd.f32 0.0, %v3473
    %v3475 = vpop.f32.mrb[0].mxu0
    %3476 = vdwg.mxu0
    %v3477 = vadd.f32 %v3310, %v3439
    %v3478 = vadd.f32 %v3315, %v3444
    %v3479 = vadd.f32 %v3320, %v3449
    %v3480 = vadd.f32 %v3325, %v3454
    %v3481 = vadd.f32 %v3330, %v3459
    %v3482 = vadd.f32 %v3335, %v3464
    %v3483 = vadd.f32 %v3340, %v3469
    %v3484 = vadd.f32 %v3345, %v3474
    %v3485 = vld [vmem:[%s6] sm:$0x1]
    %v3487 = vlaneseq
    %v3488 = vshrl.u32 %v3487, 7
    %v3489 = vsub.s32 0, %v3488
    %v3490 = vrot.slane %v3485, %v3489
    %v3492 = vadd.f32 %v3477, %v3490
    %v3493 = vadd.f32 %v3478, %v3490
    %v3494 = vadd.f32 %v3479, %v3490
    %v3495 = vadd.f32 %v3480, %v3490
    %v3496 = vadd.f32 %v3481, %v3490
    %v3497 = vadd.f32 %v3482, %v3490
    %v3498 = vadd.f32 %v3483, %v3490
    %v3499 = vadd.f32 %v3484, %v3490
    %v3500 = vmax.f32 %v3492, 0.0
    %v3501 = vmax.f32 %v3493, 0.0
    %v3502 = vmax.f32 %v3494, 0.0
    %v3503 = vmax.f32 %v3495, 0.0
    %v3504 = vmax.f32 %v3496, 0.0
    %v3505 = vmax.f32 %v3497, 0.0
    %v3506 = vmax.f32 %v3498, 0.0
    %v3507 = vmax.f32 %v3499, 0.0
    %v3508 = vmax.f32 %v3500, %v3501
    %v3509 = vmax.f32 %v3502, %v3503
    %v3510 = vmax.f32 %v3504, %v3505
    %v3511 = vmax.f32 %v3506, %v3507
    %3516 = vrot.lane.b32.xlu0 %v3508, 112
    %v3517 = vpop.permute.xlu0 %3516
    %3518 = vrot.lane.b32.xlu0 %v3509, 112
    %v3519 = vpop.permute.xlu0 %3518
    %3520 = vrot.lane.b32.xlu0 %v3510, 112
    %v3521 = vpop.permute.xlu0 %3520
    %3522 = vrot.lane.b32.xlu0 %v3511, 112
    %v3523 = vpop.permute.xlu0 %3522
    %v3528 = vmax.f32 %v3508, %v3517
    %v3529 = vmax.f32 %v3509, %v3519
    %v3530 = vmax.f32 %v3510, %v3521
    %v3531 = vmax.f32 %v3511, %v3523
    %v3532 = vld [vmem:[%s7] sm:$0xff]
    %v3533 = vld [vmem:[%s7 + $0x8] sm:$0xff]
    %v3534 = vld [vmem:[%s7 + $0x10] sm:$0xff]
    %v3535 = vld [vmem:[%s7 + $0x18] sm:$0xff]
    %v3536 = vld [vmem:[%s7 + $0x20] sm:$0xff]
    %v3537 = vld [vmem:[%s7 + $0x28] sm:$0xff]
    %v3538 = vld [vmem:[%s7 + $0x30] sm:$0xff]
    %v3539 = vld [vmem:[%s7 + $0x38] sm:$0xff]
    %v3540 = vld [vmem:[%s7 + $0x40] sm:$0xff]
    %v3541 = vld [vmem:[%s7 + $0x48] sm:$0xff]
    %v3542 = vld [vmem:[%s7 + $0x50] sm:$0xff]
    %v3543 = vld [vmem:[%s7 + $0x58] sm:$0xff]
    %v3544 = vld [vmem:[%s7 + $0x60] sm:$0xff]
    %v3545 = vld [vmem:[%s7 + $0x68] sm:$0xff]
    %s3546 = scalar_lea.vmem %s7, 112
    %v3547 = vld [vmem:[%s3546] sm:$0xff]
    %v3548 = vld [vmem:[%s3546 + $0x8] sm:$0xff]
    %v3549 = vld [vmem:[%s3546 + $0x10] sm:$0xff]
    %v3550 = vld [vmem:[%s3546 + $0x18] sm:$0xff]
    %v3551 = vld [vmem:[%s3546 + $0x20] sm:$0xff]
    %v3552 = vld [vmem:[%s3546 + $0x28] sm:$0xff]
    %v3553 = vld [vmem:[%s3546 + $0x30] sm:$0xff]
    %v3554 = vld [vmem:[%s3546 + $0x38] sm:$0xff]
    %v3555 = vld [vmem:[%s3546 + $0x40] sm:$0xff]
    %v3556 = vld [vmem:[%s3546 + $0x48] sm:$0xff]
    %v3557 = vld [vmem:[%s3546 + $0x50] sm:$0xff]
    %v3558 = vld [vmem:[%s3546 + $0x58] sm:$0xff]
    %v3559 = vld [vmem:[%s3546 + $0x60] sm:$0xff]
    %v3560 = vld [vmem:[%s3546 + $0x68] sm:$0xff]
    %vm3561 = vcmask 916480
    %v3563 = vsel %vm3561, %v3529, 0
    %v3566 = vsel %vm3561, %v3530, 0
    %3568 = vmatprep.subr.mxu0 0.0
    %3569 = vmatpush1.msra.mxu0 %v3547
    %3570 = vmatprep.subr.mxu0 0.0
    %3571 = vmatpush1.msra.mxu0 %v3548
    %3572 = vmatprep.subr.mxu0 0.0
    %3573 = vmatpush1.msra.mxu0 %v3549
    %3574 = vmatprep.subr.mxu0 0.0
    %3575 = vmatpush1.msra.mxu0 %v3550
    %3576 = vmatprep.subr.mxu0 0.0
    %3577 = vmatpush1.msra.mxu0 %v3551
    %3578 = vmatprep.subr.mxu0 0.0
    %3579 = vmatpush1.msra.mxu0 %v3552
    %3580 = vmatprep.subr.mxu0 0.0
    %3581 = vmatpush1.msra.mxu0 %v3553
    %3582 = vmatprep.subr.mxu0 0.0
    %3583 = vmatpush1.msra.mxu0 %v3554
    %3584 = vmatprep.subr.mxu0 0.0
    %3585 = vmatpush1.msra.mxu0 %v3555
    %3586 = vmatprep.subr.mxu0 0.0
    %3587 = vmatpush1.msra.mxu0 %v3556
    %3588 = vmatprep.subr.mxu0 0.0
    %3589 = vmatpush1.msra.mxu0 %v3557
    %3590 = vmatprep.subr.mxu0 0.0
    %3591 = vmatpush1.msra.mxu0 %v3558
    %3592 = vmatprep.subr.mxu0 0.0
    %3593 = vmatpush1.msra.mxu0 %v3559
    %3594 = vmatprep.subr.mxu0 0.0
    %3595 = vmatpush1.msra.mxu0 %v3560
    %3596 = vmatprep.subr.mxu0 0.0
    %3597 = vmatpush1.msra.mxu0 0.0
    %3598 = vmatprep.subr.mxu0 0.0
    %3599 = vmatpush1.msra.mxu0 0.0
    %3600 = vmatprep.subr.mxu0 0.0
    %3601 = vmatpush1.msra.mxu0 0.0
    %3602 = vmatprep.subr.mxu0 0.0
    %3603 = vmatpush1.msra.mxu0 0.0
    %3604 = vmatprep.subr.mxu0 0.0
    %3605 = vmatpush1.msra.mxu0 0.0
    %3606 = vmatprep.subr.mxu0 0.0
    %3607 = vmatpush1.msra.mxu0 0.0
    %3608 = vmatprep.subr.mxu0 0.0
    %3609 = vmatpush1.msra.mxu0 0.0
    %3610 = vmatprep.subr.mxu0 0.0
    %3611 = vmatpush1.msra.mxu0 0.0
    %3612 = vmatprep.subr.mxu0 0.0
    %3613 = vmatpush1.msra.mxu0 0.0
    %3614 = vmatprep.subr.mxu0 0.0
    %3615 = vmatpush1.msra.mxu0 0.0
    %3616 = vmatprep.subr.mxu0 0.0
    %3617 = vmatpush1.msra.mxu0 0.0
    %3618 = vmatprep.subr.mxu0 0.0
    %3619 = vmatpush1.msra.mxu0 0.0
    %3620 = vmatprep.subr.mxu0 0.0
    %3621 = vmatpush1.msra.mxu0 0.0
    %3622 = vmatprep.subr.mxu0 0.0
    %3623 = vmatpush1.msra.mxu0 0.0
    %3624 = vmatprep.subr.mxu0 0.0
    %3625 = vmatpush1.msra.mxu0 0.0
    %3626 = vmatprep.subr.mxu0 0.0
    %3627 = vmatpush1.msra.mxu0 0.0
    %3628 = vmatprep.subr.mxu0 0.0
    %3629 = vmatpush1.msra.mxu0 0.0
    %3630 = vmatprep.subr.mxu0 0.0
    %3631 = vmatpush1.msra.mxu0 0.0
    %3632 = vmatprep.mubr.f32.mxu0 0.0
    %3633 = vmatmul.mubr.f32.gmra.mrb[0].mxu0 %v3563
    %v3634 = vpop.f32.mrb[0].mxu0
    %v3635 = vadd.f32 0.0, %v3634
    %v3636 = vpop.f32.mrb[0].mxu0
    %3637 = vmatprep.mubr.f32.mxu0 0.0
    %3638 = vmatmul.mubr.f32.gmra.mrb[0].mxu0 %v3566
    %v3639 = vpop.f32.mrb[0].mxu0
    %v3640 = vadd.f32 0.0, %v3639
    %v3641 = vpop.f32.mrb[0].mxu0
    %3642 = vdwg.mxu0
    %v3644 = vsel %vm3561, %v3528, 0
    %3646 = vmatprep.subr.mxu0 0.0
    %3647 = vmatpush1.msra.mxu0 %v3532
    %3648 = vmatprep.subr.mxu0 0.0
    %3649 = vmatpush1.msra.mxu0 %v3533
    %3650 = vmatprep.subr.mxu0 0.0
    %3651 = vmatpush1.msra.mxu0 %v3534
    %3652 = vmatprep.subr.mxu0 0.0
    %3653 = vmatpush1.msra.mxu0 %v3535
    %3654 = vmatprep.subr.mxu0 0.0
    %3655 = vmatpush1.msra.mxu0 %v3536
    %3656 = vmatprep.subr.mxu0 0.0
    %3657 = vmatpush1.msra.mxu0 %v3537
    %3658 = vmatprep.subr.mxu0 0.0
    %3659 = vmatpush1.msra.mxu0 %v3538
    %3660 = vmatprep.subr.mxu0 0.0
    %3661 = vmatpush1.msra.mxu0 %v3539
    %3662 = vmatprep.subr.mxu0 0.0
    %3663 = vmatpush1.msra.mxu0 %v3540
    %3664 = vmatprep.subr.mxu0 0.0
    %3665 = vmatpush1.msra.mxu0 %v3541
    %3666 = vmatprep.subr.mxu0 0.0
    %3667 = vmatpush1.msra.mxu0 %v3542
    %3668 = vmatprep.subr.mxu0 0.0
    %3669 = vmatpush1.msra.mxu0 %v3543
    %3670 = vmatprep.subr.mxu0 0.0
    %3671 = vmatpush1.msra.mxu0 %v3544
    %3672 = vmatprep.subr.mxu0 0.0
    %3673 = vmatpush1.msra.mxu0 %v3545
    %3674 = vmatprep.subr.mxu0 0.0
    %3675 = vmatpush1.msra.mxu0 0.0
    %3676 = vmatprep.subr.mxu0 0.0
    %3677 = vmatpush1.msra.mxu0 0.0
    %3678 = vmatprep.subr.mxu0 0.0
    %3679 = vmatpush1.msra.mxu0 0.0
    %3680 = vmatprep.subr.mxu0 0.0
    %3681 = vmatpush1.msra.mxu0 0.0
    %3682 = vmatprep.subr.mxu0 0.0
    %3683 = vmatpush1.msra.mxu0 0.0
    %3684 = vmatprep.subr.mxu0 0.0
    %3685 = vmatpush1.msra.mxu0 0.0
    %3686 = vmatprep.subr.mxu0 0.0
    %3687 = vmatpush1.msra.mxu0 0.0
    %3688 = vmatprep.subr.mxu0 0.0
    %3689 = vmatpush1.msra.mxu0 0.0
    %3690 = vmatprep.subr.mxu0 0.0
    %3691 = vmatpush1.msra.mxu0 0.0
    %3692 = vmatprep.subr.mxu0 0.0
    %3693 = vmatpush1.msra.mxu0 0.0
    %3694 = vmatprep.subr.mxu0 0.0
    %3695 = vmatpush1.msra.mxu0 0.0
    %3696 = vmatprep.subr.mxu0 0.0
    %3697 = vmatpush1.msra.mxu0 0.0
    %3698 = vmatprep.subr.mxu0 0.0
    %3699 = vmatpush1.msra.mxu0 0.0
    %3700 = vmatprep.subr.mxu0 0.0
    %3701 = vmatpush1.msra.mxu0 0.0
    %3702 = vmatprep.subr.mxu0 0.0
    %3703 = vmatpush1.msra.mxu0 0.0
    %3704 = vmatprep.subr.mxu0 0.0
    %3705 = vmatpush1.msra.mxu0 0.0
    %3706 = vmatprep.subr.mxu0 0.0
    %3707 = vmatpush1.msra.mxu0 0.0
    %3708 = vmatprep.subr.mxu0 0.0
    %3709 = vmatpush1.msra.mxu0 0.0
    %3710 = vmatprep.mubr.f32.mxu0 0.0
    %3711 = vmatmul.mubr.f32.gmra.mrb[0].mxu0 %v3644
    %v3712 = vpop.f32.mrb[0].mxu0
    %v3713 = vadd.f32 %v3635, %v3712
    %v3714 = vpop.f32.mrb[0].mxu0
    %3715 = vmatprep.mubr.f32.mxu0 0.0
    %3716 = vmatmul.mubr.f32.gmra.mrb[0].mxu0 %v3563
    %v3717 = vpop.f32.mrb[0].mxu0
    %v3718 = vadd.f32 %v3640, %v3717
    %v3719 = vpop.f32.mrb[0].mxu0
    %3720 = vdwg.mxu0
    %s3721 = scalar_lea.vmem %s7, 224
    %v3722 = vld [vmem:[%s3721] sm:$0xff]
    %v3723 = vld [vmem:[%s3721 + $0x8] sm:$0xff]
    %v3724 = vld [vmem:[%s3721 + $0x10] sm:$0xff]
    %v3725 = vld [vmem:[%s3721 + $0x18] sm:$0xff]
    %v3726 = vld [vmem:[%s3721 + $0x20] sm:$0xff]
    %v3727 = vld [vmem:[%s3721 + $0x28] sm:$0xff]
    %v3728 = vld [vmem:[%s3721 + $0x30] sm:$0xff]
    %v3729 = vld [vmem:[%s3721 + $0x38] sm:$0xff]
    %v3730 = vld [vmem:[%s3721 + $0x40] sm:$0xff]
    %v3731 = vld [vmem:[%s3721 + $0x48] sm:$0xff]
    %v3732 = vld [vmem:[%s3721 + $0x50] sm:$0xff]
    %v3733 = vld [vmem:[%s3721 + $0x58] sm:$0xff]
    %v3734 = vld [vmem:[%s3721 + $0x60] sm:$0xff]
    %v3735 = vld [vmem:[%s3721 + $0x68] sm:$0xff]
    %v3737 = vsel %vm3561, %v3531, 0
    %3739 = vmatprep.subr.mxu0 0.0
    %3740 = vmatpush1.msra.mxu0 %v3722
    %3741 = vmatprep.subr.mxu0 0.0
    %3742 = vmatpush1.msra.mxu0 %v3723
    %3743 = vmatprep.subr.mxu0 0.0
    %3744 = vmatpush1.msra.mxu0 %v3724
    %3745 = vmatprep.subr.mxu0 0.0
    %3746 = vmatpush1.msra.mxu0 %v3725
    %3747 = vmatprep.subr.mxu0 0.0
    %3748 = vmatpush1.msra.mxu0 %v3726
    %3749 = vmatprep.subr.mxu0 0.0
    %3750 = vmatpush1.msra.mxu0 %v3727
    %3751 = vmatprep.subr.mxu0 0.0
    %3752 = vmatpush1.msra.mxu0 %v3728
    %3753 = vmatprep.subr.mxu0 0.0
    %3754 = vmatpush1.msra.mxu0 %v3729
    %3755 = vmatprep.subr.mxu0 0.0
    %3756 = vmatpush1.msra.mxu0 %v3730
    %3757 = vmatprep.subr.mxu0 0.0
    %3758 = vmatpush1.msra.mxu0 %v3731
    %3759 = vmatprep.subr.mxu0 0.0
    %3760 = vmatpush1.msra.mxu0 %v3732
    %3761 = vmatprep.subr.mxu0 0.0
    %3762 = vmatpush1.msra.mxu0 %v3733
    %3763 = vmatprep.subr.mxu0 0.0
    %3764 = vmatpush1.msra.mxu0 %v3734
    %3765 = vmatprep.subr.mxu0 0.0
    %3766 = vmatpush1.msra.mxu0 %v3735
    %3767 = vmatprep.subr.mxu0 0.0
    %3768 = vmatpush1.msra.mxu0 0.0
    %3769 = vmatprep.subr.mxu0 0.0
    %3770 = vmatpush1.msra.mxu0 0.0
    %3771 = vmatprep.subr.mxu0 0.0
    %3772 = vmatpush1.msra.mxu0 0.0
    %3773 = vmatprep.subr.mxu0 0.0
    %3774 = vmatpush1.msra.mxu0 0.0
    %3775 = vmatprep.subr.mxu0 0.0
    %3776 = vmatpush1.msra.mxu0 0.0
    %3777 = vmatprep.subr.mxu0 0.0
    %3778 = vmatpush1.msra.mxu0 0.0
    %3779 = vmatprep.subr.mxu0 0.0
    %3780 = vmatpush1.msra.mxu0 0.0
    %3781 = vmatprep.subr.mxu0 0.0
    %3782 = vmatpush1.msra.mxu0 0.0
    %3783 = vmatprep.subr.mxu0 0.0
    %3784 = vmatpush1.msra.mxu0 0.0
    %3785 = vmatprep.subr.mxu0 0.0
    %3786 = vmatpush1.msra.mxu0 0.0
    %3787 = vmatprep.subr.mxu0 0.0
    %3788 = vmatpush1.msra.mxu0 0.0
    %3789 = vmatprep.subr.mxu0 0.0
    %3790 = vmatpush1.msra.mxu0 0.0
    %3791 = vmatprep.subr.mxu0 0.0
    %3792 = vmatpush1.msra.mxu0 0.0
    %3793 = vmatprep.subr.mxu0 0.0
    %3794 = vmatpush1.msra.mxu0 0.0
    %3795 = vmatprep.subr.mxu0 0.0
    %3796 = vmatpush1.msra.mxu0 0.0
    %3797 = vmatprep.subr.mxu0 0.0
    %3798 = vmatpush1.msra.mxu0 0.0
    %3799 = vmatprep.subr.mxu0 0.0
    %3800 = vmatpush1.msra.mxu0 0.0
    %3801 = vmatprep.subr.mxu0 0.0
    %3802 = vmatpush1.msra.mxu0 0.0
    %3803 = vmatprep.mubr.f32.mxu0 0.0
    %3804 = vmatmul.mubr.f32.gmra.mrb[0].mxu0 %v3566
    %v3805 = vpop.f32.mrb[0].mxu0
    %v3806 = vadd.f32 0.0, %v3805
    %v3807 = vpop.f32.mrb[0].mxu0
    %3808 = vmatprep.mubr.f32.mxu0 0.0
    %3809 = vmatmul.mubr.f32.gmra.mrb[0].mxu0 %v3737
    %v3810 = vpop.f32.mrb[0].mxu0
    %v3811 = vadd.f32 0.0, %v3810
    %v3812 = vpop.f32.mrb[0].mxu0
    %3813 = vdwg.mxu0
    %v3814 = vadd.f32 %v3713, %v3806
    %v3815 = vadd.f32 %v3718, %v3811
    %v3816 = vld [vmem:[%s8] sm:$0x1]
    %v3818 = vlaneseq
    %v3819 = vshrl.u32 %v3818, 7
    %v3820 = vsub.s32 0, %v3819
    %v3821 = vrot.slane %v3816, %v3820
    %v3823 = vadd.f32 %v3814, %v3821
    %v3824 = vadd.f32 %v3815, %v3821
    %v3825 = vmax.f32 %v3823, 0.0
    %v3826 = vmax.f32 %v3824, 0.0
    %v3827 = vmax.f32 %v3825, %v3826
    %3829 = vrot.lane.b32.xlu0 %v3827, 96
    %v3830 = vpop.permute.xlu0 %3829
    %v3832 = vmax.f32 %v3827, %v3830
    %v3833 = vld [vmem:[%s9] sm:$0xff]
    %v3834 = vld [vmem:[%s9 + $0x8] sm:$0xff]
    %v3835 = vld [vmem:[%s9 + $0x10] sm:$0xff]
    %v3836 = vld [vmem:[%s9 + $0x18] sm:$0xff]
    %v3837 = vld [vmem:[%s10] sm:$0x1]
    %v3839 = vlaneseq
    %v3840 = vshrl.u32 %v3839, 7
    %v3841 = vsub.s32 0, %v3840
    %v3842 = vrot.slane %v3837, %v3841
    %v3845 = vsel %vm3110, %v3832, 0
    %3847 = vmatprep.subr.mxu0 0.0
    %3848 = vmatpush1.msra.mxu0 %v3833
    %3849 = vmatprep.subr.mxu0 0.0
    %3850 = vmatpush1.msra.mxu0 %v3834
    %3851 = vmatprep.subr.mxu0 0.0
    %3852 = vmatpush1.msra.mxu0 %v3835
    %3853 = vmatprep.subr.mxu0 0.0
    %3854 = vmatpush1.msra.mxu0 %v3836
    %3855 = vmatprep.subr.mxu0 0.0
    %3856 = vmatpush1.msra.mxu0 0.0
    %3857 = vmatprep.subr.mxu0 0.0
    %3858 = vmatpush1.msra.mxu0 0.0
    %3859 = vmatprep.subr.mxu0 0.0
    %3860 = vmatpush1.msra.mxu0 0.0
    %3861 = vmatprep.subr.mxu0 0.0
    %3862 = vmatpush1.msra.mxu0 0.0
    %3863 = vmatprep.subr.mxu0 0.0
    %3864 = vmatpush1.msra.mxu0 0.0
    %3865 = vmatprep.subr.mxu0 0.0
    %3866 = vmatpush1.msra.mxu0 0.0
    %3867 = vmatprep.subr.mxu0 0.0
    %3868 = vmatpush1.msra.mxu0 0.0
    %3869 = vmatprep.subr.mxu0 0.0
    %3870 = vmatpush1.msra.mxu0 0.0
    %3871 = vmatprep.subr.mxu0 0.0
    %3872 = vmatpush1.msra.mxu0 0.0
    %3873 = vmatprep.subr.mxu0 0.0
    %3874 = vmatpush1.msra.mxu0 0.0
    %3875 = vmatprep.subr.mxu0 0.0
    %3876 = vmatpush1.msra.mxu0 0.0
    %3877 = vmatprep.subr.mxu0 0.0
    %3878 = vmatpush1.msra.mxu0 0.0
    %3879 = vmatprep.subr.mxu0 0.0
    %3880 = vmatpush1.msra.mxu0 0.0
    %3881 = vmatprep.subr.mxu0 0.0
    %3882 = vmatpush1.msra.mxu0 0.0
    %3883 = vmatprep.subr.mxu0 0.0
    %3884 = vmatpush1.msra.mxu0 0.0
    %3885 = vmatprep.subr.mxu0 0.0
    %3886 = vmatpush1.msra.mxu0 0.0
    %3887 = vmatprep.subr.mxu0 0.0
    %3888 = vmatpush1.msra.mxu0 0.0
    %3889 = vmatprep.subr.mxu0 0.0
    %3890 = vmatpush1.msra.mxu0 0.0
    %3891 = vmatprep.subr.mxu0 0.0
    %3892 = vmatpush1.msra.mxu0 0.0
    %3893 = vmatprep.subr.mxu0 0.0
    %3894 = vmatpush1.msra.mxu0 0.0
    %3895 = vmatprep.subr.mxu0 0.0
    %3896 = vmatpush1.msra.mxu0 0.0
    %3897 = vmatprep.subr.mxu0 0.0
    %3898 = vmatpush1.msra.mxu0 0.0
    %3899 = vmatprep.subr.mxu0 0.0
    %3900 = vmatpush1.msra.mxu0 0.0
    %3901 = vmatprep.subr.mxu0 0.0
    %3902 = vmatpush1.msra.mxu0 0.0
    %3903 = vmatprep.subr.mxu0 0.0
    %3904 = vmatpush1.msra.mxu0 0.0
    %3905 = vmatprep.subr.mxu0 0.0
    %3906 = vmatpush1.msra.mxu0 0.0
    %3907 = vmatprep.subr.mxu0 0.0
    %3908 = vmatpush1.msra.mxu0 0.0
    %3909 = vmatprep.subr.mxu0 0.0
    %3910 = vmatpush1.msra.mxu0 0.0
    %3911 = vmatprep.mubr.f32.mxu0 0.0
    %3912 = vmatmul.mubr.f32.gmra.mrb[0].mxu0 %v3845
    %v3913 = vpop.f32.mrb[0].mxu0
    %v3914 = vadd.f32 %v3842, %v3913
    %v3915 = vpop.f32.mrb[0].mxu0
    %3916 = vdwg.mxu0
    %v3917 = vmax.f32 %v3914, 0.0
    %v3918 = vld [vmem:[%s13] sm:$0xff]
    %v3919 = vmul.f32 %v3917, %v3918
    %v3920 = vld [vmem:[%s11] sm:$0xff]
    %v3921 = vld [vmem:[%s11 + $0x8] sm:$0xff]
    %v3922 = vld [vmem:[%s11 + $0x10] sm:$0xff]
    %v3923 = vld [vmem:[%s11 + $0x18] sm:$0xff]
    %v3924 = vld [vmem:[%s12] sm:$0x1]
    %v3926 = vlaneseq
    %v3927 = vshrl.u32 %v3926, 7
    %v3928 = vsub.s32 0, %v3927
    %v3929 = vrot.slane %v3924, %v3928
    %v3932 = vsel %vm3110, %v3919, 0
    %3934 = vmatprep.subr.mxu0 0.0
    %3935 = vmatpush1.msra.mxu0 %v3920
    %3936 = vmatprep.subr.mxu0 0.0
    %3937 = vmatpush1.msra.mxu0 %v3921
    %3938 = vmatprep.subr.mxu0 0.0
    %3939 = vmatpush1.msra.mxu0 %v3922
    %3940 = vmatprep.subr.mxu0 0.0
    %3941 = vmatpush1.msra.mxu0 %v3923
    %3942 = vmatprep.subr.mxu0 0.0
    %3943 = vmatpush1.msra.mxu0 0.0
    %3944 = vmatprep.subr.mxu0 0.0
    %3945 = vmatpush1.msra.mxu0 0.0
    %3946 = vmatprep.subr.mxu0 0.0
    %3947 = vmatpush1.msra.mxu0 0.0
    %3948 = vmatprep.subr.mxu0 0.0
    %3949 = vmatpush1.msra.mxu0 0.0
    %3950 = vmatprep.subr.mxu0 0.0
    %3951 = vmatpush1.msra.mxu0 0.0
    %3952 = vmatprep.subr.mxu0 0.0
    %3953 = vmatpush1.msra.mxu0 0.0
    %3954 = vmatprep.subr.mxu0 0.0
    %3955 = vmatpush1.msra.mxu0 0.0
    %3956 = vmatprep.subr.mxu0 0.0
    %3957 = vmatpush1.msra.mxu0 0.0
    %3958 = vmatprep.subr.mxu0 0.0
    %3959 = vmatpush1.msra.mxu0 0.0
    %3960 = vmatprep.subr.mxu0 0.0
    %3961 = vmatpush1.msra.mxu0 0.0
    %3962 = vmatprep.subr.mxu0 0.0
    %3963 = vmatpush1.msra.mxu0 0.0
    %3964 = vmatprep.subr.mxu0 0.0
    %3965 = vmatpush1.msra.mxu0 0.0
    %3966 = vmatprep.subr.mxu0 0.0
    %3967 = vmatpush1.msra.mxu0 0.0
    %3968 = vmatprep.subr.mxu0 0.0
    %3969 = vmatpush1.msra.mxu0 0.0
    %3970 = vmatprep.subr.mxu0 0.0
    %3971 = vmatpush1.msra.mxu0 0.0
    %3972 = vmatprep.subr.mxu0 0.0
    %3973 = vmatpush1.msra.mxu0 0.0
    %3974 = vmatprep.subr.mxu0 0.0
    %3975 = vmatpush1.msra.mxu0 0.0
    %3976 = vmatprep.subr.mxu0 0.0
    %3977 = vmatpush1.msra.mxu0 0.0
    %3978 = vmatprep.subr.mxu0 0.0
    %3979 = vmatpush1.msra.mxu0 0.0
    %3980 = vmatprep.subr.mxu0 0.0
    %3981 = vmatpush1.msra.mxu0 0.0
    %3982 = vmatprep.subr.mxu0 0.0
    %3983 = vmatpush1.msra.mxu0 0.0
    %3984 = vmatprep.subr.mxu0 0.0
    %3985 = vmatpush1.msra.mxu0 0.0
    %3986 = vmatprep.subr.mxu0 0.0
    %3987 = vmatpush1.msra.mxu0 0.0
    %3988 = vmatprep.subr.mxu0 0.0
    %3989 = vmatpush1.msra.mxu0 0.0
    %3990 = vmatprep.subr.mxu0 0.0
    %3991 = vmatpush1.msra.mxu0 0.0
    %3992 = vmatprep.subr.mxu0 0.0
    %3993 = vmatpush1.msra.mxu0 0.0
    %3994 = vmatprep.subr.mxu0 0.0
    %3995 = vmatpush1.msra.mxu0 0.0
    %3996 = vmatprep.subr.mxu0 0.0
    %3997 = vmatpush1.msra.mxu0 0.0
    %3998 = vmatprep.mubr.f32.mxu0 0.0
    %3999 = vmatmul.mubr.f32.gmra.mrb[0].mxu0 %v3932
    %v4000 = vpop.f32.mrb[0].mxu0
    %v4001 = vadd.f32 %v3929, %v4000
    %v4002 = vpop.f32.mrb[0].mxu0
    %4003 = vdwg.mxu0
    %4004 = vmax.xlane.f32.xlu0 %v4001
    %v4005 = vpop.xlane.xlu0 %4004
    %v4006 = vsub.f32 %v4001, %v4005
    %v4007 = vmul.f32 %v4006, 1.442695
    %v4008 = vpow.pop %v4007
    %4009 = vadd.xlane.f32.xlu0 %v4008
    %v4010 = vpop.xlane.xlu0 %4009
    %v4011 = vlog2.pop %v4010
    %v4012 = vmul.f32 %v4011, 0.6931472
    %v4013 = vsub.f32 %v4006, %v4012
    %4014 = vst [vmem:[#allocation2] sm:$0xff] %v4013
    // Predicated region
    $region58: #{tpu_custom_call.1} parent=1 // pred_check
      _
    $region59: #{tpu_custom_call.1} parent=1 // pred_check_branch
      %4016 = sbr.rel (0) target = $region61
    $region60: #{tpu_custom_call.1} parent=1 // pred_region
      %s4018 = ssub.s32 128, 128
      %4019 = vsyncadd [#allocation3], %s4018
      %s4021 = sshll.u32 [#allocation2], 4
      %s4022 = int_to_ptr.vmem [resolvable:$true] %s4021
      %4024 = dma.vmem_to_hbm [thread:$0]  %s4022, 128, %s14, [#allocation3]
    $region61: #{tpu_custom_call.1} parent=1 // pred_fallthru
      _
    // Predicated region
    $region62: #{tpu_custom_call.1} parent=1 // pred_check
      _
    $region63: #{tpu_custom_call.1} parent=1 // pred_check_branch
      %4026 = sbr.rel (0) target = $region65
    $region64: #{tpu_custom_call.1} parent=1 // pred_region
      %4027 = dma.done [#allocation3], 128
    $region65: #{tpu_custom_call.1} parent=1 // pred_fallthru
      _
    %4028 = vsyncpa [#allocation3], 1

</llo_original>
